<compile_context>
chip_gen: v5e
topology: v5e:2x2
jax: 0.10.0
libtpu: 0.0.40
codegen_flags: <defaults>
</compile_context>

<pallas_src>
import jax
import jax.numpy as jnp
from jax.experimental import pallas as pl
from jax.experimental.pallas import tpu as pltpu

IMGSIZE = 64
IN_DIM = IMGSIZE * IMGSIZE   # 4096
HIDDEN = 30
LATENT_DIMS = 5
LANE = 128                   # TPU lane width (dense-store padding of the output)
SUBLANE = 8


def _round_up(x, m):
    return (x + m - 1) // m * m


def encoder_kernel(x_ref, w1_ref, b1_ref, w2_ref, b2_ref, out_ref):
    # Fused 2-layer MLP hot path: matmul -> bias -> relu -> matmul -> bias.
    x = x_ref[...]                                       # (bm, 4096), compute dtype
    h = jnp.dot(x, w1_ref[...],
                preferred_element_type=jnp.float32)      # (bm, 30), f32 accumulate
    h = jnp.maximum(h + b1_ref[...], 0.0)                # bias + ReLU in f32
    y = jnp.dot(h, w2_ref[...],
                preferred_element_type=jnp.float32)      # (bm, 128) lane-dense
    out_ref[...] = (y + b2_ref[...]).astype(out_ref.dtype)


def encoder_forward(x, w1, b1, w2, b2, *, bm=512,
                    compute_dtype=jnp.float32,
                    single_buffer_weights=True):
    """y = relu(x @ w1 + b1) @ w2 + b2.

    x: (B, 4096); w1: (4096, 30); b1: (1, 30); w2: (30, L); b2: (1, L).
    Returns (B, L) float32.
    """
    B, K = x.shape
    assert K == w1.shape[0]
    H = w1.shape[1]
    L = w2.shape[1]

    b1 = jnp.asarray(b1, jnp.float32).reshape(1, H)
    b2 = jnp.asarray(b2, jnp.float32).reshape(1, L)

    # Lane-dense output: pad layer-2 output dim to 128 so the kernel writes a
    # full (bm, 128) slab (unmasked stores); the real columns are [:, :L].
    Lp = LANE
    w2p = jnp.zeros((H, Lp), jnp.float32).at[:, :L].set(w2.astype(jnp.float32))
    b2p = jnp.zeros((1, Lp), jnp.float32).at[:, :L].set(b2)

    # x (and w1) are ~all of the HBM traffic; optionally carry them in bf16.
    xc = x.astype(compute_dtype)
    w1c = w1.astype(compute_dtype)

    # Batch tiling: large tiles amortize per-step pipeline overhead. Handle
    # ragged / small batches by shrinking the tile to the batch and padding B
    # up to a multiple of the tile (padded rows are sliced off below).
    bm_eff = max(SUBLANE, min(_round_up(bm, SUBLANE), _round_up(B, SUBLANE)))
    Bp = _round_up(B, bm_eff)
    if Bp != B:
        xc = jnp.pad(xc, ((0, Bp - B), (0, 0)))
    grid = (Bp // bm_eff,)

    def _const_spec(shape, single_buffer):
        idx = lambda i: (0,) * len(shape)
        if single_buffer:
            # Grid-invariant operand: nothing to pipeline, keep one buffer.
            return pl.BlockSpec(shape, idx, pipeline_mode=pl.Buffered(1))
        return pl.BlockSpec(shape, idx)

    def _call(single_buffer):
        return pl.pallas_call(
            encoder_kernel,
            out_shape=jax.ShapeDtypeStruct((Bp, Lp), jnp.float32),
            grid_spec=pltpu.PrefetchScalarGridSpec(
                num_scalar_prefetch=0,
                grid=grid,
                in_specs=[
                    pl.BlockSpec((bm_eff, K), lambda i: (i, 0)),   # x tile (pipelined)
                    _const_spec((K, H), single_buffer),            # w1 (resident)
                    _const_spec((1, H), single_buffer),            # b1
                    _const_spec((H, Lp), single_buffer),           # w2 (lane-padded)
                    _const_spec((1, Lp), single_buffer),           # b2 (lane-padded)
                ],
                out_specs=pl.BlockSpec((bm_eff, Lp), lambda i: (i, 0)),
            ),
            compiler_params=pltpu.CompilerParams(
                dimension_semantics=("parallel",),
                # 2 x (bm x 4096) x buffers + lane-padded w1 + output slabs;
                # defaults (16/32 MiB) would OOM at bm=512 in f32.
                vmem_limit_bytes=48 * 1024 * 1024,
            ),
        )(xc, w1c, b1, w2p, b2p)

    if single_buffer_weights:
        try:
            out = _call(True)
        except Exception:
            # Fallback if this jax/libtpu build rejects pl.Buffered(1).
            out = _call(False)
    else:
        out = _call(False)

    return out[:B, :L]


def init_params(key):
    """Deterministic synthetic init mimicking nn.Linear's uniform(-1/sqrt(fan_in), ...)."""
    k1, k2, k3, k4 = jax.random.split(key, 4)
    bound1 = 1.0 / (IN_DIM ** 0.5)
    bound2 = 1.0 / (HIDDEN ** 0.5)
    w1 = jax.random.uniform(k1, (IN_DIM, HIDDEN), jnp.float32, -bound1, bound1)
    b1 = jax.random.uniform(k2, (1, HIDDEN), jnp.float32, -bound1, bound1)
    w2 = jax.random.uniform(k3, (HIDDEN, LATENT_DIMS), jnp.float32, -bound2, bound2)
    b2 = jax.random.uniform(k4, (1, LATENT_DIMS), jnp.float32, -bound2, bound2)
    return w1, b1, w2, b2


if __name__ == "__main__":
    key = jax.random.PRNGKey(0)
    kx, kp = jax.random.split(key)

    # Small, deliberately NOT a multiple of the tile: exercises the ragged path.
    B = 13
    x = jax.random.normal(kx, (B, IN_DIM), jnp.float32)
    w1, b1, w2, b2 = init_params(kp)

    # Pure-JAX reference of the forward semantics.
    ref = jnp.maximum(x @ w1 + b1, 0.0) @ w2 + b2

    # f32 hot path (reference-exact).
    y32 = jax.block_until_ready(
        encoder_forward(x, w1, b1, w2, b2, bm=512, compute_dtype=jnp.float32))
    assert y32.shape == (B, LATENT_DIMS)
    assert jnp.allclose(y32, ref, atol=1e-4, rtol=1e-4), "f32 mismatch vs reference"

    # bf16 x/w1 hot path (halves dominant HBM read; f32 MXU accumulation).
    ybf = jax.block_until_ready(
        encoder_forward(x, w1, b1, w2, b2, bm=512, compute_dtype=jnp.bfloat16))
    assert ybf.shape == (B, LATENT_DIMS)
    assert jnp.allclose(ybf, ref, atol=5e-2, rtol=5e-2), "bf16 mismatch vs reference"

    print("KERNEL_OK")
</pallas_src>

<mosaic_0001>
module attributes {stable_mosaic.version = 11 : i64} {
  func.func @encoder_kernel(%arg0: i32, %arg1: memref<16x4096xf32, #tpu.memory_space<vmem>>, %arg2: memref<4096x30xf32, #tpu.memory_space<vmem>>, %arg3: memref<1x30xf32, #tpu.memory_space<vmem>>, %arg4: memref<30x128xf32, #tpu.memory_space<vmem>>, %arg5: memref<1x128xf32, #tpu.memory_space<vmem>>, %arg6: memref<16x128xf32, #tpu.memory_space<vmem>>) attributes {dimension_semantics = [#tpu.dimension_semantics<parallel>], iteration_bounds = array<i64: 1>, scalar_prefetch = 0 : i64, scratch_operands = 0 : i64, tpu.core_type = #tpu.core_type<tc>, window_params = [{transform_indices = @transform_0, window_bounds = array<i64: 16, 4096>}, {pipeline_mode = #tpu.pipeline_mode<synchronous>, transform_indices = @transform_1, window_bounds = array<i64: 4096, 30>}, {pipeline_mode = #tpu.pipeline_mode<synchronous>, transform_indices = @transform_2, window_bounds = array<i64: 1, 30>}, {pipeline_mode = #tpu.pipeline_mode<synchronous>, transform_indices = @transform_3, window_bounds = array<i64: 30, 128>}, {pipeline_mode = #tpu.pipeline_mode<synchronous>, transform_indices = @transform_4, window_bounds = array<i64: 1, 128>}, {transform_indices = @transform_5, window_bounds = array<i64: 16, 128>}]} {
    %c0 = arith.constant 0 : index
    %c0_0 = arith.constant 0 : index
    %0 = vector.load %arg1[%c0, %c0_0] : memref<16x4096xf32, #tpu.memory_space<vmem>>, vector<16x4096xf32>
    %c0_1 = arith.constant 0 : index
    %c0_2 = arith.constant 0 : index
    %1 = vector.load %arg2[%c0_1, %c0_2] : memref<4096x30xf32, #tpu.memory_space<vmem>>, vector<4096x30xf32>
    %cst = arith.constant dense<0.000000e+00> : vector<16x30xf32>
    %2 = tpu.matmul %0, %1, %cst {dimension_numbers = #tpu.dot_dimension_numbers<[1], [0], [0], [1], [0, 0, 1, 1], [], []>} : vector<16x4096xf32>, vector<4096x30xf32>, vector<16x30xf32> -> vector<16x30xf32>
    %c0_3 = arith.constant 0 : index
    %c0_4 = arith.constant 0 : index
    %3 = vector.load %arg3[%c0_3, %c0_4] : memref<1x30xf32, #tpu.memory_space<vmem>>, vector<1x30xf32>
    %4 = vector.broadcast %3 : vector<1x30xf32> to vector<16x30xf32>
    %5 = arith.addf %2, %4 : vector<16x30xf32>
    %cst_5 = arith.constant 0.000000e+00 : f32
    %6 = vector.broadcast %cst_5 : f32 to vector<16x30xf32>
    %7 = arith.maximumf %5, %6 : vector<16x30xf32>
    %c0_6 = arith.constant 0 : index
    %c0_7 = arith.constant 0 : index
    %8 = vector.load %arg4[%c0_6, %c0_7] : memref<30x128xf32, #tpu.memory_space<vmem>>, vector<30x128xf32>
    %cst_8 = arith.constant dense<0.000000e+00> : vector<16x128xf32>
    %9 = tpu.matmul %7, %8, %cst_8 {dimension_numbers = #tpu.dot_dimension_numbers<[1], [0], [0], [1], [0, 0, 1, 1], [], []>} : vector<16x30xf32>, vector<30x128xf32>, vector<16x128xf32> -> vector<16x128xf32>
    %c0_9 = arith.constant 0 : index
    %c0_10 = arith.constant 0 : index
    %10 = vector.load %arg5[%c0_9, %c0_10] : memref<1x128xf32, #tpu.memory_space<vmem>>, vector<1x128xf32>
    %11 = vector.broadcast %10 : vector<1x128xf32> to vector<16x128xf32>
    %12 = arith.addf %9, %11 : vector<16x128xf32>
    %c0_11 = arith.constant 0 : index
    %c0_12 = arith.constant 0 : index
    %13 = vector.load %arg6[%c0_11, %c0_12] : memref<16x128xf32, #tpu.memory_space<vmem>>, vector<16x128xf32>
    tpu.vector_store %arg6[%c0_11, %c0_12], %12 {strides = array<i32>} : memref<16x128xf32, #tpu.memory_space<vmem>>, vector<16x128xf32>,
    return
  }
  func.func @transform_0(%arg0: i32) -> (i32, i32) {
    %c0_i32 = arith.constant 0 : i32
    %c0_i32_0 = arith.constant 0 : i32
    return %arg0, %c0_i32 : i32, i32
  }
  func.func @transform_1(%arg0: i32) -> (i32, i32) {
    %c0_i32 = arith.constant 0 : i32
    %c0_i32_0 = arith.constant 0 : i32
    %c0_i32_1 = arith.constant 0 : i32
    return %c0_i32, %c0_i32_0 : i32, i32
  }
  func.func @transform_2(%arg0: i32) -> (i32, i32) {
    %c0_i32 = arith.constant 0 : i32
    %c0_i32_0 = arith.constant 0 : i32
    %c0_i32_1 = arith.constant 0 : i32
    return %c0_i32, %c0_i32_0 : i32, i32
  }
  func.func @transform_3(%arg0: i32) -> (i32, i32) {
    %c0_i32 = arith.constant 0 : i32
    %c0_i32_0 = arith.constant 0 : i32
    %c0_i32_1 = arith.constant 0 : i32
    return %c0_i32, %c0_i32_0 : i32, i32
  }
  func.func @transform_4(%arg0: i32) -> (i32, i32) {
    %c0_i32 = arith.constant 0 : i32
    %c0_i32_0 = arith.constant 0 : i32
    %c0_i32_1 = arith.constant 0 : i32
    return %c0_i32, %c0_i32_0 : i32, i32
  }
  func.func @transform_5(%arg0: i32) -> (i32, i32) {
    %c0_i32 = arith.constant 0 : i32
    %c0_i32_0 = arith.constant 0 : i32
    return %arg0, %c0_i32 : i32, i32
  }
}

module attributes {stable_mosaic.version = 11 : i64} {
  func.func @encoder_kernel(%arg0: i32, %arg1: memref<16x4096xf32, #tpu.memory_space<vmem>>, %arg2: memref<4096x30xf32, #tpu.memory_space<vmem>>, %arg3: memref<1x30xf32, #tpu.memory_space<vmem>>, %arg4: memref<30x128xf32, #tpu.memory_space<vmem>>, %arg5: memref<1x128xf32, #tpu.memory_space<vmem>>, %arg6: memref<16x128xf32, #tpu.memory_space<vmem>>) attributes {dimension_semantics = [#tpu.dimension_semantics<parallel>], iteration_bounds = array<i64: 1>, scalar_prefetch = 0 : i64, scratch_operands = 0 : i64, tpu.core_type = #tpu.core_type<tc>, window_params = [{transform_indices = @transform_0, window_bounds = array<i64: 16, 4096>}, {pipeline_mode = #tpu.pipeline_mode<synchronous>, transform_indices = @transform_1, window_bounds = array<i64: 4096, 30>}, {pipeline_mode = #tpu.pipeline_mode<synchronous>, transform_indices = @transform_2, window_bounds = array<i64: 1, 30>}, {pipeline_mode = #tpu.pipeline_mode<synchronous>, transform_indices = @transform_3, window_bounds = array<i64: 30, 128>}, {pipeline_mode = #tpu.pipeline_mode<synchronous>, transform_indices = @transform_4, window_bounds = array<i64: 1, 128>}, {transform_indices = @transform_5, window_bounds = array<i64: 16, 128>}]} {
    %c0 = arith.constant 0 : index
    %c0_0 = arith.constant 0 : index
    %0 = vector.load %arg1[%c0, %c0_0] : memref<16x4096xf32, #tpu.memory_space<vmem>>, vector<16x4096xf32>
    %c0_1 = arith.constant 0 : index
    %c0_2 = arith.constant 0 : index
    %1 = vector.load %arg2[%c0_1, %c0_2] : memref<4096x30xf32, #tpu.memory_space<vmem>>, vector<4096x30xf32>
    %cst = arith.constant dense<0.000000e+00> : vector<16x30xf32>
    %2 = tpu.matmul %0, %1, %cst {dimension_numbers = #tpu.dot_dimension_numbers<[1], [0], [0], [1], [0, 0, 1, 1], [], []>} : vector<16x4096xf32>, vector<4096x30xf32>, vector<16x30xf32> -> vector<16x30xf32>
    %c0_3 = arith.constant 0 : index
    %c0_4 = arith.constant 0 : index
    %3 = vector.load %arg3[%c0_3, %c0_4] : memref<1x30xf32, #tpu.memory_space<vmem>>, vector<1x30xf32>
    %4 = vector.broadcast %3 : vector<1x30xf32> to vector<16x30xf32>
    %5 = arith.addf %2, %4 : vector<16x30xf32>
    %cst_5 = arith.constant 0.000000e+00 : f32
    %6 = vector.broadcast %cst_5 : f32 to vector<16x30xf32>
    %7 = arith.maximumf %5, %6 : vector<16x30xf32>
    %c0_6 = arith.constant 0 : index
    %c0_7 = arith.constant 0 : index
    %8 = vector.load %arg4[%c0_6, %c0_7] : memref<30x128xf32, #tpu.memory_space<vmem>>, vector<30x128xf32>
    %cst_8 = arith.constant dense<0.000000e+00> : vector<16x128xf32>
    %9 = tpu.matmul %7, %8, %cst_8 {dimension_numbers = #tpu.dot_dimension_numbers<[1], [0], [0], [1], [0, 0, 1, 1], [], []>} : vector<16x30xf32>, vector<30x128xf32>, vector<16x128xf32> -> vector<16x128xf32>
    %c0_9 = arith.constant 0 : index
    %c0_10 = arith.constant 0 : index
    %10 = vector.load %arg5[%c0_9, %c0_10] : memref<1x128xf32, #tpu.memory_space<vmem>>, vector<1x128xf32>
    %11 = vector.broadcast %10 : vector<1x128xf32> to vector<16x128xf32>
    %12 = arith.addf %9, %11 : vector<16x128xf32>
    %c0_11 = arith.constant 0 : index
    %c0_12 = arith.constant 0 : index
    %13 = vector.load %arg6[%c0_11, %c0_12] : memref<16x128xf32, #tpu.memory_space<vmem>>, vector<16x128xf32>
    tpu.vector_store %arg6[%c0_11, %c0_12], %12 {strides = array<i32>} : memref<16x128xf32, #tpu.memory_space<vmem>>, vector<16x128xf32>,
    return
  }
  func.func @transform_0(%arg0: i32) -> (i32, i32) {
    %c0_i32 = arith.constant 0 : i32
    %c0_i32_0 = arith.constant 0 : i32
    return %arg0, %c0_i32 : i32, i32
  }
  func.func @transform_1(%arg0: i32) -> (i32, i32) {
    %c0_i32 = arith.constant 0 : i32
    %c0_i32_0 = arith.constant 0 : i32
    %c0_i32_1 = arith.constant 0 : i32
    return %c0_i32, %c0_i32_0 : i32, i32
  }
  func.func @transform_2(%arg0: i32) -> (i32, i32) {
    %c0_i32 = arith.constant 0 : i32
    %c0_i32_0 = arith.constant 0 : i32
    %c0_i32_1 = arith.constant 0 : i32
    return %c0_i32, %c0_i32_0 : i32, i32
  }
  func.func @transform_3(%arg0: i32) -> (i32, i32) {
    %c0_i32 = arith.constant 0 : i32
    %c0_i32_0 = arith.constant 0 : i32
    %c0_i32_1 = arith.constant 0 : i32
    return %c0_i32, %c0_i32_0 : i32, i32
  }
  func.func @transform_4(%arg0: i32) -> (i32, i32) {
    %c0_i32 = arith.constant 0 : i32
    %c0_i32_0 = arith.constant 0 : i32
    %c0_i32_1 = arith.constant 0 : i32
    return %c0_i32, %c0_i32_0 : i32, i32
  }
  func.func @transform_5(%arg0: i32) -> (i32, i32) {
    %c0_i32 = arith.constant 0 : i32
    %c0_i32_0 = arith.constant 0 : i32
    return %arg0, %c0_i32 : i32, i32
  }
}

</mosaic_0001>

<llo_original>
// kernel: tpu_custom_call.1
$region0: #{tpu_custom_call.1}
  #allocation0 [shape = 'u32[]', space=smem, size = 0x4, offset = 0x4, fixed_abs, tag = 'smem constant byte address 0x4 - core index']
  #allocation1 [shape = 'u32[72,128]{1,0:T(1,128)}', space=vmem, size = 0x9000, scoped, tag = 'internal scratch']
  %s0 = inlined_call_operand.vmem [shape: f32[16,4096], index: 0, kind: input, shape index: {}]
  %s1 = inlined_call_operand.vmem [shape: f32[4096,30], index: 1, kind: input, shape index: {}]
  %s2 = inlined_call_operand.vmem [shape: f32[1,30], index: 2, kind: input, shape index: {}]
  %s3 = inlined_call_operand.vmem [shape: f32[30,128], index: 3, kind: input, shape index: {}]
  %s4 = inlined_call_operand.vmem [shape: f32[1,128], index: 4, kind: input, shape index: {}]
  %s5 = inlined_call_operand.hbm [shape: f32[16,128], index: 5, kind: output, shape index: {}]
  %s6 = sld [smem:[#allocation0]]
  $region30: #{tpu_custom_call.1} parent=0
    _
  %s8 = ssub.s32 1, %s6
  %s9 = scalar_select 0, %s8, %s6
  $region1: #{tpu_custom_call.1} parent=0
    #allocation2 [shape = 'u8[8192]{0}', space=vmem, size = 0x2000, scoped, tag = 'output window, operand 0, single buffered']
    #allocation3 [shape = 's32[1]{0}', space=sflag, size = 0x4, scoped, tag = 'scoped memory for tpu_custom_call.1']
    %10 = vsyncpa [#allocation3], 0
    // Predicated region
    $region2: #{tpu_custom_call.1} parent=1 // pred_check
      _
    $region3: #{tpu_custom_call.1} parent=1 // pred_check_branch
      %12 = sbr.rel (0) target = $region5
    $region4: #{tpu_custom_call.1} parent=1 // pred_region
      _
    $region5: #{tpu_custom_call.1} parent=1 // pred_fallthru
      _
    // Predicated region
    $region6: #{tpu_custom_call.1} parent=1 // pred_check
      _
    $region7: #{tpu_custom_call.1} parent=1 // pred_check_branch
      %14 = sbr.rel (0) target = $region9
    $region8: #{tpu_custom_call.1} parent=1 // pred_region
      _
    $region9: #{tpu_custom_call.1} parent=1 // pred_fallthru
      _
    // Predicated region
    $region10: #{tpu_custom_call.1} parent=1 // pred_check
      _
    $region11: #{tpu_custom_call.1} parent=1 // pred_check_branch
      %16 = sbr.rel (0) target = $region13
    $region12: #{tpu_custom_call.1} parent=1 // pred_region
      _
    $region13: #{tpu_custom_call.1} parent=1 // pred_fallthru
      _
    // Predicated region
    $region14: #{tpu_custom_call.1} parent=1 // pred_check
      _
    $region15: #{tpu_custom_call.1} parent=1 // pred_check_branch
      %18 = sbr.rel (0) target = $region17
    $region16: #{tpu_custom_call.1} parent=1 // pred_region
      _
    $region17: #{tpu_custom_call.1} parent=1 // pred_fallthru
      _
    // Predicated region
    $region18: #{tpu_custom_call.1} parent=1 // pred_check
      _
    $region19: #{tpu_custom_call.1} parent=1 // pred_check_branch
      %20 = sbr.rel (0) target = $region21
    $region20: #{tpu_custom_call.1} parent=1 // pred_region
      _
    $region21: #{tpu_custom_call.1} parent=1 // pred_fallthru
      _
    %v21 = vld [vmem:[%s0] sm:$0xff]
    %v22 = vld [vmem:[%s0 + $0x8] sm:$0xff]
    %v23 = vld [vmem:[%s0 + $0x10] sm:$0xff]
    %v24 = vld [vmem:[%s0 + $0x18] sm:$0xff]
    %v25 = vld [vmem:[%s0 + $0x20] sm:$0xff]
    %v26 = vld [vmem:[%s0 + $0x28] sm:$0xff]
    %v27 = vld [vmem:[%s0 + $0x30] sm:$0xff]
    %v28 = vld [vmem:[%s0 + $0x38] sm:$0xff]
    %v29 = vld [vmem:[%s0 + $0x40] sm:$0xff]
    %v30 = vld [vmem:[%s0 + $0x48] sm:$0xff]
    %v31 = vld [vmem:[%s0 + $0x50] sm:$0xff]
    %v32 = vld [vmem:[%s0 + $0x58] sm:$0xff]
    %v33 = vld [vmem:[%s0 + $0x60] sm:$0xff]
    %v34 = vld [vmem:[%s0 + $0x68] sm:$0xff]
    %v35 = vld [vmem:[%s0 + $0x70] sm:$0xff]
    %v36 = vld [vmem:[%s0 + $0x78] sm:$0xff]
    %v37 = vld [vmem:[%s0 + $0x80] sm:$0xff]
    %v38 = vld [vmem:[%s0 + $0x88] sm:$0xff]
    %v39 = vld [vmem:[%s0 + $0x90] sm:$0xff]
    %v40 = vld [vmem:[%s0 + $0x98] sm:$0xff]
    %v41 = vld [vmem:[%s0 + $0xa0] sm:$0xff]
    %v42 = vld [vmem:[%s0 + $0xa8] sm:$0xff]
    %v43 = vld [vmem:[%s0 + $0xb0] sm:$0xff]
    %v44 = vld [vmem:[%s0 + $0xb8] sm:$0xff]
    %v45 = vld [vmem:[%s0 + $0xc0] sm:$0xff]
    %v46 = vld [vmem:[%s0 + $0xc8] sm:$0xff]
    %v47 = vld [vmem:[%s0 + $0xd0] sm:$0xff]
    %v48 = vld [vmem:[%s0 + $0xd8] sm:$0xff]
    %v49 = vld [vmem:[%s0 + $0xe0] sm:$0xff]
    %v50 = vld [vmem:[%s0 + $0xe8] sm:$0xff]
    %v51 = vld [vmem:[%s0 + $0xf0] sm:$0xff]
    %v52 = vld [vmem:[%s0 + $0xf8] sm:$0xff]
    %v53 = vld [vmem:[%s0 + $0x100] sm:$0xff]
    %v54 = vld [vmem:[%s0 + $0x108] sm:$0xff]
    %v55 = vld [vmem:[%s0 + $0x110] sm:$0xff]
    %v56 = vld [vmem:[%s0 + $0x118] sm:$0xff]
    %v57 = vld [vmem:[%s0 + $0x120] sm:$0xff]
    %v58 = vld [vmem:[%s0 + $0x128] sm:$0xff]
    %v59 = vld [vmem:[%s0 + $0x130] sm:$0xff]
    %v60 = vld [vmem:[%s0 + $0x138] sm:$0xff]
    %v61 = vld [vmem:[%s0 + $0x140] sm:$0xff]
    %v62 = vld [vmem:[%s0 + $0x148] sm:$0xff]
    %v63 = vld [vmem:[%s0 + $0x150] sm:$0xff]
    %v64 = vld [vmem:[%s0 + $0x158] sm:$0xff]
    %v65 = vld [vmem:[%s0 + $0x160] sm:$0xff]
    %v66 = vld [vmem:[%s0 + $0x168] sm:$0xff]
    %v67 = vld [vmem:[%s0 + $0x170] sm:$0xff]
    %v68 = vld [vmem:[%s0 + $0x178] sm:$0xff]
    %v69 = vld [vmem:[%s0 + $0x180] sm:$0xff]
    %v70 = vld [vmem:[%s0 + $0x188] sm:$0xff]
    %v71 = vld [vmem:[%s0 + $0x190] sm:$0xff]
    %v72 = vld [vmem:[%s0 + $0x198] sm:$0xff]
    %v73 = vld [vmem:[%s0 + $0x1a0] sm:$0xff]
    %v74 = vld [vmem:[%s0 + $0x1a8] sm:$0xff]
    %v75 = vld [vmem:[%s0 + $0x1b0] sm:$0xff]
    %v76 = vld [vmem:[%s0 + $0x1b8] sm:$0xff]
    %v77 = vld [vmem:[%s0 + $0x1c0] sm:$0xff]
    %v78 = vld [vmem:[%s0 + $0x1c8] sm:$0xff]
    %v79 = vld [vmem:[%s0 + $0x1d0] sm:$0xff]
    %v80 = vld [vmem:[%s0 + $0x1d8] sm:$0xff]
    %v81 = vld [vmem:[%s0 + $0x1e0] sm:$0xff]
    %v82 = vld [vmem:[%s0 + $0x1e8] sm:$0xff]
    %v83 = vld [vmem:[%s0 + $0x1f0] sm:$0xff]
    %v84 = vld [vmem:[%s0 + $0x1f8] sm:$0xff]
    %v85 = vld [vmem:[%s1] sm:$0xff]
    %v86 = vld [vmem:[%s1 + $0x8] sm:$0xff]
    %v87 = vld [vmem:[%s1 + $0x10] sm:$0xff]
    %v88 = vld [vmem:[%s1 + $0x18] sm:$0xff]
    %v89 = vld [vmem:[%s1 + $0x20] sm:$0xff]
    %v90 = vld [vmem:[%s1 + $0x28] sm:$0xff]
    %v91 = vld [vmem:[%s1 + $0x30] sm:$0xff]
    %v92 = vld [vmem:[%s1 + $0x38] sm:$0xff]
    %v93 = vld [vmem:[%s1 + $0x40] sm:$0xff]
    %v94 = vld [vmem:[%s1 + $0x48] sm:$0xff]
    %v95 = vld [vmem:[%s1 + $0x50] sm:$0xff]
    %v96 = vld [vmem:[%s1 + $0x58] sm:$0xff]
    %v97 = vld [vmem:[%s1 + $0x60] sm:$0xff]
    %v98 = vld [vmem:[%s1 + $0x68] sm:$0xff]
    %v99 = vld [vmem:[%s1 + $0x70] sm:$0xff]
    %v100 = vld [vmem:[%s1 + $0x78] sm:$0xff]
    %v101 = vld [vmem:[%s1 + $0x80] sm:$0xff]
    %v102 = vld [vmem:[%s1 + $0x88] sm:$0xff]
    %v103 = vld [vmem:[%s1 + $0x90] sm:$0xff]
    %v104 = vld [vmem:[%s1 + $0x98] sm:$0xff]
    %v105 = vld [vmem:[%s1 + $0xa0] sm:$0xff]
    %v106 = vld [vmem:[%s1 + $0xa8] sm:$0xff]
    %v107 = vld [vmem:[%s1 + $0xb0] sm:$0xff]
    %v108 = vld [vmem:[%s1 + $0xb8] sm:$0xff]
    %v109 = vld [vmem:[%s1 + $0xc0] sm:$0xff]
    %v110 = vld [vmem:[%s1 + $0xc8] sm:$0xff]
    %v111 = vld [vmem:[%s1 + $0xd0] sm:$0xff]
    %v112 = vld [vmem:[%s1 + $0xd8] sm:$0xff]
    %v113 = vld [vmem:[%s1 + $0xe0] sm:$0xff]
    %v114 = vld [vmem:[%s1 + $0xe8] sm:$0xff]
    %v115 = vld [vmem:[%s1 + $0xf0] sm:$0xff]
    %v116 = vld [vmem:[%s1 + $0xf8] sm:$0xff]
    %v117 = vld [vmem:[%s1 + $0x100] sm:$0xff]
    %v118 = vld [vmem:[%s1 + $0x108] sm:$0xff]
    %v119 = vld [vmem:[%s1 + $0x110] sm:$0xff]
    %v120 = vld [vmem:[%s1 + $0x118] sm:$0xff]
    %v121 = vld [vmem:[%s1 + $0x120] sm:$0xff]
    %v122 = vld [vmem:[%s1 + $0x128] sm:$0xff]
    %v123 = vld [vmem:[%s1 + $0x130] sm:$0xff]
    %v124 = vld [vmem:[%s1 + $0x138] sm:$0xff]
    %v125 = vld [vmem:[%s1 + $0x140] sm:$0xff]
    %v126 = vld [vmem:[%s1 + $0x148] sm:$0xff]
    %v127 = vld [vmem:[%s1 + $0x150] sm:$0xff]
    %v128 = vld [vmem:[%s1 + $0x158] sm:$0xff]
    %v129 = vld [vmem:[%s1 + $0x160] sm:$0xff]
    %v130 = vld [vmem:[%s1 + $0x168] sm:$0xff]
    %v131 = vld [vmem:[%s1 + $0x170] sm:$0xff]
    %v132 = vld [vmem:[%s1 + $0x178] sm:$0xff]
    %v133 = vld [vmem:[%s1 + $0x180] sm:$0xff]
    %v134 = vld [vmem:[%s1 + $0x188] sm:$0xff]
    %v135 = vld [vmem:[%s1 + $0x190] sm:$0xff]
    %v136 = vld [vmem:[%s1 + $0x198] sm:$0xff]
    %v137 = vld [vmem:[%s1 + $0x1a0] sm:$0xff]
    %v138 = vld [vmem:[%s1 + $0x1a8] sm:$0xff]
    %v139 = vld [vmem:[%s1 + $0x1b0] sm:$0xff]
    %v140 = vld [vmem:[%s1 + $0x1b8] sm:$0xff]
    %v141 = vld [vmem:[%s1 + $0x1c0] sm:$0xff]
    %v142 = vld [vmem:[%s1 + $0x1c8] sm:$0xff]
    %v143 = vld [vmem:[%s1 + $0x1d0] sm:$0xff]
    %v144 = vld [vmem:[%s1 + $0x1d8] sm:$0xff]
    %v145 = vld [vmem:[%s1 + $0x1e0] sm:$0xff]
    %v146 = vld [vmem:[%s1 + $0x1e8] sm:$0xff]
    %v147 = vld [vmem:[%s1 + $0x1f0] sm:$0xff]
    %v148 = vld [vmem:[%s1 + $0x1f8] sm:$0xff]
    %v149 = vld [vmem:[%s1 + $0x200] sm:$0xff]
    %v150 = vld [vmem:[%s1 + $0x208] sm:$0xff]
    %v151 = vld [vmem:[%s1 + $0x210] sm:$0xff]
    %v152 = vld [vmem:[%s1 + $0x218] sm:$0xff]
    %v153 = vld [vmem:[%s1 + $0x220] sm:$0xff]
    %v154 = vld [vmem:[%s1 + $0x228] sm:$0xff]
    %v155 = vld [vmem:[%s1 + $0x230] sm:$0xff]
    %v156 = vld [vmem:[%s1 + $0x238] sm:$0xff]
    %v157 = vld [vmem:[%s1 + $0x240] sm:$0xff]
    %v158 = vld [vmem:[%s1 + $0x248] sm:$0xff]
    %v159 = vld [vmem:[%s1 + $0x250] sm:$0xff]
    %v160 = vld [vmem:[%s1 + $0x258] sm:$0xff]
    %v161 = vld [vmem:[%s1 + $0x260] sm:$0xff]
    %v162 = vld [vmem:[%s1 + $0x268] sm:$0xff]
    %v163 = vld [vmem:[%s1 + $0x270] sm:$0xff]
    %v164 = vld [vmem:[%s1 + $0x278] sm:$0xff]
    %v165 = vld [vmem:[%s1 + $0x280] sm:$0xff]
    %v166 = vld [vmem:[%s1 + $0x288] sm:$0xff]
    %v167 = vld [vmem:[%s1 + $0x290] sm:$0xff]
    %v168 = vld [vmem:[%s1 + $0x298] sm:$0xff]
    %v169 = vld [vmem:[%s1 + $0x2a0] sm:$0xff]
    %v170 = vld [vmem:[%s1 + $0x2a8] sm:$0xff]
    %v171 = vld [vmem:[%s1 + $0x2b0] sm:$0xff]
    %v172 = vld [vmem:[%s1 + $0x2b8] sm:$0xff]
    %v173 = vld [vmem:[%s1 + $0x2c0] sm:$0xff]
    %v174 = vld [vmem:[%s1 + $0x2c8] sm:$0xff]
    %v175 = vld [vmem:[%s1 + $0x2d0] sm:$0xff]
    %v176 = vld [vmem:[%s1 + $0x2d8] sm:$0xff]
    %v177 = vld [vmem:[%s1 + $0x2e0] sm:$0xff]
    %v178 = vld [vmem:[%s1 + $0x2e8] sm:$0xff]
    %v179 = vld [vmem:[%s1 + $0x2f0] sm:$0xff]
    %v180 = vld [vmem:[%s1 + $0x2f8] sm:$0xff]
    %v181 = vld [vmem:[%s1 + $0x300] sm:$0xff]
    %v182 = vld [vmem:[%s1 + $0x308] sm:$0xff]
    %v183 = vld [vmem:[%s1 + $0x310] sm:$0xff]
    %v184 = vld [vmem:[%s1 + $0x318] sm:$0xff]
    %v185 = vld [vmem:[%s1 + $0x320] sm:$0xff]
    %v186 = vld [vmem:[%s1 + $0x328] sm:$0xff]
    %v187 = vld [vmem:[%s1 + $0x330] sm:$0xff]
    %v188 = vld [vmem:[%s1 + $0x338] sm:$0xff]
    %v189 = vld [vmem:[%s1 + $0x340] sm:$0xff]
    %v190 = vld [vmem:[%s1 + $0x348] sm:$0xff]
    %v191 = vld [vmem:[%s1 + $0x350] sm:$0xff]
    %v192 = vld [vmem:[%s1 + $0x358] sm:$0xff]
    %v193 = vld [vmem:[%s1 + $0x360] sm:$0xff]
    %v194 = vld [vmem:[%s1 + $0x368] sm:$0xff]
    %v195 = vld [vmem:[%s1 + $0x370] sm:$0xff]
    %v196 = vld [vmem:[%s1 + $0x378] sm:$0xff]
    %v197 = vld [vmem:[%s1 + $0x380] sm:$0xff]
    %v198 = vld [vmem:[%s1 + $0x388] sm:$0xff]
    %v199 = vld [vmem:[%s1 + $0x390] sm:$0xff]
    %v200 = vld [vmem:[%s1 + $0x398] sm:$0xff]
    %v201 = vld [vmem:[%s1 + $0x3a0] sm:$0xff]
    %v202 = vld [vmem:[%s1 + $0x3a8] sm:$0xff]
    %v203 = vld [vmem:[%s1 + $0x3b0] sm:$0xff]
    %v204 = vld [vmem:[%s1 + $0x3b8] sm:$0xff]
    %v205 = vld [vmem:[%s1 + $0x3c0] sm:$0xff]
    %v206 = vld [vmem:[%s1 + $0x3c8] sm:$0xff]
    %v207 = vld [vmem:[%s1 + $0x3d0] sm:$0xff]
    %v208 = vld [vmem:[%s1 + $0x3d8] sm:$0xff]
    %v209 = vld [vmem:[%s1 + $0x3e0] sm:$0xff]
    %v210 = vld [vmem:[%s1 + $0x3e8] sm:$0xff]
    %v211 = vld [vmem:[%s1 + $0x3f0] sm:$0xff]
    %v212 = vld [vmem:[%s1 + $0x3f8] sm:$0xff]
    %v213 = vld [vmem:[%s1 + $0x400] sm:$0xff]
    %v214 = vld [vmem:[%s1 + $0x408] sm:$0xff]
    %v215 = vld [vmem:[%s1 + $0x410] sm:$0xff]
    %v216 = vld [vmem:[%s1 + $0x418] sm:$0xff]
    %v217 = vld [vmem:[%s1 + $0x420] sm:$0xff]
    %v218 = vld [vmem:[%s1 + $0x428] sm:$0xff]
    %v219 = vld [vmem:[%s1 + $0x430] sm:$0xff]
    %v220 = vld [vmem:[%s1 + $0x438] sm:$0xff]
    %v221 = vld [vmem:[%s1 + $0x440] sm:$0xff]
    %v222 = vld [vmem:[%s1 + $0x448] sm:$0xff]
    %v223 = vld [vmem:[%s1 + $0x450] sm:$0xff]
    %v224 = vld [vmem:[%s1 + $0x458] sm:$0xff]
    %v225 = vld [vmem:[%s1 + $0x460] sm:$0xff]
    %v226 = vld [vmem:[%s1 + $0x468] sm:$0xff]
    %v227 = vld [vmem:[%s1 + $0x470] sm:$0xff]
    %v228 = vld [vmem:[%s1 + $0x478] sm:$0xff]
    %v229 = vld [vmem:[%s1 + $0x480] sm:$0xff]
    %v230 = vld [vmem:[%s1 + $0x488] sm:$0xff]
    %v231 = vld [vmem:[%s1 + $0x490] sm:$0xff]
    %v232 = vld [vmem:[%s1 + $0x498] sm:$0xff]
    %v233 = vld [vmem:[%s1 + $0x4a0] sm:$0xff]
    %v234 = vld [vmem:[%s1 + $0x4a8] sm:$0xff]
    %v235 = vld [vmem:[%s1 + $0x4b0] sm:$0xff]
    %v236 = vld [vmem:[%s1 + $0x4b8] sm:$0xff]
    %v237 = vld [vmem:[%s1 + $0x4c0] sm:$0xff]
    %v238 = vld [vmem:[%s1 + $0x4c8] sm:$0xff]
    %v239 = vld [vmem:[%s1 + $0x4d0] sm:$0xff]
    %v240 = vld [vmem:[%s1 + $0x4d8] sm:$0xff]
    %v241 = vld [vmem:[%s1 + $0x4e0] sm:$0xff]
    %v242 = vld [vmem:[%s1 + $0x4e8] sm:$0xff]
    %v243 = vld [vmem:[%s1 + $0x4f0] sm:$0xff]
    %v244 = vld [vmem:[%s1 + $0x4f8] sm:$0xff]
    %v245 = vld [vmem:[%s1 + $0x500] sm:$0xff]
    %v246 = vld [vmem:[%s1 + $0x508] sm:$0xff]
    %v247 = vld [vmem:[%s1 + $0x510] sm:$0xff]
    %v248 = vld [vmem:[%s1 + $0x518] sm:$0xff]
    %v249 = vld [vmem:[%s1 + $0x520] sm:$0xff]
    %v250 = vld [vmem:[%s1 + $0x528] sm:$0xff]
    %v251 = vld [vmem:[%s1 + $0x530] sm:$0xff]
    %v252 = vld [vmem:[%s1 + $0x538] sm:$0xff]
    %v253 = vld [vmem:[%s1 + $0x540] sm:$0xff]
    %v254 = vld [vmem:[%s1 + $0x548] sm:$0xff]
    %v255 = vld [vmem:[%s1 + $0x550] sm:$0xff]
    %v256 = vld [vmem:[%s1 + $0x558] sm:$0xff]
    %v257 = vld [vmem:[%s1 + $0x560] sm:$0xff]
    %v258 = vld [vmem:[%s1 + $0x568] sm:$0xff]
    %v259 = vld [vmem:[%s1 + $0x570] sm:$0xff]
    %v260 = vld [vmem:[%s1 + $0x578] sm:$0xff]
    %v261 = vld [vmem:[%s1 + $0x580] sm:$0xff]
    %v262 = vld [vmem:[%s1 + $0x588] sm:$0xff]
    %v263 = vld [vmem:[%s1 + $0x590] sm:$0xff]
    %v264 = vld [vmem:[%s1 + $0x598] sm:$0xff]
    %v265 = vld [vmem:[%s1 + $0x5a0] sm:$0xff]
    %v266 = vld [vmem:[%s1 + $0x5a8] sm:$0xff]
    %v267 = vld [vmem:[%s1 + $0x5b0] sm:$0xff]
    %v268 = vld [vmem:[%s1 + $0x5b8] sm:$0xff]
    %v269 = vld [vmem:[%s1 + $0x5c0] sm:$0xff]
    %v270 = vld [vmem:[%s1 + $0x5c8] sm:$0xff]
    %v271 = vld [vmem:[%s1 + $0x5d0] sm:$0xff]
    %v272 = vld [vmem:[%s1 + $0x5d8] sm:$0xff]
    %v273 = vld [vmem:[%s1 + $0x5e0] sm:$0xff]
    %v274 = vld [vmem:[%s1 + $0x5e8] sm:$0xff]
    %v275 = vld [vmem:[%s1 + $0x5f0] sm:$0xff]
    %v276 = vld [vmem:[%s1 + $0x5f8] sm:$0xff]
    %v277 = vld [vmem:[%s1 + $0x600] sm:$0xff]
    %v278 = vld [vmem:[%s1 + $0x608] sm:$0xff]
    %v279 = vld [vmem:[%s1 + $0x610] sm:$0xff]
    %v280 = vld [vmem:[%s1 + $0x618] sm:$0xff]
    %v281 = vld [vmem:[%s1 + $0x620] sm:$0xff]
    %v282 = vld [vmem:[%s1 + $0x628] sm:$0xff]
    %v283 = vld [vmem:[%s1 + $0x630] sm:$0xff]
    %v284 = vld [vmem:[%s1 + $0x638] sm:$0xff]
    %v285 = vld [vmem:[%s1 + $0x640] sm:$0xff]
    %v286 = vld [vmem:[%s1 + $0x648] sm:$0xff]
    %v287 = vld [vmem:[%s1 + $0x650] sm:$0xff]
    %v288 = vld [vmem:[%s1 + $0x658] sm:$0xff]
    %v289 = vld [vmem:[%s1 + $0x660] sm:$0xff]
    %v290 = vld [vmem:[%s1 + $0x668] sm:$0xff]
    %v291 = vld [vmem:[%s1 + $0x670] sm:$0xff]
    %v292 = vld [vmem:[%s1 + $0x678] sm:$0xff]
    %v293 = vld [vmem:[%s1 + $0x680] sm:$0xff]
    %v294 = vld [vmem:[%s1 + $0x688] sm:$0xff]
    %v295 = vld [vmem:[%s1 + $0x690] sm:$0xff]
    %v296 = vld [vmem:[%s1 + $0x698] sm:$0xff]
    %v297 = vld [vmem:[%s1 + $0x6a0] sm:$0xff]
    %v298 = vld [vmem:[%s1 + $0x6a8] sm:$0xff]
    %v299 = vld [vmem:[%s1 + $0x6b0] sm:$0xff]
    %v300 = vld [vmem:[%s1 + $0x6b8] sm:$0xff]
    %v301 = vld [vmem:[%s1 + $0x6c0] sm:$0xff]
    %v302 = vld [vmem:[%s1 + $0x6c8] sm:$0xff]
    %v303 = vld [vmem:[%s1 + $0x6d0] sm:$0xff]
    %v304 = vld [vmem:[%s1 + $0x6d8] sm:$0xff]
    %v305 = vld [vmem:[%s1 + $0x6e0] sm:$0xff]
    %v306 = vld [vmem:[%s1 + $0x6e8] sm:$0xff]
    %v307 = vld [vmem:[%s1 + $0x6f0] sm:$0xff]
    %v308 = vld [vmem:[%s1 + $0x6f8] sm:$0xff]
    %v309 = vld [vmem:[%s1 + $0x700] sm:$0xff]
    %v310 = vld [vmem:[%s1 + $0x708] sm:$0xff]
    %v311 = vld [vmem:[%s1 + $0x710] sm:$0xff]
    %v312 = vld [vmem:[%s1 + $0x718] sm:$0xff]
    %v313 = vld [vmem:[%s1 + $0x720] sm:$0xff]
    %v314 = vld [vmem:[%s1 + $0x728] sm:$0xff]
    %v315 = vld [vmem:[%s1 + $0x730] sm:$0xff]
    %v316 = vld [vmem:[%s1 + $0x738] sm:$0xff]
    %v317 = vld [vmem:[%s1 + $0x740] sm:$0xff]
    %v318 = vld [vmem:[%s1 + $0x748] sm:$0xff]
    %v319 = vld [vmem:[%s1 + $0x750] sm:$0xff]
    %v320 = vld [vmem:[%s1 + $0x758] sm:$0xff]
    %v321 = vld [vmem:[%s1 + $0x760] sm:$0xff]
    %v322 = vld [vmem:[%s1 + $0x768] sm:$0xff]
    %v323 = vld [vmem:[%s1 + $0x770] sm:$0xff]
    %v324 = vld [vmem:[%s1 + $0x778] sm:$0xff]
    %v325 = vld [vmem:[%s1 + $0x780] sm:$0xff]
    %v326 = vld [vmem:[%s1 + $0x788] sm:$0xff]
    %v327 = vld [vmem:[%s1 + $0x790] sm:$0xff]
    %v328 = vld [vmem:[%s1 + $0x798] sm:$0xff]
    %v329 = vld [vmem:[%s1 + $0x7a0] sm:$0xff]
    %v330 = vld [vmem:[%s1 + $0x7a8] sm:$0xff]
    %v331 = vld [vmem:[%s1 + $0x7b0] sm:$0xff]
    %v332 = vld [vmem:[%s1 + $0x7b8] sm:$0xff]
    %v333 = vld [vmem:[%s1 + $0x7c0] sm:$0xff]
    %v334 = vld [vmem:[%s1 + $0x7c8] sm:$0xff]
    %v335 = vld [vmem:[%s1 + $0x7d0] sm:$0xff]
    %v336 = vld [vmem:[%s1 + $0x7d8] sm:$0xff]
    %v337 = vld [vmem:[%s1 + $0x7e0] sm:$0xff]
    %v338 = vld [vmem:[%s1 + $0x7e8] sm:$0xff]
    %v339 = vld [vmem:[%s1 + $0x7f0] sm:$0xff]
    %v340 = vld [vmem:[%s1 + $0x7f8] sm:$0xff]
    %v341 = vld [vmem:[%s1 + $0x800] sm:$0xff]
    %v342 = vld [vmem:[%s1 + $0x808] sm:$0xff]
    %v343 = vld [vmem:[%s1 + $0x810] sm:$0xff]
    %v344 = vld [vmem:[%s1 + $0x818] sm:$0xff]
    %v345 = vld [vmem:[%s1 + $0x820] sm:$0xff]
    %v346 = vld [vmem:[%s1 + $0x828] sm:$0xff]
    %v347 = vld [vmem:[%s1 + $0x830] sm:$0xff]
    %v348 = vld [vmem:[%s1 + $0x838] sm:$0xff]
    %v349 = vld [vmem:[%s1 + $0x840] sm:$0xff]
    %v350 = vld [vmem:[%s1 + $0x848] sm:$0xff]
    %v351 = vld [vmem:[%s1 + $0x850] sm:$0xff]
    %v352 = vld [vmem:[%s1 + $0x858] sm:$0xff]
    %v353 = vld [vmem:[%s1 + $0x860] sm:$0xff]
    %v354 = vld [vmem:[%s1 + $0x868] sm:$0xff]
    %v355 = vld [vmem:[%s1 + $0x870] sm:$0xff]
    %v356 = vld [vmem:[%s1 + $0x878] sm:$0xff]
    %v357 = vld [vmem:[%s1 + $0x880] sm:$0xff]
    %v358 = vld [vmem:[%s1 + $0x888] sm:$0xff]
    %v359 = vld [vmem:[%s1 + $0x890] sm:$0xff]
    %v360 = vld [vmem:[%s1 + $0x898] sm:$0xff]
    %v361 = vld [vmem:[%s1 + $0x8a0] sm:$0xff]
    %v362 = vld [vmem:[%s1 + $0x8a8] sm:$0xff]
    %v363 = vld [vmem:[%s1 + $0x8b0] sm:$0xff]
    %v364 = vld [vmem:[%s1 + $0x8b8] sm:$0xff]
    %v365 = vld [vmem:[%s1 + $0x8c0] sm:$0xff]
    %v366 = vld [vmem:[%s1 + $0x8c8] sm:$0xff]
    %v367 = vld [vmem:[%s1 + $0x8d0] sm:$0xff]
    %v368 = vld [vmem:[%s1 + $0x8d8] sm:$0xff]
    %v369 = vld [vmem:[%s1 + $0x8e0] sm:$0xff]
    %v370 = vld [vmem:[%s1 + $0x8e8] sm:$0xff]
    %v371 = vld [vmem:[%s1 + $0x8f0] sm:$0xff]
    %v372 = vld [vmem:[%s1 + $0x8f8] sm:$0xff]
    %v373 = vld [vmem:[%s1 + $0x900] sm:$0xff]
    %v374 = vld [vmem:[%s1 + $0x908] sm:$0xff]
    %v375 = vld [vmem:[%s1 + $0x910] sm:$0xff]
    %v376 = vld [vmem:[%s1 + $0x918] sm:$0xff]
    %v377 = vld [vmem:[%s1 + $0x920] sm:$0xff]
    %v378 = vld [vmem:[%s1 + $0x928] sm:$0xff]
    %v379 = vld [vmem:[%s1 + $0x930] sm:$0xff]
    %v380 = vld [vmem:[%s1 + $0x938] sm:$0xff]
    %v381 = vld [vmem:[%s1 + $0x940] sm:$0xff]
    %v382 = vld [vmem:[%s1 + $0x948] sm:$0xff]
    %v383 = vld [vmem:[%s1 + $0x950] sm:$0xff]
    %v384 = vld [vmem:[%s1 + $0x958] sm:$0xff]
    %v385 = vld [vmem:[%s1 + $0x960] sm:$0xff]
    %v386 = vld [vmem:[%s1 + $0x968] sm:$0xff]
    %v387 = vld [vmem:[%s1 + $0x970] sm:$0xff]
    %v388 = vld [vmem:[%s1 + $0x978] sm:$0xff]
    %v389 = vld [vmem:[%s1 + $0x980] sm:$0xff]
    %v390 = vld [vmem:[%s1 + $0x988] sm:$0xff]
    %v391 = vld [vmem:[%s1 + $0x990] sm:$0xff]
    %v392 = vld [vmem:[%s1 + $0x998] sm:$0xff]
    %v393 = vld [vmem:[%s1 + $0x9a0] sm:$0xff]
    %v394 = vld [vmem:[%s1 + $0x9a8] sm:$0xff]
    %v395 = vld [vmem:[%s1 + $0x9b0] sm:$0xff]
    %v396 = vld [vmem:[%s1 + $0x9b8] sm:$0xff]
    %v397 = vld [vmem:[%s1 + $0x9c0] sm:$0xff]
    %v398 = vld [vmem:[%s1 + $0x9c8] sm:$0xff]
    %v399 = vld [vmem:[%s1 + $0x9d0] sm:$0xff]
    %v400 = vld [vmem:[%s1 + $0x9d8] sm:$0xff]
    %v401 = vld [vmem:[%s1 + $0x9e0] sm:$0xff]
    %v402 = vld [vmem:[%s1 + $0x9e8] sm:$0xff]
    %v403 = vld [vmem:[%s1 + $0x9f0] sm:$0xff]
    %v404 = vld [vmem:[%s1 + $0x9f8] sm:$0xff]
    %v405 = vld [vmem:[%s1 + $0xa00] sm:$0xff]
    %v406 = vld [vmem:[%s1 + $0xa08] sm:$0xff]
    %v407 = vld [vmem:[%s1 + $0xa10] sm:$0xff]
    %v408 = vld [vmem:[%s1 + $0xa18] sm:$0xff]
    %v409 = vld [vmem:[%s1 + $0xa20] sm:$0xff]
    %v410 = vld [vmem:[%s1 + $0xa28] sm:$0xff]
    %v411 = vld [vmem:[%s1 + $0xa30] sm:$0xff]
    %v412 = vld [vmem:[%s1 + $0xa38] sm:$0xff]
    %v413 = vld [vmem:[%s1 + $0xa40] sm:$0xff]
    %v414 = vld [vmem:[%s1 + $0xa48] sm:$0xff]
    %v415 = vld [vmem:[%s1 + $0xa50] sm:$0xff]
    %v416 = vld [vmem:[%s1 + $0xa58] sm:$0xff]
    %v417 = vld [vmem:[%s1 + $0xa60] sm:$0xff]
    %v418 = vld [vmem:[%s1 + $0xa68] sm:$0xff]
    %v419 = vld [vmem:[%s1 + $0xa70] sm:$0xff]
    %v420 = vld [vmem:[%s1 + $0xa78] sm:$0xff]
    %v421 = vld [vmem:[%s1 + $0xa80] sm:$0xff]
    %v422 = vld [vmem:[%s1 + $0xa88] sm:$0xff]
    %v423 = vld [vmem:[%s1 + $0xa90] sm:$0xff]
    %v424 = vld [vmem:[%s1 + $0xa98] sm:$0xff]
    %v425 = vld [vmem:[%s1 + $0xaa0] sm:$0xff]
    %v426 = vld [vmem:[%s1 + $0xaa8] sm:$0xff]
    %v427 = vld [vmem:[%s1 + $0xab0] sm:$0xff]
    %v428 = vld [vmem:[%s1 + $0xab8] sm:$0xff]
    %v429 = vld [vmem:[%s1 + $0xac0] sm:$0xff]
    %v430 = vld [vmem:[%s1 + $0xac8] sm:$0xff]
    %v431 = vld [vmem:[%s1 + $0xad0] sm:$0xff]
    %v432 = vld [vmem:[%s1 + $0xad8] sm:$0xff]
    %v433 = vld [vmem:[%s1 + $0xae0] sm:$0xff]
    %v434 = vld [vmem:[%s1 + $0xae8] sm:$0xff]
    %v435 = vld [vmem:[%s1 + $0xaf0] sm:$0xff]
    %v436 = vld [vmem:[%s1 + $0xaf8] sm:$0xff]
    %v437 = vld [vmem:[%s1 + $0xb00] sm:$0xff]
    %v438 = vld [vmem:[%s1 + $0xb08] sm:$0xff]
    %v439 = vld [vmem:[%s1 + $0xb10] sm:$0xff]
    %v440 = vld [vmem:[%s1 + $0xb18] sm:$0xff]
    %v441 = vld [vmem:[%s1 + $0xb20] sm:$0xff]
    %v442 = vld [vmem:[%s1 + $0xb28] sm:$0xff]
    %v443 = vld [vmem:[%s1 + $0xb30] sm:$0xff]
    %v444 = vld [vmem:[%s1 + $0xb38] sm:$0xff]
    %v445 = vld [vmem:[%s1 + $0xb40] sm:$0xff]
    %v446 = vld [vmem:[%s1 + $0xb48] sm:$0xff]
    %v447 = vld [vmem:[%s1 + $0xb50] sm:$0xff]
    %v448 = vld [vmem:[%s1 + $0xb58] sm:$0xff]
    %v449 = vld [vmem:[%s1 + $0xb60] sm:$0xff]
    %v450 = vld [vmem:[%s1 + $0xb68] sm:$0xff]
    %v451 = vld [vmem:[%s1 + $0xb70] sm:$0xff]
    %v452 = vld [vmem:[%s1 + $0xb78] sm:$0xff]
    %v453 = vld [vmem:[%s1 + $0xb80] sm:$0xff]
    %v454 = vld [vmem:[%s1 + $0xb88] sm:$0xff]
    %v455 = vld [vmem:[%s1 + $0xb90] sm:$0xff]
    %v456 = vld [vmem:[%s1 + $0xb98] sm:$0xff]
    %v457 = vld [vmem:[%s1 + $0xba0] sm:$0xff]
    %v458 = vld [vmem:[%s1 + $0xba8] sm:$0xff]
    %v459 = vld [vmem:[%s1 + $0xbb0] sm:$0xff]
    %v460 = vld [vmem:[%s1 + $0xbb8] sm:$0xff]
    %v461 = vld [vmem:[%s1 + $0xbc0] sm:$0xff]
    %v462 = vld [vmem:[%s1 + $0xbc8] sm:$0xff]
    %v463 = vld [vmem:[%s1 + $0xbd0] sm:$0xff]
    %v464 = vld [vmem:[%s1 + $0xbd8] sm:$0xff]
    %v465 = vld [vmem:[%s1 + $0xbe0] sm:$0xff]
    %v466 = vld [vmem:[%s1 + $0xbe8] sm:$0xff]
    %v467 = vld [vmem:[%s1 + $0xbf0] sm:$0xff]
    %v468 = vld [vmem:[%s1 + $0xbf8] sm:$0xff]
    %v469 = vld [vmem:[%s1 + $0xc00] sm:$0xff]
    %v470 = vld [vmem:[%s1 + $0xc08] sm:$0xff]
    %v471 = vld [vmem:[%s1 + $0xc10] sm:$0xff]
    %v472 = vld [vmem:[%s1 + $0xc18] sm:$0xff]
    %v473 = vld [vmem:[%s1 + $0xc20] sm:$0xff]
    %v474 = vld [vmem:[%s1 + $0xc28] sm:$0xff]
    %v475 = vld [vmem:[%s1 + $0xc30] sm:$0xff]
    %v476 = vld [vmem:[%s1 + $0xc38] sm:$0xff]
    %v477 = vld [vmem:[%s1 + $0xc40] sm:$0xff]
    %v478 = vld [vmem:[%s1 + $0xc48] sm:$0xff]
    %v479 = vld [vmem:[%s1 + $0xc50] sm:$0xff]
    %v480 = vld [vmem:[%s1 + $0xc58] sm:$0xff]
    %v481 = vld [vmem:[%s1 + $0xc60] sm:$0xff]
    %v482 = vld [vmem:[%s1 + $0xc68] sm:$0xff]
    %v483 = vld [vmem:[%s1 + $0xc70] sm:$0xff]
    %v484 = vld [vmem:[%s1 + $0xc78] sm:$0xff]
    %v485 = vld [vmem:[%s1 + $0xc80] sm:$0xff]
    %v486 = vld [vmem:[%s1 + $0xc88] sm:$0xff]
    %v487 = vld [vmem:[%s1 + $0xc90] sm:$0xff]
    %v488 = vld [vmem:[%s1 + $0xc98] sm:$0xff]
    %v489 = vld [vmem:[%s1 + $0xca0] sm:$0xff]
    %v490 = vld [vmem:[%s1 + $0xca8] sm:$0xff]
    %v491 = vld [vmem:[%s1 + $0xcb0] sm:$0xff]
    %v492 = vld [vmem:[%s1 + $0xcb8] sm:$0xff]
    %v493 = vld [vmem:[%s1 + $0xcc0] sm:$0xff]
    %v494 = vld [vmem:[%s1 + $0xcc8] sm:$0xff]
    %v495 = vld [vmem:[%s1 + $0xcd0] sm:$0xff]
    %v496 = vld [vmem:[%s1 + $0xcd8] sm:$0xff]
    %v497 = vld [vmem:[%s1 + $0xce0] sm:$0xff]
    %v498 = vld [vmem:[%s1 + $0xce8] sm:$0xff]
    %v499 = vld [vmem:[%s1 + $0xcf0] sm:$0xff]
    %v500 = vld [vmem:[%s1 + $0xcf8] sm:$0xff]
    %v501 = vld [vmem:[%s1 + $0xd00] sm:$0xff]
    %v502 = vld [vmem:[%s1 + $0xd08] sm:$0xff]
    %v503 = vld [vmem:[%s1 + $0xd10] sm:$0xff]
    %v504 = vld [vmem:[%s1 + $0xd18] sm:$0xff]
    %v505 = vld [vmem:[%s1 + $0xd20] sm:$0xff]
    %v506 = vld [vmem:[%s1 + $0xd28] sm:$0xff]
    %v507 = vld [vmem:[%s1 + $0xd30] sm:$0xff]
    %v508 = vld [vmem:[%s1 + $0xd38] sm:$0xff]
    %v509 = vld [vmem:[%s1 + $0xd40] sm:$0xff]
    %v510 = vld [vmem:[%s1 + $0xd48] sm:$0xff]
    %v511 = vld [vmem:[%s1 + $0xd50] sm:$0xff]
    %v512 = vld [vmem:[%s1 + $0xd58] sm:$0xff]
    %v513 = vld [vmem:[%s1 + $0xd60] sm:$0xff]
    %v514 = vld [vmem:[%s1 + $0xd68] sm:$0xff]
    %v515 = vld [vmem:[%s1 + $0xd70] sm:$0xff]
    %v516 = vld [vmem:[%s1 + $0xd78] sm:$0xff]
    %v517 = vld [vmem:[%s1 + $0xd80] sm:$0xff]
    %v518 = vld [vmem:[%s1 + $0xd88] sm:$0xff]
    %v519 = vld [vmem:[%s1 + $0xd90] sm:$0xff]
    %v520 = vld [vmem:[%s1 + $0xd98] sm:$0xff]
    %v521 = vld [vmem:[%s1 + $0xda0] sm:$0xff]
    %v522 = vld [vmem:[%s1 + $0xda8] sm:$0xff]
    %v523 = vld [vmem:[%s1 + $0xdb0] sm:$0xff]
    %v524 = vld [vmem:[%s1 + $0xdb8] sm:$0xff]
    %v525 = vld [vmem:[%s1 + $0xdc0] sm:$0xff]
    %v526 = vld [vmem:[%s1 + $0xdc8] sm:$0xff]
    %v527 = vld [vmem:[%s1 + $0xdd0] sm:$0xff]
    %v528 = vld [vmem:[%s1 + $0xdd8] sm:$0xff]
    %v529 = vld [vmem:[%s1 + $0xde0] sm:$0xff]
    %v530 = vld [vmem:[%s1 + $0xde8] sm:$0xff]
    %v531 = vld [vmem:[%s1 + $0xdf0] sm:$0xff]
    %v532 = vld [vmem:[%s1 + $0xdf8] sm:$0xff]
    %v533 = vld [vmem:[%s1 + $0xe00] sm:$0xff]
    %v534 = vld [vmem:[%s1 + $0xe08] sm:$0xff]
    %v535 = vld [vmem:[%s1 + $0xe10] sm:$0xff]
    %v536 = vld [vmem:[%s1 + $0xe18] sm:$0xff]
    %v537 = vld [vmem:[%s1 + $0xe20] sm:$0xff]
    %v538 = vld [vmem:[%s1 + $0xe28] sm:$0xff]
    %v539 = vld [vmem:[%s1 + $0xe30] sm:$0xff]
    %v540 = vld [vmem:[%s1 + $0xe38] sm:$0xff]
    %v541 = vld [vmem:[%s1 + $0xe40] sm:$0xff]
    %v542 = vld [vmem:[%s1 + $0xe48] sm:$0xff]
    %v543 = vld [vmem:[%s1 + $0xe50] sm:$0xff]
    %v544 = vld [vmem:[%s1 + $0xe58] sm:$0xff]
    %v545 = vld [vmem:[%s1 + $0xe60] sm:$0xff]
    %v546 = vld [vmem:[%s1 + $0xe68] sm:$0xff]
    %v547 = vld [vmem:[%s1 + $0xe70] sm:$0xff]
    %v548 = vld [vmem:[%s1 + $0xe78] sm:$0xff]
    %v549 = vld [vmem:[%s1 + $0xe80] sm:$0xff]
    %v550 = vld [vmem:[%s1 + $0xe88] sm:$0xff]
    %v551 = vld [vmem:[%s1 + $0xe90] sm:$0xff]
    %v552 = vld [vmem:[%s1 + $0xe98] sm:$0xff]
    %v553 = vld [vmem:[%s1 + $0xea0] sm:$0xff]
    %v554 = vld [vmem:[%s1 + $0xea8] sm:$0xff]
    %v555 = vld [vmem:[%s1 + $0xeb0] sm:$0xff]
    %v556 = vld [vmem:[%s1 + $0xeb8] sm:$0xff]
    %v557 = vld [vmem:[%s1 + $0xec0] sm:$0xff]
    %v558 = vld [vmem:[%s1 + $0xec8] sm:$0xff]
    %v559 = vld [vmem:[%s1 + $0xed0] sm:$0xff]
    %v560 = vld [vmem:[%s1 + $0xed8] sm:$0xff]
    %v561 = vld [vmem:[%s1 + $0xee0] sm:$0xff]
    %v562 = vld [vmem:[%s1 + $0xee8] sm:$0xff]
    %v563 = vld [vmem:[%s1 + $0xef0] sm:$0xff]
    %v564 = vld [vmem:[%s1 + $0xef8] sm:$0xff]
    %v565 = vld [vmem:[%s1 + $0xf00] sm:$0xff]
    %v566 = vld [vmem:[%s1 + $0xf08] sm:$0xff]
    %v567 = vld [vmem:[%s1 + $0xf10] sm:$0xff]
    %v568 = vld [vmem:[%s1 + $0xf18] sm:$0xff]
    %v569 = vld [vmem:[%s1 + $0xf20] sm:$0xff]
    %v570 = vld [vmem:[%s1 + $0xf28] sm:$0xff]
    %v571 = vld [vmem:[%s1 + $0xf30] sm:$0xff]
    %v572 = vld [vmem:[%s1 + $0xf38] sm:$0xff]
    %v573 = vld [vmem:[%s1 + $0xf40] sm:$0xff]
    %v574 = vld [vmem:[%s1 + $0xf48] sm:$0xff]
    %v575 = vld [vmem:[%s1 + $0xf50] sm:$0xff]
    %v576 = vld [vmem:[%s1 + $0xf58] sm:$0xff]
    %v577 = vld [vmem:[%s1 + $0xf60] sm:$0xff]
    %v578 = vld [vmem:[%s1 + $0xf68] sm:$0xff]
    %v579 = vld [vmem:[%s1 + $0xf70] sm:$0xff]
    %v580 = vld [vmem:[%s1 + $0xf78] sm:$0xff]
    %v581 = vld [vmem:[%s1 + $0xf80] sm:$0xff]
    %v582 = vld [vmem:[%s1 + $0xf88] sm:$0xff]
    %v583 = vld [vmem:[%s1 + $0xf90] sm:$0xff]
    %v584 = vld [vmem:[%s1 + $0xf98] sm:$0xff]
    %v585 = vld [vmem:[%s1 + $0xfa0] sm:$0xff]
    %v586 = vld [vmem:[%s1 + $0xfa8] sm:$0xff]
    %v587 = vld [vmem:[%s1 + $0xfb0] sm:$0xff]
    %v588 = vld [vmem:[%s1 + $0xfb8] sm:$0xff]
    %v589 = vld [vmem:[%s1 + $0xfc0] sm:$0xff]
    %v590 = vld [vmem:[%s1 + $0xfc8] sm:$0xff]
    %v591 = vld [vmem:[%s1 + $0xfd0] sm:$0xff]
    %v592 = vld [vmem:[%s1 + $0xfd8] sm:$0xff]
    %v593 = vld [vmem:[%s1 + $0xfe0] sm:$0xff]
    %v594 = vld [vmem:[%s1 + $0xfe8] sm:$0xff]
    %v595 = vld [vmem:[%s1 + $0xff0] sm:$0xff]
    %v596 = vld [vmem:[%s1 + $0xff8] sm:$0xff]
    %v597 = vld [vmem:[%s2] sm:$0x1]
    %v599 = vperm.slane %v597, 0
    %601 = vmatpush.msra.mxu0 %v100
    %602 = vmatpush.msra.mxu0 %v99
    %603 = vmatpush.msra.mxu0 %v98
    %604 = vmatpush.msra.mxu0 %v97
    %605 = vmatpush.msra.mxu0 %v96
    %606 = vmatpush.msra.mxu0 %v95
    %607 = vmatpush.msra.mxu0 %v94
    %608 = vmatpush.msra.mxu0 %v93
    %609 = vmatpush.msra.mxu0 %v92
    %610 = vmatpush.msra.mxu0 %v91
    %611 = vmatpush.msra.mxu0 %v90
    %612 = vmatpush.msra.mxu0 %v89
    %613 = vmatpush.msra.mxu0 %v88
    %614 = vmatpush.msra.mxu0 %v87
    %615 = vmatpush.msra.mxu0 %v86
    %616 = vmatpush.msra.mxu0 %v85
    %617 = vmatmul.f32.gmra.mxu0 %v21
    %v618 = vpop.f32.mrf.mxu0
    %v619 = vadd.f32 %v599, %v618
    %620 = vmatmul.f32.gmra.mxu0 %v53
    %v621 = vpop.f32.mrf.mxu0
    %v622 = vadd.f32 %v599, %v621
    %623 = vdwg.mxu0
    %624 = vmatpush.msra.mxu0 %v116
    %625 = vmatpush.msra.mxu0 %v115
    %626 = vmatpush.msra.mxu0 %v114
    %627 = vmatpush.msra.mxu0 %v113
    %628 = vmatpush.msra.mxu0 %v112
    %629 = vmatpush.msra.mxu0 %v111
    %630 = vmatpush.msra.mxu0 %v110
    %631 = vmatpush.msra.mxu0 %v109
    %632 = vmatpush.msra.mxu0 %v108
    %633 = vmatpush.msra.mxu0 %v107
    %634 = vmatpush.msra.mxu0 %v106
    %635 = vmatpush.msra.mxu0 %v105
    %636 = vmatpush.msra.mxu0 %v104
    %637 = vmatpush.msra.mxu0 %v103
    %638 = vmatpush.msra.mxu0 %v102
    %639 = vmatpush.msra.mxu0 %v101
    %640 = vmatmul.f32.gmra.mxu0 %v22
    %v641 = vpop.f32.mrf.mxu0
    %v642 = vadd.f32 %v619, %v641
    %643 = vmatmul.f32.gmra.mxu0 %v54
    %v644 = vpop.f32.mrf.mxu0
    %v645 = vadd.f32 %v622, %v644
    %646 = vdwg.mxu0
    %647 = vmatpush.msra.mxu0 %v132
    %648 = vmatpush.msra.mxu0 %v131
    %649 = vmatpush.msra.mxu0 %v130
    %650 = vmatpush.msra.mxu0 %v129
    %651 = vmatpush.msra.mxu0 %v128
    %652 = vmatpush.msra.mxu0 %v127
    %653 = vmatpush.msra.mxu0 %v126
    %654 = vmatpush.msra.mxu0 %v125
    %655 = vmatpush.msra.mxu0 %v124
    %656 = vmatpush.msra.mxu0 %v123
    %657 = vmatpush.msra.mxu0 %v122
    %658 = vmatpush.msra.mxu0 %v121
    %659 = vmatpush.msra.mxu0 %v120
    %660 = vmatpush.msra.mxu0 %v119
    %661 = vmatpush.msra.mxu0 %v118
    %662 = vmatpush.msra.mxu0 %v117
    %663 = vmatmul.f32.gmra.mxu0 %v23
    %v664 = vpop.f32.mrf.mxu0
    %v665 = vadd.f32 %v642, %v664
    %666 = vmatmul.f32.gmra.mxu0 %v55
    %v667 = vpop.f32.mrf.mxu0
    %v668 = vadd.f32 %v645, %v667
    %669 = vdwg.mxu0
    %670 = vmatpush.msra.mxu0 %v148
    %671 = vmatpush.msra.mxu0 %v147
    %672 = vmatpush.msra.mxu0 %v146
    %673 = vmatpush.msra.mxu0 %v145
    %674 = vmatpush.msra.mxu0 %v144
    %675 = vmatpush.msra.mxu0 %v143
    %676 = vmatpush.msra.mxu0 %v142
    %677 = vmatpush.msra.mxu0 %v141
    %678 = vmatpush.msra.mxu0 %v140
    %679 = vmatpush.msra.mxu0 %v139
    %680 = vmatpush.msra.mxu0 %v138
    %681 = vmatpush.msra.mxu0 %v137
    %682 = vmatpush.msra.mxu0 %v136
    %683 = vmatpush.msra.mxu0 %v135
    %684 = vmatpush.msra.mxu0 %v134
    %685 = vmatpush.msra.mxu0 %v133
    %686 = vmatmul.f32.gmra.mxu0 %v24
    %v687 = vpop.f32.mrf.mxu0
    %v688 = vadd.f32 %v665, %v687
    %689 = vmatmul.f32.gmra.mxu0 %v56
    %v690 = vpop.f32.mrf.mxu0
    %v691 = vadd.f32 %v668, %v690
    %692 = vdwg.mxu0
    %693 = vmatpush.msra.mxu0 %v164
    %694 = vmatpush.msra.mxu0 %v163
    %695 = vmatpush.msra.mxu0 %v162
    %696 = vmatpush.msra.mxu0 %v161
    %697 = vmatpush.msra.mxu0 %v160
    %698 = vmatpush.msra.mxu0 %v159
    %699 = vmatpush.msra.mxu0 %v158
    %700 = vmatpush.msra.mxu0 %v157
    %701 = vmatpush.msra.mxu0 %v156
    %702 = vmatpush.msra.mxu0 %v155
    %703 = vmatpush.msra.mxu0 %v154
    %704 = vmatpush.msra.mxu0 %v153
    %705 = vmatpush.msra.mxu0 %v152
    %706 = vmatpush.msra.mxu0 %v151
    %707 = vmatpush.msra.mxu0 %v150
    %708 = vmatpush.msra.mxu0 %v149
    %709 = vmatmul.f32.gmra.mxu0 %v25
    %v710 = vpop.f32.mrf.mxu0
    %v711 = vadd.f32 %v688, %v710
    %712 = vmatmul.f32.gmra.mxu0 %v57
    %v713 = vpop.f32.mrf.mxu0
    %v714 = vadd.f32 %v691, %v713
    %715 = vdwg.mxu0
    %716 = vmatpush.msra.mxu0 %v180
    %717 = vmatpush.msra.mxu0 %v179
    %718 = vmatpush.msra.mxu0 %v178
    %719 = vmatpush.msra.mxu0 %v177
    %720 = vmatpush.msra.mxu0 %v176
    %721 = vmatpush.msra.mxu0 %v175
    %722 = vmatpush.msra.mxu0 %v174
    %723 = vmatpush.msra.mxu0 %v173
    %724 = vmatpush.msra.mxu0 %v172
    %725 = vmatpush.msra.mxu0 %v171
    %726 = vmatpush.msra.mxu0 %v170
    %727 = vmatpush.msra.mxu0 %v169
    %728 = vmatpush.msra.mxu0 %v168
    %729 = vmatpush.msra.mxu0 %v167
    %730 = vmatpush.msra.mxu0 %v166
    %731 = vmatpush.msra.mxu0 %v165
    %732 = vmatmul.f32.gmra.mxu0 %v26
    %v733 = vpop.f32.mrf.mxu0
    %v734 = vadd.f32 %v711, %v733
    %735 = vmatmul.f32.gmra.mxu0 %v58
    %v736 = vpop.f32.mrf.mxu0
    %v737 = vadd.f32 %v714, %v736
    %738 = vdwg.mxu0
    %739 = vmatpush.msra.mxu0 %v196
    %740 = vmatpush.msra.mxu0 %v195
    %741 = vmatpush.msra.mxu0 %v194
    %742 = vmatpush.msra.mxu0 %v193
    %743 = vmatpush.msra.mxu0 %v192
    %744 = vmatpush.msra.mxu0 %v191
    %745 = vmatpush.msra.mxu0 %v190
    %746 = vmatpush.msra.mxu0 %v189
    %747 = vmatpush.msra.mxu0 %v188
    %748 = vmatpush.msra.mxu0 %v187
    %749 = vmatpush.msra.mxu0 %v186
    %750 = vmatpush.msra.mxu0 %v185
    %751 = vmatpush.msra.mxu0 %v184
    %752 = vmatpush.msra.mxu0 %v183
    %753 = vmatpush.msra.mxu0 %v182
    %754 = vmatpush.msra.mxu0 %v181
    %755 = vmatmul.f32.gmra.mxu0 %v27
    %v756 = vpop.f32.mrf.mxu0
    %v757 = vadd.f32 %v734, %v756
    %758 = vmatmul.f32.gmra.mxu0 %v59
    %v759 = vpop.f32.mrf.mxu0
    %v760 = vadd.f32 %v737, %v759
    %761 = vdwg.mxu0
    %762 = vmatpush.msra.mxu0 %v212
    %763 = vmatpush.msra.mxu0 %v211
    %764 = vmatpush.msra.mxu0 %v210
    %765 = vmatpush.msra.mxu0 %v209
    %766 = vmatpush.msra.mxu0 %v208
    %767 = vmatpush.msra.mxu0 %v207
    %768 = vmatpush.msra.mxu0 %v206
    %769 = vmatpush.msra.mxu0 %v205
    %770 = vmatpush.msra.mxu0 %v204
    %771 = vmatpush.msra.mxu0 %v203
    %772 = vmatpush.msra.mxu0 %v202
    %773 = vmatpush.msra.mxu0 %v201
    %774 = vmatpush.msra.mxu0 %v200
    %775 = vmatpush.msra.mxu0 %v199
    %776 = vmatpush.msra.mxu0 %v198
    %777 = vmatpush.msra.mxu0 %v197
    %778 = vmatmul.f32.gmra.mxu0 %v28
    %v779 = vpop.f32.mrf.mxu0
    %v780 = vadd.f32 %v757, %v779
    %781 = vmatmul.f32.gmra.mxu0 %v60
    %v782 = vpop.f32.mrf.mxu0
    %v783 = vadd.f32 %v760, %v782
    %784 = vdwg.mxu0
    %785 = vmatpush.msra.mxu0 %v228
    %786 = vmatpush.msra.mxu0 %v227
    %787 = vmatpush.msra.mxu0 %v226
    %788 = vmatpush.msra.mxu0 %v225
    %789 = vmatpush.msra.mxu0 %v224
    %790 = vmatpush.msra.mxu0 %v223
    %791 = vmatpush.msra.mxu0 %v222
    %792 = vmatpush.msra.mxu0 %v221
    %793 = vmatpush.msra.mxu0 %v220
    %794 = vmatpush.msra.mxu0 %v219
    %795 = vmatpush.msra.mxu0 %v218
    %796 = vmatpush.msra.mxu0 %v217
    %797 = vmatpush.msra.mxu0 %v216
    %798 = vmatpush.msra.mxu0 %v215
    %799 = vmatpush.msra.mxu0 %v214
    %800 = vmatpush.msra.mxu0 %v213
    %801 = vmatmul.f32.gmra.mxu0 %v29
    %v802 = vpop.f32.mrf.mxu0
    %v803 = vadd.f32 %v780, %v802
    %804 = vmatmul.f32.gmra.mxu0 %v61
    %v805 = vpop.f32.mrf.mxu0
    %v806 = vadd.f32 %v783, %v805
    %807 = vdwg.mxu0
    %808 = vmatpush.msra.mxu0 %v244
    %809 = vmatpush.msra.mxu0 %v243
    %810 = vmatpush.msra.mxu0 %v242
    %811 = vmatpush.msra.mxu0 %v241
    %812 = vmatpush.msra.mxu0 %v240
    %813 = vmatpush.msra.mxu0 %v239
    %814 = vmatpush.msra.mxu0 %v238
    %815 = vmatpush.msra.mxu0 %v237
    %816 = vmatpush.msra.mxu0 %v236
    %817 = vmatpush.msra.mxu0 %v235
    %818 = vmatpush.msra.mxu0 %v234
    %819 = vmatpush.msra.mxu0 %v233
    %820 = vmatpush.msra.mxu0 %v232
    %821 = vmatpush.msra.mxu0 %v231
    %822 = vmatpush.msra.mxu0 %v230
    %823 = vmatpush.msra.mxu0 %v229
    %824 = vmatmul.f32.gmra.mxu0 %v30
    %v825 = vpop.f32.mrf.mxu0
    %v826 = vadd.f32 %v803, %v825
    %827 = vmatmul.f32.gmra.mxu0 %v62
    %v828 = vpop.f32.mrf.mxu0
    %v829 = vadd.f32 %v806, %v828
    %830 = vdwg.mxu0
    %831 = vmatpush.msra.mxu0 %v260
    %832 = vmatpush.msra.mxu0 %v259
    %833 = vmatpush.msra.mxu0 %v258
    %834 = vmatpush.msra.mxu0 %v257
    %835 = vmatpush.msra.mxu0 %v256
    %836 = vmatpush.msra.mxu0 %v255
    %837 = vmatpush.msra.mxu0 %v254
    %838 = vmatpush.msra.mxu0 %v253
    %839 = vmatpush.msra.mxu0 %v252
    %840 = vmatpush.msra.mxu0 %v251
    %841 = vmatpush.msra.mxu0 %v250
    %842 = vmatpush.msra.mxu0 %v249
    %843 = vmatpush.msra.mxu0 %v248
    %844 = vmatpush.msra.mxu0 %v247
    %845 = vmatpush.msra.mxu0 %v246
    %846 = vmatpush.msra.mxu0 %v245
    %847 = vmatmul.f32.gmra.mxu0 %v31
    %v848 = vpop.f32.mrf.mxu0
    %v849 = vadd.f32 %v826, %v848
    %850 = vmatmul.f32.gmra.mxu0 %v63
    %v851 = vpop.f32.mrf.mxu0
    %v852 = vadd.f32 %v829, %v851
    %853 = vdwg.mxu0
    %854 = vmatpush.msra.mxu0 %v276
    %855 = vmatpush.msra.mxu0 %v275
    %856 = vmatpush.msra.mxu0 %v274
    %857 = vmatpush.msra.mxu0 %v273
    %858 = vmatpush.msra.mxu0 %v272
    %859 = vmatpush.msra.mxu0 %v271
    %860 = vmatpush.msra.mxu0 %v270
    %861 = vmatpush.msra.mxu0 %v269
    %862 = vmatpush.msra.mxu0 %v268
    %863 = vmatpush.msra.mxu0 %v267
    %864 = vmatpush.msra.mxu0 %v266
    %865 = vmatpush.msra.mxu0 %v265
    %866 = vmatpush.msra.mxu0 %v264
    %867 = vmatpush.msra.mxu0 %v263
    %868 = vmatpush.msra.mxu0 %v262
    %869 = vmatpush.msra.mxu0 %v261
    %870 = vmatmul.f32.gmra.mxu0 %v32
    %v871 = vpop.f32.mrf.mxu0
    %v872 = vadd.f32 %v849, %v871
    %873 = vmatmul.f32.gmra.mxu0 %v64
    %v874 = vpop.f32.mrf.mxu0
    %v875 = vadd.f32 %v852, %v874
    %876 = vdwg.mxu0
    %877 = vmatpush.msra.mxu0 %v292
    %878 = vmatpush.msra.mxu0 %v291
    %879 = vmatpush.msra.mxu0 %v290
    %880 = vmatpush.msra.mxu0 %v289
    %881 = vmatpush.msra.mxu0 %v288
    %882 = vmatpush.msra.mxu0 %v287
    %883 = vmatpush.msra.mxu0 %v286
    %884 = vmatpush.msra.mxu0 %v285
    %885 = vmatpush.msra.mxu0 %v284
    %886 = vmatpush.msra.mxu0 %v283
    %887 = vmatpush.msra.mxu0 %v282
    %888 = vmatpush.msra.mxu0 %v281
    %889 = vmatpush.msra.mxu0 %v280
    %890 = vmatpush.msra.mxu0 %v279
    %891 = vmatpush.msra.mxu0 %v278
    %892 = vmatpush.msra.mxu0 %v277
    %893 = vmatmul.f32.gmra.mxu0 %v33
    %v894 = vpop.f32.mrf.mxu0
    %v895 = vadd.f32 %v872, %v894
    %896 = vmatmul.f32.gmra.mxu0 %v65
    %v897 = vpop.f32.mrf.mxu0
    %v898 = vadd.f32 %v875, %v897
    %899 = vdwg.mxu0
    %900 = vmatpush.msra.mxu0 %v308
    %901 = vmatpush.msra.mxu0 %v307
    %902 = vmatpush.msra.mxu0 %v306
    %903 = vmatpush.msra.mxu0 %v305
    %904 = vmatpush.msra.mxu0 %v304
    %905 = vmatpush.msra.mxu0 %v303
    %906 = vmatpush.msra.mxu0 %v302
    %907 = vmatpush.msra.mxu0 %v301
    %908 = vmatpush.msra.mxu0 %v300
    %909 = vmatpush.msra.mxu0 %v299
    %910 = vmatpush.msra.mxu0 %v298
    %911 = vmatpush.msra.mxu0 %v297
    %912 = vmatpush.msra.mxu0 %v296
    %913 = vmatpush.msra.mxu0 %v295
    %914 = vmatpush.msra.mxu0 %v294
    %915 = vmatpush.msra.mxu0 %v293
    %916 = vmatmul.f32.gmra.mxu0 %v34
    %v917 = vpop.f32.mrf.mxu0
    %v918 = vadd.f32 %v895, %v917
    %919 = vmatmul.f32.gmra.mxu0 %v66
    %v920 = vpop.f32.mrf.mxu0
    %v921 = vadd.f32 %v898, %v920
    %922 = vdwg.mxu0
    %923 = vmatpush.msra.mxu0 %v324
    %924 = vmatpush.msra.mxu0 %v323
    %925 = vmatpush.msra.mxu0 %v322
    %926 = vmatpush.msra.mxu0 %v321
    %927 = vmatpush.msra.mxu0 %v320
    %928 = vmatpush.msra.mxu0 %v319
    %929 = vmatpush.msra.mxu0 %v318
    %930 = vmatpush.msra.mxu0 %v317
    %931 = vmatpush.msra.mxu0 %v316
    %932 = vmatpush.msra.mxu0 %v315
    %933 = vmatpush.msra.mxu0 %v314
    %934 = vmatpush.msra.mxu0 %v313
    %935 = vmatpush.msra.mxu0 %v312
    %936 = vmatpush.msra.mxu0 %v311
    %937 = vmatpush.msra.mxu0 %v310
    %938 = vmatpush.msra.mxu0 %v309
    %939 = vmatmul.f32.gmra.mxu0 %v35
    %v940 = vpop.f32.mrf.mxu0
    %v941 = vadd.f32 %v918, %v940
    %942 = vmatmul.f32.gmra.mxu0 %v67
    %v943 = vpop.f32.mrf.mxu0
    %v944 = vadd.f32 %v921, %v943
    %945 = vdwg.mxu0
    %946 = vmatpush.msra.mxu0 %v340
    %947 = vmatpush.msra.mxu0 %v339
    %948 = vmatpush.msra.mxu0 %v338
    %949 = vmatpush.msra.mxu0 %v337
    %950 = vmatpush.msra.mxu0 %v336
    %951 = vmatpush.msra.mxu0 %v335
    %952 = vmatpush.msra.mxu0 %v334
    %953 = vmatpush.msra.mxu0 %v333
    %954 = vmatpush.msra.mxu0 %v332
    %955 = vmatpush.msra.mxu0 %v331
    %956 = vmatpush.msra.mxu0 %v330
    %957 = vmatpush.msra.mxu0 %v329
    %958 = vmatpush.msra.mxu0 %v328
    %959 = vmatpush.msra.mxu0 %v327
    %960 = vmatpush.msra.mxu0 %v326
    %961 = vmatpush.msra.mxu0 %v325
    %962 = vmatmul.f32.gmra.mxu0 %v36
    %v963 = vpop.f32.mrf.mxu0
    %v964 = vadd.f32 %v941, %v963
    %965 = vmatmul.f32.gmra.mxu0 %v68
    %v966 = vpop.f32.mrf.mxu0
    %v967 = vadd.f32 %v944, %v966
    %968 = vdwg.mxu0
    %969 = vmatpush.msra.mxu0 %v356
    %970 = vmatpush.msra.mxu0 %v355
    %971 = vmatpush.msra.mxu0 %v354
    %972 = vmatpush.msra.mxu0 %v353
    %973 = vmatpush.msra.mxu0 %v352
    %974 = vmatpush.msra.mxu0 %v351
    %975 = vmatpush.msra.mxu0 %v350
    %976 = vmatpush.msra.mxu0 %v349
    %977 = vmatpush.msra.mxu0 %v348
    %978 = vmatpush.msra.mxu0 %v347
    %979 = vmatpush.msra.mxu0 %v346
    %980 = vmatpush.msra.mxu0 %v345
    %981 = vmatpush.msra.mxu0 %v344
    %982 = vmatpush.msra.mxu0 %v343
    %983 = vmatpush.msra.mxu0 %v342
    %984 = vmatpush.msra.mxu0 %v341
    %985 = vmatmul.f32.gmra.mxu0 %v37
    %v986 = vpop.f32.mrf.mxu0
    %v987 = vadd.f32 %v964, %v986
    %988 = vmatmul.f32.gmra.mxu0 %v69
    %v989 = vpop.f32.mrf.mxu0
    %v990 = vadd.f32 %v967, %v989
    %991 = vdwg.mxu0
    %992 = vmatpush.msra.mxu0 %v372
    %993 = vmatpush.msra.mxu0 %v371
    %994 = vmatpush.msra.mxu0 %v370
    %995 = vmatpush.msra.mxu0 %v369
    %996 = vmatpush.msra.mxu0 %v368
    %997 = vmatpush.msra.mxu0 %v367
    %998 = vmatpush.msra.mxu0 %v366
    %999 = vmatpush.msra.mxu0 %v365
    %1000 = vmatpush.msra.mxu0 %v364
    %1001 = vmatpush.msra.mxu0 %v363
    %1002 = vmatpush.msra.mxu0 %v362
    %1003 = vmatpush.msra.mxu0 %v361
    %1004 = vmatpush.msra.mxu0 %v360
    %1005 = vmatpush.msra.mxu0 %v359
    %1006 = vmatpush.msra.mxu0 %v358
    %1007 = vmatpush.msra.mxu0 %v357
    %1008 = vmatmul.f32.gmra.mxu0 %v38
    %v1009 = vpop.f32.mrf.mxu0
    %v1010 = vadd.f32 %v987, %v1009
    %1011 = vmatmul.f32.gmra.mxu0 %v70
    %v1012 = vpop.f32.mrf.mxu0
    %v1013 = vadd.f32 %v990, %v1012
    %1014 = vdwg.mxu0
    %1015 = vmatpush.msra.mxu0 %v388
    %1016 = vmatpush.msra.mxu0 %v387
    %1017 = vmatpush.msra.mxu0 %v386
    %1018 = vmatpush.msra.mxu0 %v385
    %1019 = vmatpush.msra.mxu0 %v384
    %1020 = vmatpush.msra.mxu0 %v383
    %1021 = vmatpush.msra.mxu0 %v382
    %1022 = vmatpush.msra.mxu0 %v381
    %1023 = vmatpush.msra.mxu0 %v380
    %1024 = vmatpush.msra.mxu0 %v379
    %1025 = vmatpush.msra.mxu0 %v378
    %1026 = vmatpush.msra.mxu0 %v377
    %1027 = vmatpush.msra.mxu0 %v376
    %1028 = vmatpush.msra.mxu0 %v375
    %1029 = vmatpush.msra.mxu0 %v374
    %1030 = vmatpush.msra.mxu0 %v373
    %1031 = vmatmul.f32.gmra.mxu0 %v39
    %v1032 = vpop.f32.mrf.mxu0
    %v1033 = vadd.f32 %v1010, %v1032
    %1034 = vmatmul.f32.gmra.mxu0 %v71
    %v1035 = vpop.f32.mrf.mxu0
    %v1036 = vadd.f32 %v1013, %v1035
    %1037 = vdwg.mxu0
    %1038 = vmatpush.msra.mxu0 %v404
    %1039 = vmatpush.msra.mxu0 %v403
    %1040 = vmatpush.msra.mxu0 %v402
    %1041 = vmatpush.msra.mxu0 %v401
    %1042 = vmatpush.msra.mxu0 %v400
    %1043 = vmatpush.msra.mxu0 %v399
    %1044 = vmatpush.msra.mxu0 %v398
    %1045 = vmatpush.msra.mxu0 %v397
    %1046 = vmatpush.msra.mxu0 %v396
    %1047 = vmatpush.msra.mxu0 %v395
    %1048 = vmatpush.msra.mxu0 %v394
    %1049 = vmatpush.msra.mxu0 %v393
    %1050 = vmatpush.msra.mxu0 %v392
    %1051 = vmatpush.msra.mxu0 %v391
    %1052 = vmatpush.msra.mxu0 %v390
    %1053 = vmatpush.msra.mxu0 %v389
    %1054 = vmatmul.f32.gmra.mxu0 %v40
    %v1055 = vpop.f32.mrf.mxu0
    %v1056 = vadd.f32 %v1033, %v1055
    %1057 = vmatmul.f32.gmra.mxu0 %v72
    %v1058 = vpop.f32.mrf.mxu0
    %v1059 = vadd.f32 %v1036, %v1058
    %1060 = vdwg.mxu0
    %1061 = vmatpush.msra.mxu0 %v420
    %1062 = vmatpush.msra.mxu0 %v419
    %1063 = vmatpush.msra.mxu0 %v418
    %1064 = vmatpush.msra.mxu0 %v417
    %1065 = vmatpush.msra.mxu0 %v416
    %1066 = vmatpush.msra.mxu0 %v415
    %1067 = vmatpush.msra.mxu0 %v414
    %1068 = vmatpush.msra.mxu0 %v413
    %1069 = vmatpush.msra.mxu0 %v412
    %1070 = vmatpush.msra.mxu0 %v411
    %1071 = vmatpush.msra.mxu0 %v410
    %1072 = vmatpush.msra.mxu0 %v409
    %1073 = vmatpush.msra.mxu0 %v408
    %1074 = vmatpush.msra.mxu0 %v407
    %1075 = vmatpush.msra.mxu0 %v406
    %1076 = vmatpush.msra.mxu0 %v405
    %1077 = vmatmul.f32.gmra.mxu0 %v41
    %v1078 = vpop.f32.mrf.mxu0
    %v1079 = vadd.f32 %v1056, %v1078
    %1080 = vmatmul.f32.gmra.mxu0 %v73
    %v1081 = vpop.f32.mrf.mxu0
    %v1082 = vadd.f32 %v1059, %v1081
    %1083 = vdwg.mxu0
    %1084 = vmatpush.msra.mxu0 %v436
    %1085 = vmatpush.msra.mxu0 %v435
    %1086 = vmatpush.msra.mxu0 %v434
    %1087 = vmatpush.msra.mxu0 %v433
    %1088 = vmatpush.msra.mxu0 %v432
    %1089 = vmatpush.msra.mxu0 %v431
    %1090 = vmatpush.msra.mxu0 %v430
    %1091 = vmatpush.msra.mxu0 %v429
    %1092 = vmatpush.msra.mxu0 %v428
    %1093 = vmatpush.msra.mxu0 %v427
    %1094 = vmatpush.msra.mxu0 %v426
    %1095 = vmatpush.msra.mxu0 %v425
    %1096 = vmatpush.msra.mxu0 %v424
    %1097 = vmatpush.msra.mxu0 %v423
    %1098 = vmatpush.msra.mxu0 %v422
    %1099 = vmatpush.msra.mxu0 %v421
    %1100 = vmatmul.f32.gmra.mxu0 %v42
    %v1101 = vpop.f32.mrf.mxu0
    %v1102 = vadd.f32 %v1079, %v1101
    %1103 = vmatmul.f32.gmra.mxu0 %v74
    %v1104 = vpop.f32.mrf.mxu0
    %v1105 = vadd.f32 %v1082, %v1104
    %1106 = vdwg.mxu0
    %1107 = vmatpush.msra.mxu0 %v452
    %1108 = vmatpush.msra.mxu0 %v451
    %1109 = vmatpush.msra.mxu0 %v450
    %1110 = vmatpush.msra.mxu0 %v449
    %1111 = vmatpush.msra.mxu0 %v448
    %1112 = vmatpush.msra.mxu0 %v447
    %1113 = vmatpush.msra.mxu0 %v446
    %1114 = vmatpush.msra.mxu0 %v445
    %1115 = vmatpush.msra.mxu0 %v444
    %1116 = vmatpush.msra.mxu0 %v443
    %1117 = vmatpush.msra.mxu0 %v442
    %1118 = vmatpush.msra.mxu0 %v441
    %1119 = vmatpush.msra.mxu0 %v440
    %1120 = vmatpush.msra.mxu0 %v439
    %1121 = vmatpush.msra.mxu0 %v438
    %1122 = vmatpush.msra.mxu0 %v437
    %1123 = vmatmul.f32.gmra.mxu0 %v43
    %v1124 = vpop.f32.mrf.mxu0
    %v1125 = vadd.f32 %v1102, %v1124
    %1126 = vmatmul.f32.gmra.mxu0 %v75
    %v1127 = vpop.f32.mrf.mxu0
    %v1128 = vadd.f32 %v1105, %v1127
    %1129 = vdwg.mxu0
    %1130 = vmatpush.msra.mxu0 %v468
    %1131 = vmatpush.msra.mxu0 %v467
    %1132 = vmatpush.msra.mxu0 %v466
    %1133 = vmatpush.msra.mxu0 %v465
    %1134 = vmatpush.msra.mxu0 %v464
    %1135 = vmatpush.msra.mxu0 %v463
    %1136 = vmatpush.msra.mxu0 %v462
    %1137 = vmatpush.msra.mxu0 %v461
    %1138 = vmatpush.msra.mxu0 %v460
    %1139 = vmatpush.msra.mxu0 %v459
    %1140 = vmatpush.msra.mxu0 %v458
    %1141 = vmatpush.msra.mxu0 %v457
    %1142 = vmatpush.msra.mxu0 %v456
    %1143 = vmatpush.msra.mxu0 %v455
    %1144 = vmatpush.msra.mxu0 %v454
    %1145 = vmatpush.msra.mxu0 %v453
    %1146 = vmatmul.f32.gmra.mxu0 %v44
    %v1147 = vpop.f32.mrf.mxu0
    %v1148 = vadd.f32 %v1125, %v1147
    %1149 = vmatmul.f32.gmra.mxu0 %v76
    %v1150 = vpop.f32.mrf.mxu0
    %v1151 = vadd.f32 %v1128, %v1150
    %1152 = vdwg.mxu0
    %1153 = vmatpush.msra.mxu0 %v484
    %1154 = vmatpush.msra.mxu0 %v483
    %1155 = vmatpush.msra.mxu0 %v482
    %1156 = vmatpush.msra.mxu0 %v481
    %1157 = vmatpush.msra.mxu0 %v480
    %1158 = vmatpush.msra.mxu0 %v479
    %1159 = vmatpush.msra.mxu0 %v478
    %1160 = vmatpush.msra.mxu0 %v477
    %1161 = vmatpush.msra.mxu0 %v476
    %1162 = vmatpush.msra.mxu0 %v475
    %1163 = vmatpush.msra.mxu0 %v474
    %1164 = vmatpush.msra.mxu0 %v473
    %1165 = vmatpush.msra.mxu0 %v472
    %1166 = vmatpush.msra.mxu0 %v471
    %1167 = vmatpush.msra.mxu0 %v470
    %1168 = vmatpush.msra.mxu0 %v469
    %1169 = vmatmul.f32.gmra.mxu0 %v45
    %v1170 = vpop.f32.mrf.mxu0
    %v1171 = vadd.f32 %v1148, %v1170
    %1172 = vmatmul.f32.gmra.mxu0 %v77
    %v1173 = vpop.f32.mrf.mxu0
    %v1174 = vadd.f32 %v1151, %v1173
    %1175 = vdwg.mxu0
    %1176 = vmatpush.msra.mxu0 %v500
    %1177 = vmatpush.msra.mxu0 %v499
    %1178 = vmatpush.msra.mxu0 %v498
    %1179 = vmatpush.msra.mxu0 %v497
    %1180 = vmatpush.msra.mxu0 %v496
    %1181 = vmatpush.msra.mxu0 %v495
    %1182 = vmatpush.msra.mxu0 %v494
    %1183 = vmatpush.msra.mxu0 %v493
    %1184 = vmatpush.msra.mxu0 %v492
    %1185 = vmatpush.msra.mxu0 %v491
    %1186 = vmatpush.msra.mxu0 %v490
    %1187 = vmatpush.msra.mxu0 %v489
    %1188 = vmatpush.msra.mxu0 %v488
    %1189 = vmatpush.msra.mxu0 %v487
    %1190 = vmatpush.msra.mxu0 %v486
    %1191 = vmatpush.msra.mxu0 %v485
    %1192 = vmatmul.f32.gmra.mxu0 %v46
    %v1193 = vpop.f32.mrf.mxu0
    %v1194 = vadd.f32 %v1171, %v1193
    %1195 = vmatmul.f32.gmra.mxu0 %v78
    %v1196 = vpop.f32.mrf.mxu0
    %v1197 = vadd.f32 %v1174, %v1196
    %1198 = vdwg.mxu0
    %1199 = vmatpush.msra.mxu0 %v516
    %1200 = vmatpush.msra.mxu0 %v515
    %1201 = vmatpush.msra.mxu0 %v514
    %1202 = vmatpush.msra.mxu0 %v513
    %1203 = vmatpush.msra.mxu0 %v512
    %1204 = vmatpush.msra.mxu0 %v511
    %1205 = vmatpush.msra.mxu0 %v510
    %1206 = vmatpush.msra.mxu0 %v509
    %1207 = vmatpush.msra.mxu0 %v508
    %1208 = vmatpush.msra.mxu0 %v507
    %1209 = vmatpush.msra.mxu0 %v506
    %1210 = vmatpush.msra.mxu0 %v505
    %1211 = vmatpush.msra.mxu0 %v504
    %1212 = vmatpush.msra.mxu0 %v503
    %1213 = vmatpush.msra.mxu0 %v502
    %1214 = vmatpush.msra.mxu0 %v501
    %1215 = vmatmul.f32.gmra.mxu0 %v47
    %v1216 = vpop.f32.mrf.mxu0
    %v1217 = vadd.f32 %v1194, %v1216
    %1218 = vmatmul.f32.gmra.mxu0 %v79
    %v1219 = vpop.f32.mrf.mxu0
    %v1220 = vadd.f32 %v1197, %v1219
    %1221 = vdwg.mxu0
    %1222 = vmatpush.msra.mxu0 %v532
    %1223 = vmatpush.msra.mxu0 %v531
    %1224 = vmatpush.msra.mxu0 %v530
    %1225 = vmatpush.msra.mxu0 %v529
    %1226 = vmatpush.msra.mxu0 %v528
    %1227 = vmatpush.msra.mxu0 %v527
    %1228 = vmatpush.msra.mxu0 %v526
    %1229 = vmatpush.msra.mxu0 %v525
    %1230 = vmatpush.msra.mxu0 %v524
    %1231 = vmatpush.msra.mxu0 %v523
    %1232 = vmatpush.msra.mxu0 %v522
    %1233 = vmatpush.msra.mxu0 %v521
    %1234 = vmatpush.msra.mxu0 %v520
    %1235 = vmatpush.msra.mxu0 %v519
    %1236 = vmatpush.msra.mxu0 %v518
    %1237 = vmatpush.msra.mxu0 %v517
    %1238 = vmatmul.f32.gmra.mxu0 %v48
    %v1239 = vpop.f32.mrf.mxu0
    %v1240 = vadd.f32 %v1217, %v1239
    %1241 = vmatmul.f32.gmra.mxu0 %v80
    %v1242 = vpop.f32.mrf.mxu0
    %v1243 = vadd.f32 %v1220, %v1242
    %1244 = vdwg.mxu0
    %1245 = vmatpush.msra.mxu0 %v548
    %1246 = vmatpush.msra.mxu0 %v547
    %1247 = vmatpush.msra.mxu0 %v546
    %1248 = vmatpush.msra.mxu0 %v545
    %1249 = vmatpush.msra.mxu0 %v544
    %1250 = vmatpush.msra.mxu0 %v543
    %1251 = vmatpush.msra.mxu0 %v542
    %1252 = vmatpush.msra.mxu0 %v541
    %1253 = vmatpush.msra.mxu0 %v540
    %1254 = vmatpush.msra.mxu0 %v539
    %1255 = vmatpush.msra.mxu0 %v538
    %1256 = vmatpush.msra.mxu0 %v537
    %1257 = vmatpush.msra.mxu0 %v536
    %1258 = vmatpush.msra.mxu0 %v535
    %1259 = vmatpush.msra.mxu0 %v534
    %1260 = vmatpush.msra.mxu0 %v533
    %1261 = vmatmul.f32.gmra.mxu0 %v49
    %v1262 = vpop.f32.mrf.mxu0
    %v1263 = vadd.f32 %v1240, %v1262
    %1264 = vmatmul.f32.gmra.mxu0 %v81
    %v1265 = vpop.f32.mrf.mxu0
    %v1266 = vadd.f32 %v1243, %v1265
    %1267 = vdwg.mxu0
    %1268 = vmatpush.msra.mxu0 %v564
    %1269 = vmatpush.msra.mxu0 %v563
    %1270 = vmatpush.msra.mxu0 %v562
    %1271 = vmatpush.msra.mxu0 %v561
    %1272 = vmatpush.msra.mxu0 %v560
    %1273 = vmatpush.msra.mxu0 %v559
    %1274 = vmatpush.msra.mxu0 %v558
    %1275 = vmatpush.msra.mxu0 %v557
    %1276 = vmatpush.msra.mxu0 %v556
    %1277 = vmatpush.msra.mxu0 %v555
    %1278 = vmatpush.msra.mxu0 %v554
    %1279 = vmatpush.msra.mxu0 %v553
    %1280 = vmatpush.msra.mxu0 %v552
    %1281 = vmatpush.msra.mxu0 %v551
    %1282 = vmatpush.msra.mxu0 %v550
    %1283 = vmatpush.msra.mxu0 %v549
    %1284 = vmatmul.f32.gmra.mxu0 %v50
    %v1285 = vpop.f32.mrf.mxu0
    %v1286 = vadd.f32 %v1263, %v1285
    %1287 = vmatmul.f32.gmra.mxu0 %v82
    %v1288 = vpop.f32.mrf.mxu0
    %v1289 = vadd.f32 %v1266, %v1288
    %1290 = vdwg.mxu0
    %1291 = vmatpush.msra.mxu0 %v580
    %1292 = vmatpush.msra.mxu0 %v579
    %1293 = vmatpush.msra.mxu0 %v578
    %1294 = vmatpush.msra.mxu0 %v577
    %1295 = vmatpush.msra.mxu0 %v576
    %1296 = vmatpush.msra.mxu0 %v575
    %1297 = vmatpush.msra.mxu0 %v574
    %1298 = vmatpush.msra.mxu0 %v573
    %1299 = vmatpush.msra.mxu0 %v572
    %1300 = vmatpush.msra.mxu0 %v571
    %1301 = vmatpush.msra.mxu0 %v570
    %1302 = vmatpush.msra.mxu0 %v569
    %1303 = vmatpush.msra.mxu0 %v568
    %1304 = vmatpush.msra.mxu0 %v567
    %1305 = vmatpush.msra.mxu0 %v566
    %1306 = vmatpush.msra.mxu0 %v565
    %1307 = vmatmul.f32.gmra.mxu0 %v51
    %v1308 = vpop.f32.mrf.mxu0
    %v1309 = vadd.f32 %v1286, %v1308
    %1310 = vmatmul.f32.gmra.mxu0 %v83
    %v1311 = vpop.f32.mrf.mxu0
    %v1312 = vadd.f32 %v1289, %v1311
    %1313 = vdwg.mxu0
    %1314 = vmatpush.msra.mxu0 %v596
    %1315 = vmatpush.msra.mxu0 %v595
    %1316 = vmatpush.msra.mxu0 %v594
    %1317 = vmatpush.msra.mxu0 %v593
    %1318 = vmatpush.msra.mxu0 %v592
    %1319 = vmatpush.msra.mxu0 %v591
    %1320 = vmatpush.msra.mxu0 %v590
    %1321 = vmatpush.msra.mxu0 %v589
    %1322 = vmatpush.msra.mxu0 %v588
    %1323 = vmatpush.msra.mxu0 %v587
    %1324 = vmatpush.msra.mxu0 %v586
    %1325 = vmatpush.msra.mxu0 %v585
    %1326 = vmatpush.msra.mxu0 %v584
    %1327 = vmatpush.msra.mxu0 %v583
    %1328 = vmatpush.msra.mxu0 %v582
    %1329 = vmatpush.msra.mxu0 %v581
    %1330 = vmatmul.f32.gmra.mxu0 %v52
    %v1331 = vpop.f32.mrf.mxu0
    %v1332 = vadd.f32 %v1309, %v1331
    %1333 = vmatmul.f32.gmra.mxu0 %v84
    %v1334 = vpop.f32.mrf.mxu0
    %v1335 = vadd.f32 %v1312, %v1334
    %1336 = vdwg.mxu0
    %v1337 = vmax.f32 %v1332, 0.0
    %v1338 = vmax.f32 %v1335, 0.0
    %v1339 = vld [vmem:[%s3] sm:$0xff]
    %v1340 = vld [vmem:[%s3 + $0x8] sm:$0xff]
    %v1341 = vld [vmem:[%s3 + $0x10] sm:$0xff]
    %v1342 = vld [vmem:[%s3 + $0x18] sm:$0x3f]
    %v1343 = vld [vmem:[%s4] sm:$0x1]
    %v1345 = vperm.slane %v1343, 0
    %vm1347 = vcmask 244736
    %v1349 = vsel %vm1347, %v1337, 0
    %v1352 = vsel %vm1347, %v1338, 0
    %vm1354 = vcmask 1045504
    %v1356 = vsel %vm1354, %v1342, 0
    %1358 = vmatpush.msra.mxu0 0.0
    %1359 = vmatpush.msra.mxu0 0.0
    %1360 = vmatpush.msra.mxu0 0.0
    %1361 = vmatpush.msra.mxu0 0.0
    %1362 = vmatpush.msra.mxu0 0.0
    %1363 = vmatpush.msra.mxu0 0.0
    %1364 = vmatpush.msra.mxu0 0.0
    %1365 = vmatpush.msra.mxu0 0.0
    %1366 = vmatpush.msra.mxu0 0.0
    %1367 = vmatpush.msra.mxu0 0.0
    %1368 = vmatpush.msra.mxu0 0.0
    %1369 = vmatpush.msra.mxu0 0.0
    %1370 = vmatpush.msra.mxu0 %v1356
    %1371 = vmatpush.msra.mxu0 %v1341
    %1372 = vmatpush.msra.mxu0 %v1340
    %1373 = vmatpush.msra.mxu0 %v1339
    %1374 = vmatmul.f32.gmra.mxu0 %v1349
    %v1375 = vpop.f32.mrf.mxu0
    %v1376 = vadd.f32 %v1345, %v1375
    %1377 = vmatmul.f32.gmra.mxu0 %v1352
    %v1378 = vpop.f32.mrf.mxu0
    %v1379 = vadd.f32 %v1345, %v1378
    %1380 = vdwg.mxu0
    %1381 = vst [vmem:[#allocation2] sm:$0xff] %v1376
    %1382 = vst [vmem:[#allocation2 + $0x8] sm:$0xff] %v1379
    // Predicated region
    $region22: #{tpu_custom_call.1} parent=1 // pred_check
      _
    $region23: #{tpu_custom_call.1} parent=1 // pred_check_branch
      %1384 = sbr.rel (0) target = $region25
    $region24: #{tpu_custom_call.1} parent=1 // pred_region
      %1386 = vsyncadd [#allocation3], 0
      %s1387 = sshll.u32 [#allocation2], 4
      %s1388 = int_to_ptr.vmem [resolvable:$true] %s1387
      %s1389 = sshll.u32 %s5, 4
      %s1390 = int_to_ptr.hbm [resolvable:$true] %s1389
      %1395 = dma.vmem_to_hbm [thread:$0]  %s1388, 256, %s1390, [#allocation3], 128, 128, 8
    $region25: #{tpu_custom_call.1} parent=1 // pred_fallthru
      _
    // Predicated region
    $region26: #{tpu_custom_call.1} parent=1 // pred_check
      _
    $region27: #{tpu_custom_call.1} parent=1 // pred_check_branch
      %1397 = sbr.rel (0) target = $region29
    $region28: #{tpu_custom_call.1} parent=1 // pred_region
      %1399 = dma.done [#allocation3], 256
    $region29: #{tpu_custom_call.1} parent=1 // pred_fallthru
      _
    %1400 = vsyncpa [#allocation3], 1

// kernel: tpu_custom_call.1
$region0: #{tpu_custom_call.1}
  #allocation0 [shape = 'u32[]', space=smem, size = 0x4, offset = 0x4, fixed_abs, tag = 'smem constant byte address 0x4 - core index']
  #allocation1 [shape = 'u32[72,128]{1,0:T(1,128)}', space=vmem, size = 0x9000, scoped, tag = 'internal scratch']
  %s0 = inlined_call_operand.vmem [shape: f32[16,4096], index: 0, kind: input, shape index: {}]
  %s1 = inlined_call_operand.vmem [shape: f32[4096,30], index: 1, kind: input, shape index: {}]
  %s2 = inlined_call_operand.vmem [shape: f32[1,30], index: 2, kind: input, shape index: {}]
  %s3 = inlined_call_operand.vmem [shape: f32[30,128], index: 3, kind: input, shape index: {}]
  %s4 = inlined_call_operand.vmem [shape: f32[1,128], index: 4, kind: input, shape index: {}]
  %s5 = inlined_call_operand.hbm [shape: f32[16,128], index: 5, kind: output, shape index: {}]
  %s6 = sld [smem:[#allocation0]]
  $region30: #{tpu_custom_call.1} parent=0
    _
  %s8 = ssub.s32 1, %s6
  %s9 = scalar_select 0, %s8, %s6
  $region1: #{tpu_custom_call.1} parent=0
    #allocation2 [shape = 'u8[8192]{0}', space=vmem, size = 0x2000, scoped, tag = 'output window, operand 0, single buffered']
    #allocation3 [shape = 's32[1]{0}', space=sflag, size = 0x4, scoped, tag = 'scoped memory for tpu_custom_call.1']
    %10 = vsyncpa [#allocation3], 0
    // Predicated region
    $region2: #{tpu_custom_call.1} parent=1 // pred_check
      _
    $region3: #{tpu_custom_call.1} parent=1 // pred_check_branch
      %12 = sbr.rel (0) target = $region5
    $region4: #{tpu_custom_call.1} parent=1 // pred_region
      _
    $region5: #{tpu_custom_call.1} parent=1 // pred_fallthru
      _
    // Predicated region
    $region6: #{tpu_custom_call.1} parent=1 // pred_check
      _
    $region7: #{tpu_custom_call.1} parent=1 // pred_check_branch
      %14 = sbr.rel (0) target = $region9
    $region8: #{tpu_custom_call.1} parent=1 // pred_region
      _
    $region9: #{tpu_custom_call.1} parent=1 // pred_fallthru
      _
    // Predicated region
    $region10: #{tpu_custom_call.1} parent=1 // pred_check
      _
    $region11: #{tpu_custom_call.1} parent=1 // pred_check_branch
      %16 = sbr.rel (0) target = $region13
    $region12: #{tpu_custom_call.1} parent=1 // pred_region
      _
    $region13: #{tpu_custom_call.1} parent=1 // pred_fallthru
      _
    // Predicated region
    $region14: #{tpu_custom_call.1} parent=1 // pred_check
      _
    $region15: #{tpu_custom_call.1} parent=1 // pred_check_branch
      %18 = sbr.rel (0) target = $region17
    $region16: #{tpu_custom_call.1} parent=1 // pred_region
      _
    $region17: #{tpu_custom_call.1} parent=1 // pred_fallthru
      _
    // Predicated region
    $region18: #{tpu_custom_call.1} parent=1 // pred_check
      _
    $region19: #{tpu_custom_call.1} parent=1 // pred_check_branch
      %20 = sbr.rel (0) target = $region21
    $region20: #{tpu_custom_call.1} parent=1 // pred_region
      _
    $region21: #{tpu_custom_call.1} parent=1 // pred_fallthru
      _
    %v21 = vld [vmem:[%s0] sm:$0xff]
    %v22 = vld [vmem:[%s0 + $0x8] sm:$0xff]
    %v23 = vld [vmem:[%s0 + $0x10] sm:$0xff]
    %v24 = vld [vmem:[%s0 + $0x18] sm:$0xff]
    %v25 = vld [vmem:[%s0 + $0x20] sm:$0xff]
    %v26 = vld [vmem:[%s0 + $0x28] sm:$0xff]
    %v27 = vld [vmem:[%s0 + $0x30] sm:$0xff]
    %v28 = vld [vmem:[%s0 + $0x38] sm:$0xff]
    %v29 = vld [vmem:[%s0 + $0x40] sm:$0xff]
    %v30 = vld [vmem:[%s0 + $0x48] sm:$0xff]
    %v31 = vld [vmem:[%s0 + $0x50] sm:$0xff]
    %v32 = vld [vmem:[%s0 + $0x58] sm:$0xff]
    %v33 = vld [vmem:[%s0 + $0x60] sm:$0xff]
    %v34 = vld [vmem:[%s0 + $0x68] sm:$0xff]
    %v35 = vld [vmem:[%s0 + $0x70] sm:$0xff]
    %v36 = vld [vmem:[%s0 + $0x78] sm:$0xff]
    %v37 = vld [vmem:[%s0 + $0x80] sm:$0xff]
    %v38 = vld [vmem:[%s0 + $0x88] sm:$0xff]
    %v39 = vld [vmem:[%s0 + $0x90] sm:$0xff]
    %v40 = vld [vmem:[%s0 + $0x98] sm:$0xff]
    %v41 = vld [vmem:[%s0 + $0xa0] sm:$0xff]
    %v42 = vld [vmem:[%s0 + $0xa8] sm:$0xff]
    %v43 = vld [vmem:[%s0 + $0xb0] sm:$0xff]
    %v44 = vld [vmem:[%s0 + $0xb8] sm:$0xff]
    %v45 = vld [vmem:[%s0 + $0xc0] sm:$0xff]
    %v46 = vld [vmem:[%s0 + $0xc8] sm:$0xff]
    %v47 = vld [vmem:[%s0 + $0xd0] sm:$0xff]
    %v48 = vld [vmem:[%s0 + $0xd8] sm:$0xff]
    %v49 = vld [vmem:[%s0 + $0xe0] sm:$0xff]
    %v50 = vld [vmem:[%s0 + $0xe8] sm:$0xff]
    %v51 = vld [vmem:[%s0 + $0xf0] sm:$0xff]
    %v52 = vld [vmem:[%s0 + $0xf8] sm:$0xff]
    %v53 = vld [vmem:[%s0 + $0x100] sm:$0xff]
    %v54 = vld [vmem:[%s0 + $0x108] sm:$0xff]
    %v55 = vld [vmem:[%s0 + $0x110] sm:$0xff]
    %v56 = vld [vmem:[%s0 + $0x118] sm:$0xff]
    %v57 = vld [vmem:[%s0 + $0x120] sm:$0xff]
    %v58 = vld [vmem:[%s0 + $0x128] sm:$0xff]
    %v59 = vld [vmem:[%s0 + $0x130] sm:$0xff]
    %v60 = vld [vmem:[%s0 + $0x138] sm:$0xff]
    %v61 = vld [vmem:[%s0 + $0x140] sm:$0xff]
    %v62 = vld [vmem:[%s0 + $0x148] sm:$0xff]
    %v63 = vld [vmem:[%s0 + $0x150] sm:$0xff]
    %v64 = vld [vmem:[%s0 + $0x158] sm:$0xff]
    %v65 = vld [vmem:[%s0 + $0x160] sm:$0xff]
    %v66 = vld [vmem:[%s0 + $0x168] sm:$0xff]
    %v67 = vld [vmem:[%s0 + $0x170] sm:$0xff]
    %v68 = vld [vmem:[%s0 + $0x178] sm:$0xff]
    %v69 = vld [vmem:[%s0 + $0x180] sm:$0xff]
    %v70 = vld [vmem:[%s0 + $0x188] sm:$0xff]
    %v71 = vld [vmem:[%s0 + $0x190] sm:$0xff]
    %v72 = vld [vmem:[%s0 + $0x198] sm:$0xff]
    %v73 = vld [vmem:[%s0 + $0x1a0] sm:$0xff]
    %v74 = vld [vmem:[%s0 + $0x1a8] sm:$0xff]
    %v75 = vld [vmem:[%s0 + $0x1b0] sm:$0xff]
    %v76 = vld [vmem:[%s0 + $0x1b8] sm:$0xff]
    %v77 = vld [vmem:[%s0 + $0x1c0] sm:$0xff]
    %v78 = vld [vmem:[%s0 + $0x1c8] sm:$0xff]
    %v79 = vld [vmem:[%s0 + $0x1d0] sm:$0xff]
    %v80 = vld [vmem:[%s0 + $0x1d8] sm:$0xff]
    %v81 = vld [vmem:[%s0 + $0x1e0] sm:$0xff]
    %v82 = vld [vmem:[%s0 + $0x1e8] sm:$0xff]
    %v83 = vld [vmem:[%s0 + $0x1f0] sm:$0xff]
    %v84 = vld [vmem:[%s0 + $0x1f8] sm:$0xff]
    %v85 = vld [vmem:[%s1] sm:$0xff]
    %v86 = vld [vmem:[%s1 + $0x8] sm:$0xff]
    %v87 = vld [vmem:[%s1 + $0x10] sm:$0xff]
    %v88 = vld [vmem:[%s1 + $0x18] sm:$0xff]
    %v89 = vld [vmem:[%s1 + $0x20] sm:$0xff]
    %v90 = vld [vmem:[%s1 + $0x28] sm:$0xff]
    %v91 = vld [vmem:[%s1 + $0x30] sm:$0xff]
    %v92 = vld [vmem:[%s1 + $0x38] sm:$0xff]
    %v93 = vld [vmem:[%s1 + $0x40] sm:$0xff]
    %v94 = vld [vmem:[%s1 + $0x48] sm:$0xff]
    %v95 = vld [vmem:[%s1 + $0x50] sm:$0xff]
    %v96 = vld [vmem:[%s1 + $0x58] sm:$0xff]
    %v97 = vld [vmem:[%s1 + $0x60] sm:$0xff]
    %v98 = vld [vmem:[%s1 + $0x68] sm:$0xff]
    %v99 = vld [vmem:[%s1 + $0x70] sm:$0xff]
    %v100 = vld [vmem:[%s1 + $0x78] sm:$0xff]
    %v101 = vld [vmem:[%s1 + $0x80] sm:$0xff]
    %v102 = vld [vmem:[%s1 + $0x88] sm:$0xff]
    %v103 = vld [vmem:[%s1 + $0x90] sm:$0xff]
    %v104 = vld [vmem:[%s1 + $0x98] sm:$0xff]
    %v105 = vld [vmem:[%s1 + $0xa0] sm:$0xff]
    %v106 = vld [vmem:[%s1 + $0xa8] sm:$0xff]
    %v107 = vld [vmem:[%s1 + $0xb0] sm:$0xff]
    %v108 = vld [vmem:[%s1 + $0xb8] sm:$0xff]
    %v109 = vld [vmem:[%s1 + $0xc0] sm:$0xff]
    %v110 = vld [vmem:[%s1 + $0xc8] sm:$0xff]
    %v111 = vld [vmem:[%s1 + $0xd0] sm:$0xff]
    %v112 = vld [vmem:[%s1 + $0xd8] sm:$0xff]
    %v113 = vld [vmem:[%s1 + $0xe0] sm:$0xff]
    %v114 = vld [vmem:[%s1 + $0xe8] sm:$0xff]
    %v115 = vld [vmem:[%s1 + $0xf0] sm:$0xff]
    %v116 = vld [vmem:[%s1 + $0xf8] sm:$0xff]
    %v117 = vld [vmem:[%s1 + $0x100] sm:$0xff]
    %v118 = vld [vmem:[%s1 + $0x108] sm:$0xff]
    %v119 = vld [vmem:[%s1 + $0x110] sm:$0xff]
    %v120 = vld [vmem:[%s1 + $0x118] sm:$0xff]
    %v121 = vld [vmem:[%s1 + $0x120] sm:$0xff]
    %v122 = vld [vmem:[%s1 + $0x128] sm:$0xff]
    %v123 = vld [vmem:[%s1 + $0x130] sm:$0xff]
    %v124 = vld [vmem:[%s1 + $0x138] sm:$0xff]
    %v125 = vld [vmem:[%s1 + $0x140] sm:$0xff]
    %v126 = vld [vmem:[%s1 + $0x148] sm:$0xff]
    %v127 = vld [vmem:[%s1 + $0x150] sm:$0xff]
    %v128 = vld [vmem:[%s1 + $0x158] sm:$0xff]
    %v129 = vld [vmem:[%s1 + $0x160] sm:$0xff]
    %v130 = vld [vmem:[%s1 + $0x168] sm:$0xff]
    %v131 = vld [vmem:[%s1 + $0x170] sm:$0xff]
    %v132 = vld [vmem:[%s1 + $0x178] sm:$0xff]
    %v133 = vld [vmem:[%s1 + $0x180] sm:$0xff]
    %v134 = vld [vmem:[%s1 + $0x188] sm:$0xff]
    %v135 = vld [vmem:[%s1 + $0x190] sm:$0xff]
    %v136 = vld [vmem:[%s1 + $0x198] sm:$0xff]
    %v137 = vld [vmem:[%s1 + $0x1a0] sm:$0xff]
    %v138 = vld [vmem:[%s1 + $0x1a8] sm:$0xff]
    %v139 = vld [vmem:[%s1 + $0x1b0] sm:$0xff]
    %v140 = vld [vmem:[%s1 + $0x1b8] sm:$0xff]
    %v141 = vld [vmem:[%s1 + $0x1c0] sm:$0xff]
    %v142 = vld [vmem:[%s1 + $0x1c8] sm:$0xff]
    %v143 = vld [vmem:[%s1 + $0x1d0] sm:$0xff]
    %v144 = vld [vmem:[%s1 + $0x1d8] sm:$0xff]
    %v145 = vld [vmem:[%s1 + $0x1e0] sm:$0xff]
    %v146 = vld [vmem:[%s1 + $0x1e8] sm:$0xff]
    %v147 = vld [vmem:[%s1 + $0x1f0] sm:$0xff]
    %v148 = vld [vmem:[%s1 + $0x1f8] sm:$0xff]
    %v149 = vld [vmem:[%s1 + $0x200] sm:$0xff]
    %v150 = vld [vmem:[%s1 + $0x208] sm:$0xff]
    %v151 = vld [vmem:[%s1 + $0x210] sm:$0xff]
    %v152 = vld [vmem:[%s1 + $0x218] sm:$0xff]
    %v153 = vld [vmem:[%s1 + $0x220] sm:$0xff]
    %v154 = vld [vmem:[%s1 + $0x228] sm:$0xff]
    %v155 = vld [vmem:[%s1 + $0x230] sm:$0xff]
    %v156 = vld [vmem:[%s1 + $0x238] sm:$0xff]
    %v157 = vld [vmem:[%s1 + $0x240] sm:$0xff]
    %v158 = vld [vmem:[%s1 + $0x248] sm:$0xff]
    %v159 = vld [vmem:[%s1 + $0x250] sm:$0xff]
    %v160 = vld [vmem:[%s1 + $0x258] sm:$0xff]
    %v161 = vld [vmem:[%s1 + $0x260] sm:$0xff]
    %v162 = vld [vmem:[%s1 + $0x268] sm:$0xff]
    %v163 = vld [vmem:[%s1 + $0x270] sm:$0xff]
    %v164 = vld [vmem:[%s1 + $0x278] sm:$0xff]
    %v165 = vld [vmem:[%s1 + $0x280] sm:$0xff]
    %v166 = vld [vmem:[%s1 + $0x288] sm:$0xff]
    %v167 = vld [vmem:[%s1 + $0x290] sm:$0xff]
    %v168 = vld [vmem:[%s1 + $0x298] sm:$0xff]
    %v169 = vld [vmem:[%s1 + $0x2a0] sm:$0xff]
    %v170 = vld [vmem:[%s1 + $0x2a8] sm:$0xff]
    %v171 = vld [vmem:[%s1 + $0x2b0] sm:$0xff]
    %v172 = vld [vmem:[%s1 + $0x2b8] sm:$0xff]
    %v173 = vld [vmem:[%s1 + $0x2c0] sm:$0xff]
    %v174 = vld [vmem:[%s1 + $0x2c8] sm:$0xff]
    %v175 = vld [vmem:[%s1 + $0x2d0] sm:$0xff]
    %v176 = vld [vmem:[%s1 + $0x2d8] sm:$0xff]
    %v177 = vld [vmem:[%s1 + $0x2e0] sm:$0xff]
    %v178 = vld [vmem:[%s1 + $0x2e8] sm:$0xff]
    %v179 = vld [vmem:[%s1 + $0x2f0] sm:$0xff]
    %v180 = vld [vmem:[%s1 + $0x2f8] sm:$0xff]
    %v181 = vld [vmem:[%s1 + $0x300] sm:$0xff]
    %v182 = vld [vmem:[%s1 + $0x308] sm:$0xff]
    %v183 = vld [vmem:[%s1 + $0x310] sm:$0xff]
    %v184 = vld [vmem:[%s1 + $0x318] sm:$0xff]
    %v185 = vld [vmem:[%s1 + $0x320] sm:$0xff]
    %v186 = vld [vmem:[%s1 + $0x328] sm:$0xff]
    %v187 = vld [vmem:[%s1 + $0x330] sm:$0xff]
    %v188 = vld [vmem:[%s1 + $0x338] sm:$0xff]
    %v189 = vld [vmem:[%s1 + $0x340] sm:$0xff]
    %v190 = vld [vmem:[%s1 + $0x348] sm:$0xff]
    %v191 = vld [vmem:[%s1 + $0x350] sm:$0xff]
    %v192 = vld [vmem:[%s1 + $0x358] sm:$0xff]
    %v193 = vld [vmem:[%s1 + $0x360] sm:$0xff]
    %v194 = vld [vmem:[%s1 + $0x368] sm:$0xff]
    %v195 = vld [vmem:[%s1 + $0x370] sm:$0xff]
    %v196 = vld [vmem:[%s1 + $0x378] sm:$0xff]
    %v197 = vld [vmem:[%s1 + $0x380] sm:$0xff]
    %v198 = vld [vmem:[%s1 + $0x388] sm:$0xff]
    %v199 = vld [vmem:[%s1 + $0x390] sm:$0xff]
    %v200 = vld [vmem:[%s1 + $0x398] sm:$0xff]
    %v201 = vld [vmem:[%s1 + $0x3a0] sm:$0xff]
    %v202 = vld [vmem:[%s1 + $0x3a8] sm:$0xff]
    %v203 = vld [vmem:[%s1 + $0x3b0] sm:$0xff]
    %v204 = vld [vmem:[%s1 + $0x3b8] sm:$0xff]
    %v205 = vld [vmem:[%s1 + $0x3c0] sm:$0xff]
    %v206 = vld [vmem:[%s1 + $0x3c8] sm:$0xff]
    %v207 = vld [vmem:[%s1 + $0x3d0] sm:$0xff]
    %v208 = vld [vmem:[%s1 + $0x3d8] sm:$0xff]
    %v209 = vld [vmem:[%s1 + $0x3e0] sm:$0xff]
    %v210 = vld [vmem:[%s1 + $0x3e8] sm:$0xff]
    %v211 = vld [vmem:[%s1 + $0x3f0] sm:$0xff]
    %v212 = vld [vmem:[%s1 + $0x3f8] sm:$0xff]
    %v213 = vld [vmem:[%s1 + $0x400] sm:$0xff]
    %v214 = vld [vmem:[%s1 + $0x408] sm:$0xff]
    %v215 = vld [vmem:[%s1 + $0x410] sm:$0xff]
    %v216 = vld [vmem:[%s1 + $0x418] sm:$0xff]
    %v217 = vld [vmem:[%s1 + $0x420] sm:$0xff]
    %v218 = vld [vmem:[%s1 + $0x428] sm:$0xff]
    %v219 = vld [vmem:[%s1 + $0x430] sm:$0xff]
    %v220 = vld [vmem:[%s1 + $0x438] sm:$0xff]
    %v221 = vld [vmem:[%s1 + $0x440] sm:$0xff]
    %v222 = vld [vmem:[%s1 + $0x448] sm:$0xff]
    %v223 = vld [vmem:[%s1 + $0x450] sm:$0xff]
    %v224 = vld [vmem:[%s1 + $0x458] sm:$0xff]
    %v225 = vld [vmem:[%s1 + $0x460] sm:$0xff]
    %v226 = vld [vmem:[%s1 + $0x468] sm:$0xff]
    %v227 = vld [vmem:[%s1 + $0x470] sm:$0xff]
    %v228 = vld [vmem:[%s1 + $0x478] sm:$0xff]
    %v229 = vld [vmem:[%s1 + $0x480] sm:$0xff]
    %v230 = vld [vmem:[%s1 + $0x488] sm:$0xff]
    %v231 = vld [vmem:[%s1 + $0x490] sm:$0xff]
    %v232 = vld [vmem:[%s1 + $0x498] sm:$0xff]
    %v233 = vld [vmem:[%s1 + $0x4a0] sm:$0xff]
    %v234 = vld [vmem:[%s1 + $0x4a8] sm:$0xff]
    %v235 = vld [vmem:[%s1 + $0x4b0] sm:$0xff]
    %v236 = vld [vmem:[%s1 + $0x4b8] sm:$0xff]
    %v237 = vld [vmem:[%s1 + $0x4c0] sm:$0xff]
    %v238 = vld [vmem:[%s1 + $0x4c8] sm:$0xff]
    %v239 = vld [vmem:[%s1 + $0x4d0] sm:$0xff]
    %v240 = vld [vmem:[%s1 + $0x4d8] sm:$0xff]
    %v241 = vld [vmem:[%s1 + $0x4e0] sm:$0xff]
    %v242 = vld [vmem:[%s1 + $0x4e8] sm:$0xff]
    %v243 = vld [vmem:[%s1 + $0x4f0] sm:$0xff]
    %v244 = vld [vmem:[%s1 + $0x4f8] sm:$0xff]
    %v245 = vld [vmem:[%s1 + $0x500] sm:$0xff]
    %v246 = vld [vmem:[%s1 + $0x508] sm:$0xff]
    %v247 = vld [vmem:[%s1 + $0x510] sm:$0xff]
    %v248 = vld [vmem:[%s1 + $0x518] sm:$0xff]
    %v249 = vld [vmem:[%s1 + $0x520] sm:$0xff]
    %v250 = vld [vmem:[%s1 + $0x528] sm:$0xff]
    %v251 = vld [vmem:[%s1 + $0x530] sm:$0xff]
    %v252 = vld [vmem:[%s1 + $0x538] sm:$0xff]
    %v253 = vld [vmem:[%s1 + $0x540] sm:$0xff]
    %v254 = vld [vmem:[%s1 + $0x548] sm:$0xff]
    %v255 = vld [vmem:[%s1 + $0x550] sm:$0xff]
    %v256 = vld [vmem:[%s1 + $0x558] sm:$0xff]
    %v257 = vld [vmem:[%s1 + $0x560] sm:$0xff]
    %v258 = vld [vmem:[%s1 + $0x568] sm:$0xff]
    %v259 = vld [vmem:[%s1 + $0x570] sm:$0xff]
    %v260 = vld [vmem:[%s1 + $0x578] sm:$0xff]
    %v261 = vld [vmem:[%s1 + $0x580] sm:$0xff]
    %v262 = vld [vmem:[%s1 + $0x588] sm:$0xff]
    %v263 = vld [vmem:[%s1 + $0x590] sm:$0xff]
    %v264 = vld [vmem:[%s1 + $0x598] sm:$0xff]
    %v265 = vld [vmem:[%s1 + $0x5a0] sm:$0xff]
    %v266 = vld [vmem:[%s1 + $0x5a8] sm:$0xff]
    %v267 = vld [vmem:[%s1 + $0x5b0] sm:$0xff]
    %v268 = vld [vmem:[%s1 + $0x5b8] sm:$0xff]
    %v269 = vld [vmem:[%s1 + $0x5c0] sm:$0xff]
    %v270 = vld [vmem:[%s1 + $0x5c8] sm:$0xff]
    %v271 = vld [vmem:[%s1 + $0x5d0] sm:$0xff]
    %v272 = vld [vmem:[%s1 + $0x5d8] sm:$0xff]
    %v273 = vld [vmem:[%s1 + $0x5e0] sm:$0xff]
    %v274 = vld [vmem:[%s1 + $0x5e8] sm:$0xff]
    %v275 = vld [vmem:[%s1 + $0x5f0] sm:$0xff]
    %v276 = vld [vmem:[%s1 + $0x5f8] sm:$0xff]
    %v277 = vld [vmem:[%s1 + $0x600] sm:$0xff]
    %v278 = vld [vmem:[%s1 + $0x608] sm:$0xff]
    %v279 = vld [vmem:[%s1 + $0x610] sm:$0xff]
    %v280 = vld [vmem:[%s1 + $0x618] sm:$0xff]
    %v281 = vld [vmem:[%s1 + $0x620] sm:$0xff]
    %v282 = vld [vmem:[%s1 + $0x628] sm:$0xff]
    %v283 = vld [vmem:[%s1 + $0x630] sm:$0xff]
    %v284 = vld [vmem:[%s1 + $0x638] sm:$0xff]
    %v285 = vld [vmem:[%s1 + $0x640] sm:$0xff]
    %v286 = vld [vmem:[%s1 + $0x648] sm:$0xff]
    %v287 = vld [vmem:[%s1 + $0x650] sm:$0xff]
    %v288 = vld [vmem:[%s1 + $0x658] sm:$0xff]
    %v289 = vld [vmem:[%s1 + $0x660] sm:$0xff]
    %v290 = vld [vmem:[%s1 + $0x668] sm:$0xff]
    %v291 = vld [vmem:[%s1 + $0x670] sm:$0xff]
    %v292 = vld [vmem:[%s1 + $0x678] sm:$0xff]
    %v293 = vld [vmem:[%s1 + $0x680] sm:$0xff]
    %v294 = vld [vmem:[%s1 + $0x688] sm:$0xff]
    %v295 = vld [vmem:[%s1 + $0x690] sm:$0xff]
    %v296 = vld [vmem:[%s1 + $0x698] sm:$0xff]
    %v297 = vld [vmem:[%s1 + $0x6a0] sm:$0xff]
    %v298 = vld [vmem:[%s1 + $0x6a8] sm:$0xff]
    %v299 = vld [vmem:[%s1 + $0x6b0] sm:$0xff]
    %v300 = vld [vmem:[%s1 + $0x6b8] sm:$0xff]
    %v301 = vld [vmem:[%s1 + $0x6c0] sm:$0xff]
    %v302 = vld [vmem:[%s1 + $0x6c8] sm:$0xff]
    %v303 = vld [vmem:[%s1 + $0x6d0] sm:$0xff]
    %v304 = vld [vmem:[%s1 + $0x6d8] sm:$0xff]
    %v305 = vld [vmem:[%s1 + $0x6e0] sm:$0xff]
    %v306 = vld [vmem:[%s1 + $0x6e8] sm:$0xff]
    %v307 = vld [vmem:[%s1 + $0x6f0] sm:$0xff]
    %v308 = vld [vmem:[%s1 + $0x6f8] sm:$0xff]
    %v309 = vld [vmem:[%s1 + $0x700] sm:$0xff]
    %v310 = vld [vmem:[%s1 + $0x708] sm:$0xff]
    %v311 = vld [vmem:[%s1 + $0x710] sm:$0xff]
    %v312 = vld [vmem:[%s1 + $0x718] sm:$0xff]
    %v313 = vld [vmem:[%s1 + $0x720] sm:$0xff]
    %v314 = vld [vmem:[%s1 + $0x728] sm:$0xff]
    %v315 = vld [vmem:[%s1 + $0x730] sm:$0xff]
    %v316 = vld [vmem:[%s1 + $0x738] sm:$0xff]
    %v317 = vld [vmem:[%s1 + $0x740] sm:$0xff]
    %v318 = vld [vmem:[%s1 + $0x748] sm:$0xff]
    %v319 = vld [vmem:[%s1 + $0x750] sm:$0xff]
    %v320 = vld [vmem:[%s1 + $0x758] sm:$0xff]
    %v321 = vld [vmem:[%s1 + $0x760] sm:$0xff]
    %v322 = vld [vmem:[%s1 + $0x768] sm:$0xff]
    %v323 = vld [vmem:[%s1 + $0x770] sm:$0xff]
    %v324 = vld [vmem:[%s1 + $0x778] sm:$0xff]
    %v325 = vld [vmem:[%s1 + $0x780] sm:$0xff]
    %v326 = vld [vmem:[%s1 + $0x788] sm:$0xff]
    %v327 = vld [vmem:[%s1 + $0x790] sm:$0xff]
    %v328 = vld [vmem:[%s1 + $0x798] sm:$0xff]
    %v329 = vld [vmem:[%s1 + $0x7a0] sm:$0xff]
    %v330 = vld [vmem:[%s1 + $0x7a8] sm:$0xff]
    %v331 = vld [vmem:[%s1 + $0x7b0] sm:$0xff]
    %v332 = vld [vmem:[%s1 + $0x7b8] sm:$0xff]
    %v333 = vld [vmem:[%s1 + $0x7c0] sm:$0xff]
    %v334 = vld [vmem:[%s1 + $0x7c8] sm:$0xff]
    %v335 = vld [vmem:[%s1 + $0x7d0] sm:$0xff]
    %v336 = vld [vmem:[%s1 + $0x7d8] sm:$0xff]
    %v337 = vld [vmem:[%s1 + $0x7e0] sm:$0xff]
    %v338 = vld [vmem:[%s1 + $0x7e8] sm:$0xff]
    %v339 = vld [vmem:[%s1 + $0x7f0] sm:$0xff]
    %v340 = vld [vmem:[%s1 + $0x7f8] sm:$0xff]
    %v341 = vld [vmem:[%s1 + $0x800] sm:$0xff]
    %v342 = vld [vmem:[%s1 + $0x808] sm:$0xff]
    %v343 = vld [vmem:[%s1 + $0x810] sm:$0xff]
    %v344 = vld [vmem:[%s1 + $0x818] sm:$0xff]
    %v345 = vld [vmem:[%s1 + $0x820] sm:$0xff]
    %v346 = vld [vmem:[%s1 + $0x828] sm:$0xff]
    %v347 = vld [vmem:[%s1 + $0x830] sm:$0xff]
    %v348 = vld [vmem:[%s1 + $0x838] sm:$0xff]
    %v349 = vld [vmem:[%s1 + $0x840] sm:$0xff]
    %v350 = vld [vmem:[%s1 + $0x848] sm:$0xff]
    %v351 = vld [vmem:[%s1 + $0x850] sm:$0xff]
    %v352 = vld [vmem:[%s1 + $0x858] sm:$0xff]
    %v353 = vld [vmem:[%s1 + $0x860] sm:$0xff]
    %v354 = vld [vmem:[%s1 + $0x868] sm:$0xff]
    %v355 = vld [vmem:[%s1 + $0x870] sm:$0xff]
    %v356 = vld [vmem:[%s1 + $0x878] sm:$0xff]
    %v357 = vld [vmem:[%s1 + $0x880] sm:$0xff]
    %v358 = vld [vmem:[%s1 + $0x888] sm:$0xff]
    %v359 = vld [vmem:[%s1 + $0x890] sm:$0xff]
    %v360 = vld [vmem:[%s1 + $0x898] sm:$0xff]
    %v361 = vld [vmem:[%s1 + $0x8a0] sm:$0xff]
    %v362 = vld [vmem:[%s1 + $0x8a8] sm:$0xff]
    %v363 = vld [vmem:[%s1 + $0x8b0] sm:$0xff]
    %v364 = vld [vmem:[%s1 + $0x8b8] sm:$0xff]
    %v365 = vld [vmem:[%s1 + $0x8c0] sm:$0xff]
    %v366 = vld [vmem:[%s1 + $0x8c8] sm:$0xff]
    %v367 = vld [vmem:[%s1 + $0x8d0] sm:$0xff]
    %v368 = vld [vmem:[%s1 + $0x8d8] sm:$0xff]
    %v369 = vld [vmem:[%s1 + $0x8e0] sm:$0xff]
    %v370 = vld [vmem:[%s1 + $0x8e8] sm:$0xff]
    %v371 = vld [vmem:[%s1 + $0x8f0] sm:$0xff]
    %v372 = vld [vmem:[%s1 + $0x8f8] sm:$0xff]
    %v373 = vld [vmem:[%s1 + $0x900] sm:$0xff]
    %v374 = vld [vmem:[%s1 + $0x908] sm:$0xff]
    %v375 = vld [vmem:[%s1 + $0x910] sm:$0xff]
    %v376 = vld [vmem:[%s1 + $0x918] sm:$0xff]
    %v377 = vld [vmem:[%s1 + $0x920] sm:$0xff]
    %v378 = vld [vmem:[%s1 + $0x928] sm:$0xff]
    %v379 = vld [vmem:[%s1 + $0x930] sm:$0xff]
    %v380 = vld [vmem:[%s1 + $0x938] sm:$0xff]
    %v381 = vld [vmem:[%s1 + $0x940] sm:$0xff]
    %v382 = vld [vmem:[%s1 + $0x948] sm:$0xff]
    %v383 = vld [vmem:[%s1 + $0x950] sm:$0xff]
    %v384 = vld [vmem:[%s1 + $0x958] sm:$0xff]
    %v385 = vld [vmem:[%s1 + $0x960] sm:$0xff]
    %v386 = vld [vmem:[%s1 + $0x968] sm:$0xff]
    %v387 = vld [vmem:[%s1 + $0x970] sm:$0xff]
    %v388 = vld [vmem:[%s1 + $0x978] sm:$0xff]
    %v389 = vld [vmem:[%s1 + $0x980] sm:$0xff]
    %v390 = vld [vmem:[%s1 + $0x988] sm:$0xff]
    %v391 = vld [vmem:[%s1 + $0x990] sm:$0xff]
    %v392 = vld [vmem:[%s1 + $0x998] sm:$0xff]
    %v393 = vld [vmem:[%s1 + $0x9a0] sm:$0xff]
    %v394 = vld [vmem:[%s1 + $0x9a8] sm:$0xff]
    %v395 = vld [vmem:[%s1 + $0x9b0] sm:$0xff]
    %v396 = vld [vmem:[%s1 + $0x9b8] sm:$0xff]
    %v397 = vld [vmem:[%s1 + $0x9c0] sm:$0xff]
    %v398 = vld [vmem:[%s1 + $0x9c8] sm:$0xff]
    %v399 = vld [vmem:[%s1 + $0x9d0] sm:$0xff]
    %v400 = vld [vmem:[%s1 + $0x9d8] sm:$0xff]
    %v401 = vld [vmem:[%s1 + $0x9e0] sm:$0xff]
    %v402 = vld [vmem:[%s1 + $0x9e8] sm:$0xff]
    %v403 = vld [vmem:[%s1 + $0x9f0] sm:$0xff]
    %v404 = vld [vmem:[%s1 + $0x9f8] sm:$0xff]
    %v405 = vld [vmem:[%s1 + $0xa00] sm:$0xff]
    %v406 = vld [vmem:[%s1 + $0xa08] sm:$0xff]
    %v407 = vld [vmem:[%s1 + $0xa10] sm:$0xff]
    %v408 = vld [vmem:[%s1 + $0xa18] sm:$0xff]
    %v409 = vld [vmem:[%s1 + $0xa20] sm:$0xff]
    %v410 = vld [vmem:[%s1 + $0xa28] sm:$0xff]
    %v411 = vld [vmem:[%s1 + $0xa30] sm:$0xff]
    %v412 = vld [vmem:[%s1 + $0xa38] sm:$0xff]
    %v413 = vld [vmem:[%s1 + $0xa40] sm:$0xff]
    %v414 = vld [vmem:[%s1 + $0xa48] sm:$0xff]
    %v415 = vld [vmem:[%s1 + $0xa50] sm:$0xff]
    %v416 = vld [vmem:[%s1 + $0xa58] sm:$0xff]
    %v417 = vld [vmem:[%s1 + $0xa60] sm:$0xff]
    %v418 = vld [vmem:[%s1 + $0xa68] sm:$0xff]
    %v419 = vld [vmem:[%s1 + $0xa70] sm:$0xff]
    %v420 = vld [vmem:[%s1 + $0xa78] sm:$0xff]
    %v421 = vld [vmem:[%s1 + $0xa80] sm:$0xff]
    %v422 = vld [vmem:[%s1 + $0xa88] sm:$0xff]
    %v423 = vld [vmem:[%s1 + $0xa90] sm:$0xff]
    %v424 = vld [vmem:[%s1 + $0xa98] sm:$0xff]
    %v425 = vld [vmem:[%s1 + $0xaa0] sm:$0xff]
    %v426 = vld [vmem:[%s1 + $0xaa8] sm:$0xff]
    %v427 = vld [vmem:[%s1 + $0xab0] sm:$0xff]
    %v428 = vld [vmem:[%s1 + $0xab8] sm:$0xff]
    %v429 = vld [vmem:[%s1 + $0xac0] sm:$0xff]
    %v430 = vld [vmem:[%s1 + $0xac8] sm:$0xff]
    %v431 = vld [vmem:[%s1 + $0xad0] sm:$0xff]
    %v432 = vld [vmem:[%s1 + $0xad8] sm:$0xff]
    %v433 = vld [vmem:[%s1 + $0xae0] sm:$0xff]
    %v434 = vld [vmem:[%s1 + $0xae8] sm:$0xff]
    %v435 = vld [vmem:[%s1 + $0xaf0] sm:$0xff]
    %v436 = vld [vmem:[%s1 + $0xaf8] sm:$0xff]
    %v437 = vld [vmem:[%s1 + $0xb00] sm:$0xff]
    %v438 = vld [vmem:[%s1 + $0xb08] sm:$0xff]
    %v439 = vld [vmem:[%s1 + $0xb10] sm:$0xff]
    %v440 = vld [vmem:[%s1 + $0xb18] sm:$0xff]
    %v441 = vld [vmem:[%s1 + $0xb20] sm:$0xff]
    %v442 = vld [vmem:[%s1 + $0xb28] sm:$0xff]
    %v443 = vld [vmem:[%s1 + $0xb30] sm:$0xff]
    %v444 = vld [vmem:[%s1 + $0xb38] sm:$0xff]
    %v445 = vld [vmem:[%s1 + $0xb40] sm:$0xff]
    %v446 = vld [vmem:[%s1 + $0xb48] sm:$0xff]
    %v447 = vld [vmem:[%s1 + $0xb50] sm:$0xff]
    %v448 = vld [vmem:[%s1 + $0xb58] sm:$0xff]
    %v449 = vld [vmem:[%s1 + $0xb60] sm:$0xff]
    %v450 = vld [vmem:[%s1 + $0xb68] sm:$0xff]
    %v451 = vld [vmem:[%s1 + $0xb70] sm:$0xff]
    %v452 = vld [vmem:[%s1 + $0xb78] sm:$0xff]
    %v453 = vld [vmem:[%s1 + $0xb80] sm:$0xff]
    %v454 = vld [vmem:[%s1 + $0xb88] sm:$0xff]
    %v455 = vld [vmem:[%s1 + $0xb90] sm:$0xff]
    %v456 = vld [vmem:[%s1 + $0xb98] sm:$0xff]
    %v457 = vld [vmem:[%s1 + $0xba0] sm:$0xff]
    %v458 = vld [vmem:[%s1 + $0xba8] sm:$0xff]
    %v459 = vld [vmem:[%s1 + $0xbb0] sm:$0xff]
    %v460 = vld [vmem:[%s1 + $0xbb8] sm:$0xff]
    %v461 = vld [vmem:[%s1 + $0xbc0] sm:$0xff]
    %v462 = vld [vmem:[%s1 + $0xbc8] sm:$0xff]
    %v463 = vld [vmem:[%s1 + $0xbd0] sm:$0xff]
    %v464 = vld [vmem:[%s1 + $0xbd8] sm:$0xff]
    %v465 = vld [vmem:[%s1 + $0xbe0] sm:$0xff]
    %v466 = vld [vmem:[%s1 + $0xbe8] sm:$0xff]
    %v467 = vld [vmem:[%s1 + $0xbf0] sm:$0xff]
    %v468 = vld [vmem:[%s1 + $0xbf8] sm:$0xff]
    %v469 = vld [vmem:[%s1 + $0xc00] sm:$0xff]
    %v470 = vld [vmem:[%s1 + $0xc08] sm:$0xff]
    %v471 = vld [vmem:[%s1 + $0xc10] sm:$0xff]
    %v472 = vld [vmem:[%s1 + $0xc18] sm:$0xff]
    %v473 = vld [vmem:[%s1 + $0xc20] sm:$0xff]
    %v474 = vld [vmem:[%s1 + $0xc28] sm:$0xff]
    %v475 = vld [vmem:[%s1 + $0xc30] sm:$0xff]
    %v476 = vld [vmem:[%s1 + $0xc38] sm:$0xff]
    %v477 = vld [vmem:[%s1 + $0xc40] sm:$0xff]
    %v478 = vld [vmem:[%s1 + $0xc48] sm:$0xff]
    %v479 = vld [vmem:[%s1 + $0xc50] sm:$0xff]
    %v480 = vld [vmem:[%s1 + $0xc58] sm:$0xff]
    %v481 = vld [vmem:[%s1 + $0xc60] sm:$0xff]
    %v482 = vld [vmem:[%s1 + $0xc68] sm:$0xff]
    %v483 = vld [vmem:[%s1 + $0xc70] sm:$0xff]
    %v484 = vld [vmem:[%s1 + $0xc78] sm:$0xff]
    %v485 = vld [vmem:[%s1 + $0xc80] sm:$0xff]
    %v486 = vld [vmem:[%s1 + $0xc88] sm:$0xff]
    %v487 = vld [vmem:[%s1 + $0xc90] sm:$0xff]
    %v488 = vld [vmem:[%s1 + $0xc98] sm:$0xff]
    %v489 = vld [vmem:[%s1 + $0xca0] sm:$0xff]
    %v490 = vld [vmem:[%s1 + $0xca8] sm:$0xff]
    %v491 = vld [vmem:[%s1 + $0xcb0] sm:$0xff]
    %v492 = vld [vmem:[%s1 + $0xcb8] sm:$0xff]
    %v493 = vld [vmem:[%s1 + $0xcc0] sm:$0xff]
    %v494 = vld [vmem:[%s1 + $0xcc8] sm:$0xff]
    %v495 = vld [vmem:[%s1 + $0xcd0] sm:$0xff]
    %v496 = vld [vmem:[%s1 + $0xcd8] sm:$0xff]
    %v497 = vld [vmem:[%s1 + $0xce0] sm:$0xff]
    %v498 = vld [vmem:[%s1 + $0xce8] sm:$0xff]
    %v499 = vld [vmem:[%s1 + $0xcf0] sm:$0xff]
    %v500 = vld [vmem:[%s1 + $0xcf8] sm:$0xff]
    %v501 = vld [vmem:[%s1 + $0xd00] sm:$0xff]
    %v502 = vld [vmem:[%s1 + $0xd08] sm:$0xff]
    %v503 = vld [vmem:[%s1 + $0xd10] sm:$0xff]
    %v504 = vld [vmem:[%s1 + $0xd18] sm:$0xff]
    %v505 = vld [vmem:[%s1 + $0xd20] sm:$0xff]
    %v506 = vld [vmem:[%s1 + $0xd28] sm:$0xff]
    %v507 = vld [vmem:[%s1 + $0xd30] sm:$0xff]
    %v508 = vld [vmem:[%s1 + $0xd38] sm:$0xff]
    %v509 = vld [vmem:[%s1 + $0xd40] sm:$0xff]
    %v510 = vld [vmem:[%s1 + $0xd48] sm:$0xff]
    %v511 = vld [vmem:[%s1 + $0xd50] sm:$0xff]
    %v512 = vld [vmem:[%s1 + $0xd58] sm:$0xff]
    %v513 = vld [vmem:[%s1 + $0xd60] sm:$0xff]
    %v514 = vld [vmem:[%s1 + $0xd68] sm:$0xff]
    %v515 = vld [vmem:[%s1 + $0xd70] sm:$0xff]
    %v516 = vld [vmem:[%s1 + $0xd78] sm:$0xff]
    %v517 = vld [vmem:[%s1 + $0xd80] sm:$0xff]
    %v518 = vld [vmem:[%s1 + $0xd88] sm:$0xff]
    %v519 = vld [vmem:[%s1 + $0xd90] sm:$0xff]
    %v520 = vld [vmem:[%s1 + $0xd98] sm:$0xff]
    %v521 = vld [vmem:[%s1 + $0xda0] sm:$0xff]
    %v522 = vld [vmem:[%s1 + $0xda8] sm:$0xff]
    %v523 = vld [vmem:[%s1 + $0xdb0] sm:$0xff]
    %v524 = vld [vmem:[%s1 + $0xdb8] sm:$0xff]
    %v525 = vld [vmem:[%s1 + $0xdc0] sm:$0xff]
    %v526 = vld [vmem:[%s1 + $0xdc8] sm:$0xff]
    %v527 = vld [vmem:[%s1 + $0xdd0] sm:$0xff]
    %v528 = vld [vmem:[%s1 + $0xdd8] sm:$0xff]
    %v529 = vld [vmem:[%s1 + $0xde0] sm:$0xff]
    %v530 = vld [vmem:[%s1 + $0xde8] sm:$0xff]
    %v531 = vld [vmem:[%s1 + $0xdf0] sm:$0xff]
    %v532 = vld [vmem:[%s1 + $0xdf8] sm:$0xff]
    %v533 = vld [vmem:[%s1 + $0xe00] sm:$0xff]
    %v534 = vld [vmem:[%s1 + $0xe08] sm:$0xff]
    %v535 = vld [vmem:[%s1 + $0xe10] sm:$0xff]
    %v536 = vld [vmem:[%s1 + $0xe18] sm:$0xff]
    %v537 = vld [vmem:[%s1 + $0xe20] sm:$0xff]
    %v538 = vld [vmem:[%s1 + $0xe28] sm:$0xff]
    %v539 = vld [vmem:[%s1 + $0xe30] sm:$0xff]
    %v540 = vld [vmem:[%s1 + $0xe38] sm:$0xff]
    %v541 = vld [vmem:[%s1 + $0xe40] sm:$0xff]
    %v542 = vld [vmem:[%s1 + $0xe48] sm:$0xff]
    %v543 = vld [vmem:[%s1 + $0xe50] sm:$0xff]
    %v544 = vld [vmem:[%s1 + $0xe58] sm:$0xff]
    %v545 = vld [vmem:[%s1 + $0xe60] sm:$0xff]
    %v546 = vld [vmem:[%s1 + $0xe68] sm:$0xff]
    %v547 = vld [vmem:[%s1 + $0xe70] sm:$0xff]
    %v548 = vld [vmem:[%s1 + $0xe78] sm:$0xff]
    %v549 = vld [vmem:[%s1 + $0xe80] sm:$0xff]
    %v550 = vld [vmem:[%s1 + $0xe88] sm:$0xff]
    %v551 = vld [vmem:[%s1 + $0xe90] sm:$0xff]
    %v552 = vld [vmem:[%s1 + $0xe98] sm:$0xff]
    %v553 = vld [vmem:[%s1 + $0xea0] sm:$0xff]
    %v554 = vld [vmem:[%s1 + $0xea8] sm:$0xff]
    %v555 = vld [vmem:[%s1 + $0xeb0] sm:$0xff]
    %v556 = vld [vmem:[%s1 + $0xeb8] sm:$0xff]
    %v557 = vld [vmem:[%s1 + $0xec0] sm:$0xff]
    %v558 = vld [vmem:[%s1 + $0xec8] sm:$0xff]
    %v559 = vld [vmem:[%s1 + $0xed0] sm:$0xff]
    %v560 = vld [vmem:[%s1 + $0xed8] sm:$0xff]
    %v561 = vld [vmem:[%s1 + $0xee0] sm:$0xff]
    %v562 = vld [vmem:[%s1 + $0xee8] sm:$0xff]
    %v563 = vld [vmem:[%s1 + $0xef0] sm:$0xff]
    %v564 = vld [vmem:[%s1 + $0xef8] sm:$0xff]
    %v565 = vld [vmem:[%s1 + $0xf00] sm:$0xff]
    %v566 = vld [vmem:[%s1 + $0xf08] sm:$0xff]
    %v567 = vld [vmem:[%s1 + $0xf10] sm:$0xff]
    %v568 = vld [vmem:[%s1 + $0xf18] sm:$0xff]
    %v569 = vld [vmem:[%s1 + $0xf20] sm:$0xff]
    %v570 = vld [vmem:[%s1 + $0xf28] sm:$0xff]
    %v571 = vld [vmem:[%s1 + $0xf30] sm:$0xff]
    %v572 = vld [vmem:[%s1 + $0xf38] sm:$0xff]
    %v573 = vld [vmem:[%s1 + $0xf40] sm:$0xff]
    %v574 = vld [vmem:[%s1 + $0xf48] sm:$0xff]
    %v575 = vld [vmem:[%s1 + $0xf50] sm:$0xff]
    %v576 = vld [vmem:[%s1 + $0xf58] sm:$0xff]
    %v577 = vld [vmem:[%s1 + $0xf60] sm:$0xff]
    %v578 = vld [vmem:[%s1 + $0xf68] sm:$0xff]
    %v579 = vld [vmem:[%s1 + $0xf70] sm:$0xff]
    %v580 = vld [vmem:[%s1 + $0xf78] sm:$0xff]
    %v581 = vld [vmem:[%s1 + $0xf80] sm:$0xff]
    %v582 = vld [vmem:[%s1 + $0xf88] sm:$0xff]
    %v583 = vld [vmem:[%s1 + $0xf90] sm:$0xff]
    %v584 = vld [vmem:[%s1 + $0xf98] sm:$0xff]
    %v585 = vld [vmem:[%s1 + $0xfa0] sm:$0xff]
    %v586 = vld [vmem:[%s1 + $0xfa8] sm:$0xff]
    %v587 = vld [vmem:[%s1 + $0xfb0] sm:$0xff]
    %v588 = vld [vmem:[%s1 + $0xfb8] sm:$0xff]
    %v589 = vld [vmem:[%s1 + $0xfc0] sm:$0xff]
    %v590 = vld [vmem:[%s1 + $0xfc8] sm:$0xff]
    %v591 = vld [vmem:[%s1 + $0xfd0] sm:$0xff]
    %v592 = vld [vmem:[%s1 + $0xfd8] sm:$0xff]
    %v593 = vld [vmem:[%s1 + $0xfe0] sm:$0xff]
    %v594 = vld [vmem:[%s1 + $0xfe8] sm:$0xff]
    %v595 = vld [vmem:[%s1 + $0xff0] sm:$0xff]
    %v596 = vld [vmem:[%s1 + $0xff8] sm:$0xff]
    %v597 = vld [vmem:[%s2] sm:$0x1]
    %v599 = vperm.slane %v597, 0
    %601 = vmatpush.msra.mxu0 %v100
    %602 = vmatpush.msra.mxu0 %v99
    %603 = vmatpush.msra.mxu0 %v98
    %604 = vmatpush.msra.mxu0 %v97
    %605 = vmatpush.msra.mxu0 %v96
    %606 = vmatpush.msra.mxu0 %v95
    %607 = vmatpush.msra.mxu0 %v94
    %608 = vmatpush.msra.mxu0 %v93
    %609 = vmatpush.msra.mxu0 %v92
    %610 = vmatpush.msra.mxu0 %v91
    %611 = vmatpush.msra.mxu0 %v90
    %612 = vmatpush.msra.mxu0 %v89
    %613 = vmatpush.msra.mxu0 %v88
    %614 = vmatpush.msra.mxu0 %v87
    %615 = vmatpush.msra.mxu0 %v86
    %616 = vmatpush.msra.mxu0 %v85
    %617 = vmatmul.f32.gmra.mxu0 %v21
    %v618 = vpop.f32.mrf.mxu0
    %v619 = vadd.f32 %v599, %v618
    %620 = vmatmul.f32.gmra.mxu0 %v53
    %v621 = vpop.f32.mrf.mxu0
    %v622 = vadd.f32 %v599, %v621
    %623 = vdwg.mxu0
    %624 = vmatpush.msra.mxu0 %v116
    %625 = vmatpush.msra.mxu0 %v115
    %626 = vmatpush.msra.mxu0 %v114
    %627 = vmatpush.msra.mxu0 %v113
    %628 = vmatpush.msra.mxu0 %v112
    %629 = vmatpush.msra.mxu0 %v111
    %630 = vmatpush.msra.mxu0 %v110
    %631 = vmatpush.msra.mxu0 %v109
    %632 = vmatpush.msra.mxu0 %v108
    %633 = vmatpush.msra.mxu0 %v107
    %634 = vmatpush.msra.mxu0 %v106
    %635 = vmatpush.msra.mxu0 %v105
    %636 = vmatpush.msra.mxu0 %v104
    %637 = vmatpush.msra.mxu0 %v103
    %638 = vmatpush.msra.mxu0 %v102
    %639 = vmatpush.msra.mxu0 %v101
    %640 = vmatmul.f32.gmra.mxu0 %v22
    %v641 = vpop.f32.mrf.mxu0
    %v642 = vadd.f32 %v619, %v641
    %643 = vmatmul.f32.gmra.mxu0 %v54
    %v644 = vpop.f32.mrf.mxu0
    %v645 = vadd.f32 %v622, %v644
    %646 = vdwg.mxu0
    %647 = vmatpush.msra.mxu0 %v132
    %648 = vmatpush.msra.mxu0 %v131
    %649 = vmatpush.msra.mxu0 %v130
    %650 = vmatpush.msra.mxu0 %v129
    %651 = vmatpush.msra.mxu0 %v128
    %652 = vmatpush.msra.mxu0 %v127
    %653 = vmatpush.msra.mxu0 %v126
    %654 = vmatpush.msra.mxu0 %v125
    %655 = vmatpush.msra.mxu0 %v124
    %656 = vmatpush.msra.mxu0 %v123
    %657 = vmatpush.msra.mxu0 %v122
    %658 = vmatpush.msra.mxu0 %v121
    %659 = vmatpush.msra.mxu0 %v120
    %660 = vmatpush.msra.mxu0 %v119
    %661 = vmatpush.msra.mxu0 %v118
    %662 = vmatpush.msra.mxu0 %v117
    %663 = vmatmul.f32.gmra.mxu0 %v23
    %v664 = vpop.f32.mrf.mxu0
    %v665 = vadd.f32 %v642, %v664
    %666 = vmatmul.f32.gmra.mxu0 %v55
    %v667 = vpop.f32.mrf.mxu0
    %v668 = vadd.f32 %v645, %v667
    %669 = vdwg.mxu0
    %670 = vmatpush.msra.mxu0 %v148
    %671 = vmatpush.msra.mxu0 %v147
    %672 = vmatpush.msra.mxu0 %v146
    %673 = vmatpush.msra.mxu0 %v145
    %674 = vmatpush.msra.mxu0 %v144
    %675 = vmatpush.msra.mxu0 %v143
    %676 = vmatpush.msra.mxu0 %v142
    %677 = vmatpush.msra.mxu0 %v141
    %678 = vmatpush.msra.mxu0 %v140
    %679 = vmatpush.msra.mxu0 %v139
    %680 = vmatpush.msra.mxu0 %v138
    %681 = vmatpush.msra.mxu0 %v137
    %682 = vmatpush.msra.mxu0 %v136
    %683 = vmatpush.msra.mxu0 %v135
    %684 = vmatpush.msra.mxu0 %v134
    %685 = vmatpush.msra.mxu0 %v133
    %686 = vmatmul.f32.gmra.mxu0 %v24
    %v687 = vpop.f32.mrf.mxu0
    %v688 = vadd.f32 %v665, %v687
    %689 = vmatmul.f32.gmra.mxu0 %v56
    %v690 = vpop.f32.mrf.mxu0
    %v691 = vadd.f32 %v668, %v690
    %692 = vdwg.mxu0
    %693 = vmatpush.msra.mxu0 %v164
    %694 = vmatpush.msra.mxu0 %v163
    %695 = vmatpush.msra.mxu0 %v162
    %696 = vmatpush.msra.mxu0 %v161
    %697 = vmatpush.msra.mxu0 %v160
    %698 = vmatpush.msra.mxu0 %v159
    %699 = vmatpush.msra.mxu0 %v158
    %700 = vmatpush.msra.mxu0 %v157
    %701 = vmatpush.msra.mxu0 %v156
    %702 = vmatpush.msra.mxu0 %v155
    %703 = vmatpush.msra.mxu0 %v154
    %704 = vmatpush.msra.mxu0 %v153
    %705 = vmatpush.msra.mxu0 %v152
    %706 = vmatpush.msra.mxu0 %v151
    %707 = vmatpush.msra.mxu0 %v150
    %708 = vmatpush.msra.mxu0 %v149
    %709 = vmatmul.f32.gmra.mxu0 %v25
    %v710 = vpop.f32.mrf.mxu0
    %v711 = vadd.f32 %v688, %v710
    %712 = vmatmul.f32.gmra.mxu0 %v57
    %v713 = vpop.f32.mrf.mxu0
    %v714 = vadd.f32 %v691, %v713
    %715 = vdwg.mxu0
    %716 = vmatpush.msra.mxu0 %v180
    %717 = vmatpush.msra.mxu0 %v179
    %718 = vmatpush.msra.mxu0 %v178
    %719 = vmatpush.msra.mxu0 %v177
    %720 = vmatpush.msra.mxu0 %v176
    %721 = vmatpush.msra.mxu0 %v175
    %722 = vmatpush.msra.mxu0 %v174
    %723 = vmatpush.msra.mxu0 %v173
    %724 = vmatpush.msra.mxu0 %v172
    %725 = vmatpush.msra.mxu0 %v171
    %726 = vmatpush.msra.mxu0 %v170
    %727 = vmatpush.msra.mxu0 %v169
    %728 = vmatpush.msra.mxu0 %v168
    %729 = vmatpush.msra.mxu0 %v167
    %730 = vmatpush.msra.mxu0 %v166
    %731 = vmatpush.msra.mxu0 %v165
    %732 = vmatmul.f32.gmra.mxu0 %v26
    %v733 = vpop.f32.mrf.mxu0
    %v734 = vadd.f32 %v711, %v733
    %735 = vmatmul.f32.gmra.mxu0 %v58
    %v736 = vpop.f32.mrf.mxu0
    %v737 = vadd.f32 %v714, %v736
    %738 = vdwg.mxu0
    %739 = vmatpush.msra.mxu0 %v196
    %740 = vmatpush.msra.mxu0 %v195
    %741 = vmatpush.msra.mxu0 %v194
    %742 = vmatpush.msra.mxu0 %v193
    %743 = vmatpush.msra.mxu0 %v192
    %744 = vmatpush.msra.mxu0 %v191
    %745 = vmatpush.msra.mxu0 %v190
    %746 = vmatpush.msra.mxu0 %v189
    %747 = vmatpush.msra.mxu0 %v188
    %748 = vmatpush.msra.mxu0 %v187
    %749 = vmatpush.msra.mxu0 %v186
    %750 = vmatpush.msra.mxu0 %v185
    %751 = vmatpush.msra.mxu0 %v184
    %752 = vmatpush.msra.mxu0 %v183
    %753 = vmatpush.msra.mxu0 %v182
    %754 = vmatpush.msra.mxu0 %v181
    %755 = vmatmul.f32.gmra.mxu0 %v27
    %v756 = vpop.f32.mrf.mxu0
    %v757 = vadd.f32 %v734, %v756
    %758 = vmatmul.f32.gmra.mxu0 %v59
    %v759 = vpop.f32.mrf.mxu0
    %v760 = vadd.f32 %v737, %v759
    %761 = vdwg.mxu0
    %762 = vmatpush.msra.mxu0 %v212
    %763 = vmatpush.msra.mxu0 %v211
    %764 = vmatpush.msra.mxu0 %v210
    %765 = vmatpush.msra.mxu0 %v209
    %766 = vmatpush.msra.mxu0 %v208
    %767 = vmatpush.msra.mxu0 %v207
    %768 = vmatpush.msra.mxu0 %v206
    %769 = vmatpush.msra.mxu0 %v205
    %770 = vmatpush.msra.mxu0 %v204
    %771 = vmatpush.msra.mxu0 %v203
    %772 = vmatpush.msra.mxu0 %v202
    %773 = vmatpush.msra.mxu0 %v201
    %774 = vmatpush.msra.mxu0 %v200
    %775 = vmatpush.msra.mxu0 %v199
    %776 = vmatpush.msra.mxu0 %v198
    %777 = vmatpush.msra.mxu0 %v197
    %778 = vmatmul.f32.gmra.mxu0 %v28
    %v779 = vpop.f32.mrf.mxu0
    %v780 = vadd.f32 %v757, %v779
    %781 = vmatmul.f32.gmra.mxu0 %v60
    %v782 = vpop.f32.mrf.mxu0
    %v783 = vadd.f32 %v760, %v782
    %784 = vdwg.mxu0
    %785 = vmatpush.msra.mxu0 %v228
    %786 = vmatpush.msra.mxu0 %v227
    %787 = vmatpush.msra.mxu0 %v226
    %788 = vmatpush.msra.mxu0 %v225
    %789 = vmatpush.msra.mxu0 %v224
    %790 = vmatpush.msra.mxu0 %v223
    %791 = vmatpush.msra.mxu0 %v222
    %792 = vmatpush.msra.mxu0 %v221
    %793 = vmatpush.msra.mxu0 %v220
    %794 = vmatpush.msra.mxu0 %v219
    %795 = vmatpush.msra.mxu0 %v218
    %796 = vmatpush.msra.mxu0 %v217
    %797 = vmatpush.msra.mxu0 %v216
    %798 = vmatpush.msra.mxu0 %v215
    %799 = vmatpush.msra.mxu0 %v214
    %800 = vmatpush.msra.mxu0 %v213
    %801 = vmatmul.f32.gmra.mxu0 %v29
    %v802 = vpop.f32.mrf.mxu0
    %v803 = vadd.f32 %v780, %v802
    %804 = vmatmul.f32.gmra.mxu0 %v61
    %v805 = vpop.f32.mrf.mxu0
    %v806 = vadd.f32 %v783, %v805
    %807 = vdwg.mxu0
    %808 = vmatpush.msra.mxu0 %v244
    %809 = vmatpush.msra.mxu0 %v243
    %810 = vmatpush.msra.mxu0 %v242
    %811 = vmatpush.msra.mxu0 %v241
    %812 = vmatpush.msra.mxu0 %v240
    %813 = vmatpush.msra.mxu0 %v239
    %814 = vmatpush.msra.mxu0 %v238
    %815 = vmatpush.msra.mxu0 %v237
    %816 = vmatpush.msra.mxu0 %v236
    %817 = vmatpush.msra.mxu0 %v235
    %818 = vmatpush.msra.mxu0 %v234
    %819 = vmatpush.msra.mxu0 %v233
    %820 = vmatpush.msra.mxu0 %v232
    %821 = vmatpush.msra.mxu0 %v231
    %822 = vmatpush.msra.mxu0 %v230
    %823 = vmatpush.msra.mxu0 %v229
    %824 = vmatmul.f32.gmra.mxu0 %v30
    %v825 = vpop.f32.mrf.mxu0
    %v826 = vadd.f32 %v803, %v825
    %827 = vmatmul.f32.gmra.mxu0 %v62
    %v828 = vpop.f32.mrf.mxu0
    %v829 = vadd.f32 %v806, %v828
    %830 = vdwg.mxu0
    %831 = vmatpush.msra.mxu0 %v260
    %832 = vmatpush.msra.mxu0 %v259
    %833 = vmatpush.msra.mxu0 %v258
    %834 = vmatpush.msra.mxu0 %v257
    %835 = vmatpush.msra.mxu0 %v256
    %836 = vmatpush.msra.mxu0 %v255
    %837 = vmatpush.msra.mxu0 %v254
    %838 = vmatpush.msra.mxu0 %v253
    %839 = vmatpush.msra.mxu0 %v252
    %840 = vmatpush.msra.mxu0 %v251
    %841 = vmatpush.msra.mxu0 %v250
    %842 = vmatpush.msra.mxu0 %v249
    %843 = vmatpush.msra.mxu0 %v248
    %844 = vmatpush.msra.mxu0 %v247
    %845 = vmatpush.msra.mxu0 %v246
    %846 = vmatpush.msra.mxu0 %v245
    %847 = vmatmul.f32.gmra.mxu0 %v31
    %v848 = vpop.f32.mrf.mxu0
    %v849 = vadd.f32 %v826, %v848
    %850 = vmatmul.f32.gmra.mxu0 %v63
    %v851 = vpop.f32.mrf.mxu0
    %v852 = vadd.f32 %v829, %v851
    %853 = vdwg.mxu0
    %854 = vmatpush.msra.mxu0 %v276
    %855 = vmatpush.msra.mxu0 %v275
    %856 = vmatpush.msra.mxu0 %v274
    %857 = vmatpush.msra.mxu0 %v273
    %858 = vmatpush.msra.mxu0 %v272
    %859 = vmatpush.msra.mxu0 %v271
    %860 = vmatpush.msra.mxu0 %v270
    %861 = vmatpush.msra.mxu0 %v269
    %862 = vmatpush.msra.mxu0 %v268
    %863 = vmatpush.msra.mxu0 %v267
    %864 = vmatpush.msra.mxu0 %v266
    %865 = vmatpush.msra.mxu0 %v265
    %866 = vmatpush.msra.mxu0 %v264
    %867 = vmatpush.msra.mxu0 %v263
    %868 = vmatpush.msra.mxu0 %v262
    %869 = vmatpush.msra.mxu0 %v261
    %870 = vmatmul.f32.gmra.mxu0 %v32
    %v871 = vpop.f32.mrf.mxu0
    %v872 = vadd.f32 %v849, %v871
    %873 = vmatmul.f32.gmra.mxu0 %v64
    %v874 = vpop.f32.mrf.mxu0
    %v875 = vadd.f32 %v852, %v874
    %876 = vdwg.mxu0
    %877 = vmatpush.msra.mxu0 %v292
    %878 = vmatpush.msra.mxu0 %v291
    %879 = vmatpush.msra.mxu0 %v290
    %880 = vmatpush.msra.mxu0 %v289
    %881 = vmatpush.msra.mxu0 %v288
    %882 = vmatpush.msra.mxu0 %v287
    %883 = vmatpush.msra.mxu0 %v286
    %884 = vmatpush.msra.mxu0 %v285
    %885 = vmatpush.msra.mxu0 %v284
    %886 = vmatpush.msra.mxu0 %v283
    %887 = vmatpush.msra.mxu0 %v282
    %888 = vmatpush.msra.mxu0 %v281
    %889 = vmatpush.msra.mxu0 %v280
    %890 = vmatpush.msra.mxu0 %v279
    %891 = vmatpush.msra.mxu0 %v278
    %892 = vmatpush.msra.mxu0 %v277
    %893 = vmatmul.f32.gmra.mxu0 %v33
    %v894 = vpop.f32.mrf.mxu0
    %v895 = vadd.f32 %v872, %v894
    %896 = vmatmul.f32.gmra.mxu0 %v65
    %v897 = vpop.f32.mrf.mxu0
    %v898 = vadd.f32 %v875, %v897
    %899 = vdwg.mxu0
    %900 = vmatpush.msra.mxu0 %v308
    %901 = vmatpush.msra.mxu0 %v307
    %902 = vmatpush.msra.mxu0 %v306
    %903 = vmatpush.msra.mxu0 %v305
    %904 = vmatpush.msra.mxu0 %v304
    %905 = vmatpush.msra.mxu0 %v303
    %906 = vmatpush.msra.mxu0 %v302
    %907 = vmatpush.msra.mxu0 %v301
    %908 = vmatpush.msra.mxu0 %v300
    %909 = vmatpush.msra.mxu0 %v299
    %910 = vmatpush.msra.mxu0 %v298
    %911 = vmatpush.msra.mxu0 %v297
    %912 = vmatpush.msra.mxu0 %v296
    %913 = vmatpush.msra.mxu0 %v295
    %914 = vmatpush.msra.mxu0 %v294
    %915 = vmatpush.msra.mxu0 %v293
    %916 = vmatmul.f32.gmra.mxu0 %v34
    %v917 = vpop.f32.mrf.mxu0
    %v918 = vadd.f32 %v895, %v917
    %919 = vmatmul.f32.gmra.mxu0 %v66
    %v920 = vpop.f32.mrf.mxu0
    %v921 = vadd.f32 %v898, %v920
    %922 = vdwg.mxu0
    %923 = vmatpush.msra.mxu0 %v324
    %924 = vmatpush.msra.mxu0 %v323
    %925 = vmatpush.msra.mxu0 %v322
    %926 = vmatpush.msra.mxu0 %v321
    %927 = vmatpush.msra.mxu0 %v320
    %928 = vmatpush.msra.mxu0 %v319
    %929 = vmatpush.msra.mxu0 %v318
    %930 = vmatpush.msra.mxu0 %v317
    %931 = vmatpush.msra.mxu0 %v316
    %932 = vmatpush.msra.mxu0 %v315
    %933 = vmatpush.msra.mxu0 %v314
    %934 = vmatpush.msra.mxu0 %v313
    %935 = vmatpush.msra.mxu0 %v312
    %936 = vmatpush.msra.mxu0 %v311
    %937 = vmatpush.msra.mxu0 %v310
    %938 = vmatpush.msra.mxu0 %v309
    %939 = vmatmul.f32.gmra.mxu0 %v35
    %v940 = vpop.f32.mrf.mxu0
    %v941 = vadd.f32 %v918, %v940
    %942 = vmatmul.f32.gmra.mxu0 %v67
    %v943 = vpop.f32.mrf.mxu0
    %v944 = vadd.f32 %v921, %v943
    %945 = vdwg.mxu0
    %946 = vmatpush.msra.mxu0 %v340
    %947 = vmatpush.msra.mxu0 %v339
    %948 = vmatpush.msra.mxu0 %v338
    %949 = vmatpush.msra.mxu0 %v337
    %950 = vmatpush.msra.mxu0 %v336
    %951 = vmatpush.msra.mxu0 %v335
    %952 = vmatpush.msra.mxu0 %v334
    %953 = vmatpush.msra.mxu0 %v333
    %954 = vmatpush.msra.mxu0 %v332
    %955 = vmatpush.msra.mxu0 %v331
    %956 = vmatpush.msra.mxu0 %v330
    %957 = vmatpush.msra.mxu0 %v329
    %958 = vmatpush.msra.mxu0 %v328
    %959 = vmatpush.msra.mxu0 %v327
    %960 = vmatpush.msra.mxu0 %v326
    %961 = vmatpush.msra.mxu0 %v325
    %962 = vmatmul.f32.gmra.mxu0 %v36
    %v963 = vpop.f32.mrf.mxu0
    %v964 = vadd.f32 %v941, %v963
    %965 = vmatmul.f32.gmra.mxu0 %v68
    %v966 = vpop.f32.mrf.mxu0
    %v967 = vadd.f32 %v944, %v966
    %968 = vdwg.mxu0
    %969 = vmatpush.msra.mxu0 %v356
    %970 = vmatpush.msra.mxu0 %v355
    %971 = vmatpush.msra.mxu0 %v354
    %972 = vmatpush.msra.mxu0 %v353
    %973 = vmatpush.msra.mxu0 %v352
    %974 = vmatpush.msra.mxu0 %v351
    %975 = vmatpush.msra.mxu0 %v350
    %976 = vmatpush.msra.mxu0 %v349
    %977 = vmatpush.msra.mxu0 %v348
    %978 = vmatpush.msra.mxu0 %v347
    %979 = vmatpush.msra.mxu0 %v346
    %980 = vmatpush.msra.mxu0 %v345
    %981 = vmatpush.msra.mxu0 %v344
    %982 = vmatpush.msra.mxu0 %v343
    %983 = vmatpush.msra.mxu0 %v342
    %984 = vmatpush.msra.mxu0 %v341
    %985 = vmatmul.f32.gmra.mxu0 %v37
    %v986 = vpop.f32.mrf.mxu0
    %v987 = vadd.f32 %v964, %v986
    %988 = vmatmul.f32.gmra.mxu0 %v69
    %v989 = vpop.f32.mrf.mxu0
    %v990 = vadd.f32 %v967, %v989
    %991 = vdwg.mxu0
    %992 = vmatpush.msra.mxu0 %v372
    %993 = vmatpush.msra.mxu0 %v371
    %994 = vmatpush.msra.mxu0 %v370
    %995 = vmatpush.msra.mxu0 %v369
    %996 = vmatpush.msra.mxu0 %v368
    %997 = vmatpush.msra.mxu0 %v367
    %998 = vmatpush.msra.mxu0 %v366
    %999 = vmatpush.msra.mxu0 %v365
    %1000 = vmatpush.msra.mxu0 %v364
    %1001 = vmatpush.msra.mxu0 %v363
    %1002 = vmatpush.msra.mxu0 %v362
    %1003 = vmatpush.msra.mxu0 %v361
    %1004 = vmatpush.msra.mxu0 %v360
    %1005 = vmatpush.msra.mxu0 %v359
    %1006 = vmatpush.msra.mxu0 %v358
    %1007 = vmatpush.msra.mxu0 %v357
    %1008 = vmatmul.f32.gmra.mxu0 %v38
    %v1009 = vpop.f32.mrf.mxu0
    %v1010 = vadd.f32 %v987, %v1009
    %1011 = vmatmul.f32.gmra.mxu0 %v70
    %v1012 = vpop.f32.mrf.mxu0
    %v1013 = vadd.f32 %v990, %v1012
    %1014 = vdwg.mxu0
    %1015 = vmatpush.msra.mxu0 %v388
    %1016 = vmatpush.msra.mxu0 %v387
    %1017 = vmatpush.msra.mxu0 %v386
    %1018 = vmatpush.msra.mxu0 %v385
    %1019 = vmatpush.msra.mxu0 %v384
    %1020 = vmatpush.msra.mxu0 %v383
    %1021 = vmatpush.msra.mxu0 %v382
    %1022 = vmatpush.msra.mxu0 %v381
    %1023 = vmatpush.msra.mxu0 %v380
    %1024 = vmatpush.msra.mxu0 %v379
    %1025 = vmatpush.msra.mxu0 %v378
    %1026 = vmatpush.msra.mxu0 %v377
    %1027 = vmatpush.msra.mxu0 %v376
    %1028 = vmatpush.msra.mxu0 %v375
    %1029 = vmatpush.msra.mxu0 %v374
    %1030 = vmatpush.msra.mxu0 %v373
    %1031 = vmatmul.f32.gmra.mxu0 %v39
    %v1032 = vpop.f32.mrf.mxu0
    %v1033 = vadd.f32 %v1010, %v1032
    %1034 = vmatmul.f32.gmra.mxu0 %v71
    %v1035 = vpop.f32.mrf.mxu0
    %v1036 = vadd.f32 %v1013, %v1035
    %1037 = vdwg.mxu0
    %1038 = vmatpush.msra.mxu0 %v404
    %1039 = vmatpush.msra.mxu0 %v403
    %1040 = vmatpush.msra.mxu0 %v402
    %1041 = vmatpush.msra.mxu0 %v401
    %1042 = vmatpush.msra.mxu0 %v400
    %1043 = vmatpush.msra.mxu0 %v399
    %1044 = vmatpush.msra.mxu0 %v398
    %1045 = vmatpush.msra.mxu0 %v397
    %1046 = vmatpush.msra.mxu0 %v396
    %1047 = vmatpush.msra.mxu0 %v395
    %1048 = vmatpush.msra.mxu0 %v394
    %1049 = vmatpush.msra.mxu0 %v393
    %1050 = vmatpush.msra.mxu0 %v392
    %1051 = vmatpush.msra.mxu0 %v391
    %1052 = vmatpush.msra.mxu0 %v390
    %1053 = vmatpush.msra.mxu0 %v389
    %1054 = vmatmul.f32.gmra.mxu0 %v40
    %v1055 = vpop.f32.mrf.mxu0
    %v1056 = vadd.f32 %v1033, %v1055
    %1057 = vmatmul.f32.gmra.mxu0 %v72
    %v1058 = vpop.f32.mrf.mxu0
    %v1059 = vadd.f32 %v1036, %v1058
    %1060 = vdwg.mxu0
    %1061 = vmatpush.msra.mxu0 %v420
    %1062 = vmatpush.msra.mxu0 %v419
    %1063 = vmatpush.msra.mxu0 %v418
    %1064 = vmatpush.msra.mxu0 %v417
    %1065 = vmatpush.msra.mxu0 %v416
    %1066 = vmatpush.msra.mxu0 %v415
    %1067 = vmatpush.msra.mxu0 %v414
    %1068 = vmatpush.msra.mxu0 %v413
    %1069 = vmatpush.msra.mxu0 %v412
    %1070 = vmatpush.msra.mxu0 %v411
    %1071 = vmatpush.msra.mxu0 %v410
    %1072 = vmatpush.msra.mxu0 %v409
    %1073 = vmatpush.msra.mxu0 %v408
    %1074 = vmatpush.msra.mxu0 %v407
    %1075 = vmatpush.msra.mxu0 %v406
    %1076 = vmatpush.msra.mxu0 %v405
    %1077 = vmatmul.f32.gmra.mxu0 %v41
    %v1078 = vpop.f32.mrf.mxu0
    %v1079 = vadd.f32 %v1056, %v1078
    %1080 = vmatmul.f32.gmra.mxu0 %v73
    %v1081 = vpop.f32.mrf.mxu0
    %v1082 = vadd.f32 %v1059, %v1081
    %1083 = vdwg.mxu0
    %1084 = vmatpush.msra.mxu0 %v436
    %1085 = vmatpush.msra.mxu0 %v435
    %1086 = vmatpush.msra.mxu0 %v434
    %1087 = vmatpush.msra.mxu0 %v433
    %1088 = vmatpush.msra.mxu0 %v432
    %1089 = vmatpush.msra.mxu0 %v431
    %1090 = vmatpush.msra.mxu0 %v430
    %1091 = vmatpush.msra.mxu0 %v429
    %1092 = vmatpush.msra.mxu0 %v428
    %1093 = vmatpush.msra.mxu0 %v427
    %1094 = vmatpush.msra.mxu0 %v426
    %1095 = vmatpush.msra.mxu0 %v425
    %1096 = vmatpush.msra.mxu0 %v424
    %1097 = vmatpush.msra.mxu0 %v423
    %1098 = vmatpush.msra.mxu0 %v422
    %1099 = vmatpush.msra.mxu0 %v421
    %1100 = vmatmul.f32.gmra.mxu0 %v42
    %v1101 = vpop.f32.mrf.mxu0
    %v1102 = vadd.f32 %v1079, %v1101
    %1103 = vmatmul.f32.gmra.mxu0 %v74
    %v1104 = vpop.f32.mrf.mxu0
    %v1105 = vadd.f32 %v1082, %v1104
    %1106 = vdwg.mxu0
    %1107 = vmatpush.msra.mxu0 %v452
    %1108 = vmatpush.msra.mxu0 %v451
    %1109 = vmatpush.msra.mxu0 %v450
    %1110 = vmatpush.msra.mxu0 %v449
    %1111 = vmatpush.msra.mxu0 %v448
    %1112 = vmatpush.msra.mxu0 %v447
    %1113 = vmatpush.msra.mxu0 %v446
    %1114 = vmatpush.msra.mxu0 %v445
    %1115 = vmatpush.msra.mxu0 %v444
    %1116 = vmatpush.msra.mxu0 %v443
    %1117 = vmatpush.msra.mxu0 %v442
    %1118 = vmatpush.msra.mxu0 %v441
    %1119 = vmatpush.msra.mxu0 %v440
    %1120 = vmatpush.msra.mxu0 %v439
    %1121 = vmatpush.msra.mxu0 %v438
    %1122 = vmatpush.msra.mxu0 %v437
    %1123 = vmatmul.f32.gmra.mxu0 %v43
    %v1124 = vpop.f32.mrf.mxu0
    %v1125 = vadd.f32 %v1102, %v1124
    %1126 = vmatmul.f32.gmra.mxu0 %v75
    %v1127 = vpop.f32.mrf.mxu0
    %v1128 = vadd.f32 %v1105, %v1127
    %1129 = vdwg.mxu0
    %1130 = vmatpush.msra.mxu0 %v468
    %1131 = vmatpush.msra.mxu0 %v467
    %1132 = vmatpush.msra.mxu0 %v466
    %1133 = vmatpush.msra.mxu0 %v465
    %1134 = vmatpush.msra.mxu0 %v464
    %1135 = vmatpush.msra.mxu0 %v463
    %1136 = vmatpush.msra.mxu0 %v462
    %1137 = vmatpush.msra.mxu0 %v461
    %1138 = vmatpush.msra.mxu0 %v460
    %1139 = vmatpush.msra.mxu0 %v459
    %1140 = vmatpush.msra.mxu0 %v458
    %1141 = vmatpush.msra.mxu0 %v457
    %1142 = vmatpush.msra.mxu0 %v456
    %1143 = vmatpush.msra.mxu0 %v455
    %1144 = vmatpush.msra.mxu0 %v454
    %1145 = vmatpush.msra.mxu0 %v453
    %1146 = vmatmul.f32.gmra.mxu0 %v44
    %v1147 = vpop.f32.mrf.mxu0
    %v1148 = vadd.f32 %v1125, %v1147
    %1149 = vmatmul.f32.gmra.mxu0 %v76
    %v1150 = vpop.f32.mrf.mxu0
    %v1151 = vadd.f32 %v1128, %v1150
    %1152 = vdwg.mxu0
    %1153 = vmatpush.msra.mxu0 %v484
    %1154 = vmatpush.msra.mxu0 %v483
    %1155 = vmatpush.msra.mxu0 %v482
    %1156 = vmatpush.msra.mxu0 %v481
    %1157 = vmatpush.msra.mxu0 %v480
    %1158 = vmatpush.msra.mxu0 %v479
    %1159 = vmatpush.msra.mxu0 %v478
    %1160 = vmatpush.msra.mxu0 %v477
    %1161 = vmatpush.msra.mxu0 %v476
    %1162 = vmatpush.msra.mxu0 %v475
    %1163 = vmatpush.msra.mxu0 %v474
    %1164 = vmatpush.msra.mxu0 %v473
    %1165 = vmatpush.msra.mxu0 %v472
    %1166 = vmatpush.msra.mxu0 %v471
    %1167 = vmatpush.msra.mxu0 %v470
    %1168 = vmatpush.msra.mxu0 %v469
    %1169 = vmatmul.f32.gmra.mxu0 %v45
    %v1170 = vpop.f32.mrf.mxu0
    %v1171 = vadd.f32 %v1148, %v1170
    %1172 = vmatmul.f32.gmra.mxu0 %v77
    %v1173 = vpop.f32.mrf.mxu0
    %v1174 = vadd.f32 %v1151, %v1173
    %1175 = vdwg.mxu0
    %1176 = vmatpush.msra.mxu0 %v500
    %1177 = vmatpush.msra.mxu0 %v499
    %1178 = vmatpush.msra.mxu0 %v498
    %1179 = vmatpush.msra.mxu0 %v497
    %1180 = vmatpush.msra.mxu0 %v496
    %1181 = vmatpush.msra.mxu0 %v495
    %1182 = vmatpush.msra.mxu0 %v494
    %1183 = vmatpush.msra.mxu0 %v493
    %1184 = vmatpush.msra.mxu0 %v492
    %1185 = vmatpush.msra.mxu0 %v491
    %1186 = vmatpush.msra.mxu0 %v490
    %1187 = vmatpush.msra.mxu0 %v489
    %1188 = vmatpush.msra.mxu0 %v488
    %1189 = vmatpush.msra.mxu0 %v487
    %1190 = vmatpush.msra.mxu0 %v486
    %1191 = vmatpush.msra.mxu0 %v485
    %1192 = vmatmul.f32.gmra.mxu0 %v46
    %v1193 = vpop.f32.mrf.mxu0
    %v1194 = vadd.f32 %v1171, %v1193
    %1195 = vmatmul.f32.gmra.mxu0 %v78
    %v1196 = vpop.f32.mrf.mxu0
    %v1197 = vadd.f32 %v1174, %v1196
    %1198 = vdwg.mxu0
    %1199 = vmatpush.msra.mxu0 %v516
    %1200 = vmatpush.msra.mxu0 %v515
    %1201 = vmatpush.msra.mxu0 %v514
    %1202 = vmatpush.msra.mxu0 %v513
    %1203 = vmatpush.msra.mxu0 %v512
    %1204 = vmatpush.msra.mxu0 %v511
    %1205 = vmatpush.msra.mxu0 %v510
    %1206 = vmatpush.msra.mxu0 %v509
    %1207 = vmatpush.msra.mxu0 %v508
    %1208 = vmatpush.msra.mxu0 %v507
    %1209 = vmatpush.msra.mxu0 %v506
    %1210 = vmatpush.msra.mxu0 %v505
    %1211 = vmatpush.msra.mxu0 %v504
    %1212 = vmatpush.msra.mxu0 %v503
    %1213 = vmatpush.msra.mxu0 %v502
    %1214 = vmatpush.msra.mxu0 %v501
    %1215 = vmatmul.f32.gmra.mxu0 %v47
    %v1216 = vpop.f32.mrf.mxu0
    %v1217 = vadd.f32 %v1194, %v1216
    %1218 = vmatmul.f32.gmra.mxu0 %v79
    %v1219 = vpop.f32.mrf.mxu0
    %v1220 = vadd.f32 %v1197, %v1219
    %1221 = vdwg.mxu0
    %1222 = vmatpush.msra.mxu0 %v532
    %1223 = vmatpush.msra.mxu0 %v531
    %1224 = vmatpush.msra.mxu0 %v530
    %1225 = vmatpush.msra.mxu0 %v529
    %1226 = vmatpush.msra.mxu0 %v528
    %1227 = vmatpush.msra.mxu0 %v527
    %1228 = vmatpush.msra.mxu0 %v526
    %1229 = vmatpush.msra.mxu0 %v525
    %1230 = vmatpush.msra.mxu0 %v524
    %1231 = vmatpush.msra.mxu0 %v523
    %1232 = vmatpush.msra.mxu0 %v522
    %1233 = vmatpush.msra.mxu0 %v521
    %1234 = vmatpush.msra.mxu0 %v520
    %1235 = vmatpush.msra.mxu0 %v519
    %1236 = vmatpush.msra.mxu0 %v518
    %1237 = vmatpush.msra.mxu0 %v517
    %1238 = vmatmul.f32.gmra.mxu0 %v48
    %v1239 = vpop.f32.mrf.mxu0
    %v1240 = vadd.f32 %v1217, %v1239
    %1241 = vmatmul.f32.gmra.mxu0 %v80
    %v1242 = vpop.f32.mrf.mxu0
    %v1243 = vadd.f32 %v1220, %v1242
    %1244 = vdwg.mxu0
    %1245 = vmatpush.msra.mxu0 %v548
    %1246 = vmatpush.msra.mxu0 %v547
    %1247 = vmatpush.msra.mxu0 %v546
    %1248 = vmatpush.msra.mxu0 %v545
    %1249 = vmatpush.msra.mxu0 %v544
    %1250 = vmatpush.msra.mxu0 %v543
    %1251 = vmatpush.msra.mxu0 %v542
    %1252 = vmatpush.msra.mxu0 %v541
    %1253 = vmatpush.msra.mxu0 %v540
    %1254 = vmatpush.msra.mxu0 %v539
    %1255 = vmatpush.msra.mxu0 %v538
    %1256 = vmatpush.msra.mxu0 %v537
    %1257 = vmatpush.msra.mxu0 %v536
    %1258 = vmatpush.msra.mxu0 %v535
    %1259 = vmatpush.msra.mxu0 %v534
    %1260 = vmatpush.msra.mxu0 %v533
    %1261 = vmatmul.f32.gmra.mxu0 %v49
    %v1262 = vpop.f32.mrf.mxu0
    %v1263 = vadd.f32 %v1240, %v1262
    %1264 = vmatmul.f32.gmra.mxu0 %v81
    %v1265 = vpop.f32.mrf.mxu0
    %v1266 = vadd.f32 %v1243, %v1265
    %1267 = vdwg.mxu0
    %1268 = vmatpush.msra.mxu0 %v564
    %1269 = vmatpush.msra.mxu0 %v563
    %1270 = vmatpush.msra.mxu0 %v562
    %1271 = vmatpush.msra.mxu0 %v561
    %1272 = vmatpush.msra.mxu0 %v560
    %1273 = vmatpush.msra.mxu0 %v559
    %1274 = vmatpush.msra.mxu0 %v558
    %1275 = vmatpush.msra.mxu0 %v557
    %1276 = vmatpush.msra.mxu0 %v556
    %1277 = vmatpush.msra.mxu0 %v555
    %1278 = vmatpush.msra.mxu0 %v554
    %1279 = vmatpush.msra.mxu0 %v553
    %1280 = vmatpush.msra.mxu0 %v552
    %1281 = vmatpush.msra.mxu0 %v551
    %1282 = vmatpush.msra.mxu0 %v550
    %1283 = vmatpush.msra.mxu0 %v549
    %1284 = vmatmul.f32.gmra.mxu0 %v50
    %v1285 = vpop.f32.mrf.mxu0
    %v1286 = vadd.f32 %v1263, %v1285
    %1287 = vmatmul.f32.gmra.mxu0 %v82
    %v1288 = vpop.f32.mrf.mxu0
    %v1289 = vadd.f32 %v1266, %v1288
    %1290 = vdwg.mxu0
    %1291 = vmatpush.msra.mxu0 %v580
    %1292 = vmatpush.msra.mxu0 %v579
    %1293 = vmatpush.msra.mxu0 %v578
    %1294 = vmatpush.msra.mxu0 %v577
    %1295 = vmatpush.msra.mxu0 %v576
    %1296 = vmatpush.msra.mxu0 %v575
    %1297 = vmatpush.msra.mxu0 %v574
    %1298 = vmatpush.msra.mxu0 %v573
    %1299 = vmatpush.msra.mxu0 %v572
    %1300 = vmatpush.msra.mxu0 %v571
    %1301 = vmatpush.msra.mxu0 %v570
    %1302 = vmatpush.msra.mxu0 %v569
    %1303 = vmatpush.msra.mxu0 %v568
    %1304 = vmatpush.msra.mxu0 %v567
    %1305 = vmatpush.msra.mxu0 %v566
    %1306 = vmatpush.msra.mxu0 %v565
    %1307 = vmatmul.f32.gmra.mxu0 %v51
    %v1308 = vpop.f32.mrf.mxu0
    %v1309 = vadd.f32 %v1286, %v1308
    %1310 = vmatmul.f32.gmra.mxu0 %v83
    %v1311 = vpop.f32.mrf.mxu0
    %v1312 = vadd.f32 %v1289, %v1311
    %1313 = vdwg.mxu0
    %1314 = vmatpush.msra.mxu0 %v596
    %1315 = vmatpush.msra.mxu0 %v595
    %1316 = vmatpush.msra.mxu0 %v594
    %1317 = vmatpush.msra.mxu0 %v593
    %1318 = vmatpush.msra.mxu0 %v592
    %1319 = vmatpush.msra.mxu0 %v591
    %1320 = vmatpush.msra.mxu0 %v590
    %1321 = vmatpush.msra.mxu0 %v589
    %1322 = vmatpush.msra.mxu0 %v588
    %1323 = vmatpush.msra.mxu0 %v587
    %1324 = vmatpush.msra.mxu0 %v586
    %1325 = vmatpush.msra.mxu0 %v585
    %1326 = vmatpush.msra.mxu0 %v584
    %1327 = vmatpush.msra.mxu0 %v583
    %1328 = vmatpush.msra.mxu0 %v582
    %1329 = vmatpush.msra.mxu0 %v581
    %1330 = vmatmul.f32.gmra.mxu0 %v52
    %v1331 = vpop.f32.mrf.mxu0
    %v1332 = vadd.f32 %v1309, %v1331
    %1333 = vmatmul.f32.gmra.mxu0 %v84
    %v1334 = vpop.f32.mrf.mxu0
    %v1335 = vadd.f32 %v1312, %v1334
    %1336 = vdwg.mxu0
    %v1337 = vmax.f32 %v1332, 0.0
    %v1338 = vmax.f32 %v1335, 0.0
    %v1339 = vld [vmem:[%s3] sm:$0xff]
    %v1340 = vld [vmem:[%s3 + $0x8] sm:$0xff]
    %v1341 = vld [vmem:[%s3 + $0x10] sm:$0xff]
    %v1342 = vld [vmem:[%s3 + $0x18] sm:$0x3f]
    %v1343 = vld [vmem:[%s4] sm:$0x1]
    %v1345 = vperm.slane %v1343, 0
    %vm1347 = vcmask 244736
    %v1349 = vsel %vm1347, %v1337, 0
    %v1352 = vsel %vm1347, %v1338, 0
    %vm1354 = vcmask 1045504
    %v1356 = vsel %vm1354, %v1342, 0
    %1358 = vmatpush.msra.mxu0 0.0
    %1359 = vmatpush.msra.mxu0 0.0
    %1360 = vmatpush.msra.mxu0 0.0
    %1361 = vmatpush.msra.mxu0 0.0
    %1362 = vmatpush.msra.mxu0 0.0
    %1363 = vmatpush.msra.mxu0 0.0
    %1364 = vmatpush.msra.mxu0 0.0
    %1365 = vmatpush.msra.mxu0 0.0
    %1366 = vmatpush.msra.mxu0 0.0
    %1367 = vmatpush.msra.mxu0 0.0
    %1368 = vmatpush.msra.mxu0 0.0
    %1369 = vmatpush.msra.mxu0 0.0
    %1370 = vmatpush.msra.mxu0 %v1356
    %1371 = vmatpush.msra.mxu0 %v1341
    %1372 = vmatpush.msra.mxu0 %v1340
    %1373 = vmatpush.msra.mxu0 %v1339
    %1374 = vmatmul.f32.gmra.mxu0 %v1349
    %v1375 = vpop.f32.mrf.mxu0
    %v1376 = vadd.f32 %v1345, %v1375
    %1377 = vmatmul.f32.gmra.mxu0 %v1352
    %v1378 = vpop.f32.mrf.mxu0
    %v1379 = vadd.f32 %v1345, %v1378
    %1380 = vdwg.mxu0
    %1381 = vst [vmem:[#allocation2] sm:$0xff] %v1376
    %1382 = vst [vmem:[#allocation2 + $0x8] sm:$0xff] %v1379
    // Predicated region
    $region22: #{tpu_custom_call.1} parent=1 // pred_check
      _
    $region23: #{tpu_custom_call.1} parent=1 // pred_check_branch
      %1384 = sbr.rel (0) target = $region25
    $region24: #{tpu_custom_call.1} parent=1 // pred_region
      %1386 = vsyncadd [#allocation3], 0
      %s1387 = sshll.u32 [#allocation2], 4
      %s1388 = int_to_ptr.vmem [resolvable:$true] %s1387
      %s1389 = sshll.u32 %s5, 4
      %s1390 = int_to_ptr.hbm [resolvable:$true] %s1389
      %1395 = dma.vmem_to_hbm [thread:$0]  %s1388, 256, %s1390, [#allocation3], 128, 128, 8
    $region25: #{tpu_custom_call.1} parent=1 // pred_fallthru
      _
    // Predicated region
    $region26: #{tpu_custom_call.1} parent=1 // pred_check
      _
    $region27: #{tpu_custom_call.1} parent=1 // pred_check_branch
      %1397 = sbr.rel (0) target = $region29
    $region28: #{tpu_custom_call.1} parent=1 // pred_region
      %1399 = dma.done [#allocation3], 256
    $region29: #{tpu_custom_call.1} parent=1 // pred_fallthru
      _
    %1400 = vsyncpa [#allocation3], 1

</llo_original>
